<compile_context>
chip_gen: v7x
topology: tpu7x:2x2x1
jax: 0.10.0
libtpu: 0.0.40
codegen_flags: <defaults>
</compile_context>

<pallas_src>
import jax
import jax.numpy as jnp
from jax.experimental import pallas as pl
from jax.experimental.pallas import tpu as pltpu

_ROW_TILE = 512     # target rows per grid step (multiple of 256 for v6e/v7x MXU)
_K_TILE = 1024      # target contraction tile for the 3x3 convs


def _round_up(x, m):
    return (x + m - 1) // m * m


# ---------------------------------------------------------------------------
# Kernels
# ---------------------------------------------------------------------------
def _c1x1_kernel(x_ref, w_ref, b_ref, o_ref):
    acc = jnp.dot(x_ref[...], w_ref[...], preferred_element_type=jnp.float32)
    o_ref[...] = (acc + b_ref[...]).astype(o_ref.dtype)


def _c1x1_skip_up_kernel(x_ref, w_ref, b_ref, s_ref, e_ref, o_ref):
    # 1x1 conv (bf16 x bf16 -> f32 on the MXU).
    acc = jnp.dot(x_ref[...], w_ref[...], preferred_element_type=jnp.float32)
    # Fused nearest-2x upsample of the coarse skip tile:
    #   up = E @ skip_block, E is a constant 0/1 (TM, TM//4) operator.
    up = jnp.dot(e_ref[...], s_ref[...], preferred_element_type=jnp.float32)
    o_ref[...] = (acc + b_ref[...] + up).astype(o_ref.dtype)


def _c3x3_kernel(x_ref, w_ref, b_ref, o_ref, acc_ref):
    k = pl.program_id(1)

    @pl.when(k == 0)
    def _():
        acc_ref[...] = jnp.zeros_like(acc_ref)

    acc_ref[...] += jnp.dot(x_ref[...], w_ref[...],
                            preferred_element_type=jnp.float32)

    @pl.when(k == pl.num_programs(1) - 1)
    def _():
        o_ref[...] = (acc_ref[...] + b_ref[...]).astype(o_ref.dtype)


def _c3x3_relu_kernel(x_ref, w_ref, b_ref, o_ref, r_ref, acc_ref):
    k = pl.program_id(1)

    @pl.when(k == 0)
    def _():
        acc_ref[...] = jnp.zeros_like(acc_ref)

    acc_ref[...] += jnp.dot(x_ref[...], w_ref[...],
                            preferred_element_type=jnp.float32)

    @pl.when(k == pl.num_programs(1) - 1)
    def _():
        y = acc_ref[...] + b_ref[...]
        o_ref[...] = y.astype(o_ref.dtype)
        r_ref[...] = jnp.maximum(y, 0.0).astype(r_ref.dtype)   # fused P7_1 ReLU


# ---------------------------------------------------------------------------
# Conv wrappers (reshape/im2col glue in XLA, matmuls in Pallas)
# ---------------------------------------------------------------------------
def conv1x1(x_nhwc, w, b):
    """1x1 conv, stride 1.  w: (F, Cin, 1, 1) PyTorch layout."""
    N, H, W, C = x_nhwc.shape
    F = w.shape[0]
    M = N * H * W
    TM = M if M <= _ROW_TILE else _ROW_TILE

    x2 = x_nhwc.reshape(M, C).astype(jnp.bfloat16)
    w2 = jnp.transpose(w[:, :, 0, 0], (1, 0)).astype(jnp.bfloat16)   # (Cin, F)
    b2 = b.reshape(1, F).astype(jnp.float32)

    y = pl.pallas_call(
        _c1x1_kernel,
        out_shape=jax.ShapeDtypeStruct((M, F), jnp.float32),
        grid=(pl.cdiv(M, TM),),
        in_specs=[pl.BlockSpec((TM, C), lambda i: (i, 0)),
                  pl.BlockSpec((C, F), lambda i: (0, 0)),    # resident weight
                  pl.BlockSpec((1, F), lambda i: (0, 0))],   # resident bias
        out_specs=pl.BlockSpec((TM, F), lambda i: (i, 0)),
        compiler_params=pltpu.CompilerParams(
            dimension_semantics=("parallel",)),
    )(x2, w2, b2)
    return y.reshape(N, H, W, F)


def conv1x1_skip_up(x_nhwc, w, b, skip_nhwc):
    """1x1 conv + nearest-2x-upsampled skip add, fused into one kernel."""
    N, H, W, C = x_nhwc.shape
    F = w.shape[0]
    Ns, Hc, Wc, Fs = skip_nhwc.shape
    assert (Ns, Fs) == (N, F) and H == 2 * Hc and W == 2 * Wc, \
        "skip must be exactly half the spatial resolution"

    # Row tile = TH whole fine rows of one image (TH even, TH | H) so each
    # output row block maps to a contiguous (TH//2 * Wc)-row coarse skip block.
    cands = [t for t in range(2, H + 1, 2)
             if H % t == 0 and t * W <= max(_ROW_TILE, 2 * W)
             and (t * W) % 8 == 0 and ((t // 2) * Wc) % 8 == 0]
    M = N * H * W
    if cands:
        TH = max(cands)
        TM = TH * W
        MK = (TH // 2) * Wc
    else:                      # robustness fallback: one full-array block
        TM = M
        MK = N * Hc * Wc

    x2 = x_nhwc.reshape(M, C).astype(jnp.bfloat16)
    w2 = jnp.transpose(w[:, :, 0, 0], (1, 0)).astype(jnp.bfloat16)
    b2 = b.reshape(1, F).astype(jnp.float32)
    s2 = skip_nhwc.reshape(N * Hc * Wc, F).astype(jnp.float32)

    # Constant 0/1 upsample operator (same for every block); kept in f32 so the
    # skip add stays full-precision post-accumulation.
    r = jnp.arange(TM)
    src = ((r // (H * W)) * (Hc * Wc)
           + (((r // W) % H) // 2) * Wc
           + (r % W) // 2)
    ups = (src[:, None] == jnp.arange(MK)[None, :]).astype(jnp.float32)

    y = pl.pallas_call(
        _c1x1_skip_up_kernel,
        out_shape=jax.ShapeDtypeStruct((M, F), jnp.float32),
        grid=(M // TM,),
        in_specs=[pl.BlockSpec((TM, C), lambda i: (i, 0)),
                  pl.BlockSpec((C, F), lambda i: (0, 0)),    # resident weight
                  pl.BlockSpec((1, F), lambda i: (0, 0)),    # resident bias
                  pl.BlockSpec((MK, F), lambda i: (i, 0)),   # coarse skip tile
                  pl.BlockSpec((TM, MK), lambda i: (0, 0))], # resident upsample op
        out_specs=pl.BlockSpec((TM, F), lambda i: (i, 0)),
        compiler_params=pltpu.CompilerParams(
            dimension_semantics=("parallel",)),
    )(x2, w2, b2, s2, ups)
    return y.reshape(N, H, W, F)


def conv3x3_s2(x_nhwc, w, b, emit_relu=False):
    """3x3 conv, stride 2, pad 1.  w: (F, Cin, 3, 3) PyTorch layout.

    If emit_relu, also returns relu(output) in bf16 (fused P7_1, feeds P7_2).
    """
    N, H, W, C = x_nhwc.shape
    F = w.shape[0]
    Ho, Wo = (H + 1) // 2, (W + 1) // 2

    # TODO(synk): fold the 9 taps into the kernel via manual strided DMA from a
    # pl.ANY-space padded input instead of materializing the im2col matrix.
    xp = jnp.pad(x_nhwc, ((0, 0), (1, 1), (1, 1), (0, 0))).astype(jnp.bfloat16)
    cols = [xp[:, ky:ky + 2 * Ho:2, kx:kx + 2 * Wo:2, :]
            for ky in range(3) for kx in range(3)]
    patches = jnp.concatenate(cols, axis=-1).reshape(N * Ho * Wo, 9 * C)
    w2 = jnp.transpose(w, (2, 3, 1, 0)).reshape(9 * C, F).astype(jnp.bfloat16)
    b2 = b.reshape(1, F).astype(jnp.float32)

    M, K = patches.shape
    if K > _K_TILE:                            # K-tiled accumulation
        TK = _K_TILE
        Kp = _round_up(K, TK)
        patches = jnp.pad(patches, ((0, 0), (0, Kp - K)))   # zero K pad is exact
        w2 = jnp.pad(w2, ((0, Kp - K), (0, 0)))
    else:
        TK = Kp = K
    TM = M if M <= _ROW_TILE else _ROW_TILE

    out_shape = [jax.ShapeDtypeStruct((M, F), jnp.float32)]
    out_specs = [pl.BlockSpec((TM, F), lambda i, k: (i, 0))]
    if emit_relu:
        out_shape.append(jax.ShapeDtypeStruct((M, F), jnp.bfloat16))
        out_specs.append(pl.BlockSpec((TM, F), lambda i, k: (i, 0)))

    outs = pl.pallas_call(
        _c3x3_relu_kernel if emit_relu else _c3x3_kernel,
        out_shape=tuple(out_shape),
        grid=(pl.cdiv(M, TM), Kp // TK),
        in_specs=[pl.BlockSpec((TM, TK), lambda i, k: (i, k)),
                  pl.BlockSpec((TK, F), lambda i, k: (k, 0)),
                  pl.BlockSpec((1, F), lambda i, k: (0, 0))],
        out_specs=tuple(out_specs),
        scratch_shapes=[pltpu.VMEM((TM, F), jnp.float32)],
        compiler_params=pltpu.CompilerParams(
            dimension_semantics=("parallel", "arbitrary")),
    )(patches, w2, b2)

    if emit_relu:
        y, yr = outs
        return y.reshape(N, Ho, Wo, F), yr.reshape(N, Ho, Wo, F)
    return outs[0].reshape(N, Ho, Wo, F)


# ---------------------------------------------------------------------------
# PyramidFeatures forward
# ---------------------------------------------------------------------------
def pyramid_features_forward_nhwc(params, c3, c4, c5):
    """NHWC-native forward (preferred: no boundary transposes)."""
    p5 = conv1x1(c5, params["P5_1_w"], params["P5_1_b"])
    p4 = conv1x1_skip_up(c4, params["P4_1_w"], params["P4_1_b"], p5)
    p3 = conv1x1_skip_up(c3, params["P3_1_w"], params["P3_1_b"], p4)
    p6, p6_relu = conv3x3_s2(c5, params["P6_w"], params["P6_b"], emit_relu=True)
    p7 = conv3x3_s2(p6_relu, params["P7_2_w"], params["P7_2_b"])
    return [p3, p4, p5, p6, p7]


def pyramid_features_forward(params, C3, C4, C5):
    """NCHW in / NCHW out, matching the PyTorch module interface."""
    c3, c4, c5 = [jnp.transpose(t, (0, 2, 3, 1)) for t in (C3, C4, C5)]
    outs = pyramid_features_forward_nhwc(params, c3, c4, c5)
    return [jnp.transpose(t, (0, 3, 1, 2)) for t in outs]


# ---------------------------------------------------------------------------
# Pure-JAX f32 reference (correctness check only)
# ---------------------------------------------------------------------------
def _ref_conv(x, w, b, stride, padding):
    y = jax.lax.conv_general_dilated(
        x, w, (stride, stride), ((padding, padding), (padding, padding)),
        dimension_numbers=("NCHW", "OIHW", "NCHW"))
    return y + b.reshape(1, -1, 1, 1)


def _ref_forward(params, C3, C4, C5):
    p5 = _ref_conv(C5, params["P5_1_w"], params["P5_1_b"], 1, 0)
    p5_up = jnp.repeat(jnp.repeat(p5, 2, axis=2), 2, axis=3)
    p4 = _ref_conv(C4, params["P4_1_w"], params["P4_1_b"], 1, 0) + p5_up
    p4_up = jnp.repeat(jnp.repeat(p4, 2, axis=2), 2, axis=3)
    p3 = _ref_conv(C3, params["P3_1_w"], params["P3_1_b"], 1, 0) + p4_up
    p6 = _ref_conv(C5, params["P6_w"], params["P6_b"], 2, 1)
    p7 = _ref_conv(jnp.maximum(p6, 0.0), params["P7_2_w"], params["P7_2_b"], 2, 1)
    return [p3, p4, p5, p6, p7]


# ---------------------------------------------------------------------------
if __name__ == "__main__":
    key = jax.random.PRNGKey(0)
    N = 2
    C3_size, C4_size, C5_size, F = 4, 8, 16, 128   # F=128 keeps lanes dense
    H5 = W5 = 8                                    # C5 spatial; C4 = 2x, C3 = 4x

    ks = jax.random.split(key, 16)

    def w_init(k, shape):
        return jax.random.normal(k, shape, jnp.float32) * 0.05

    params = {
        "P5_1_w": w_init(ks[0], (F, C5_size, 1, 1)),
        "P5_1_b": w_init(ks[1], (F,)),
        "P4_1_w": w_init(ks[2], (F, C4_size, 1, 1)),
        "P4_1_b": w_init(ks[3], (F,)),
        "P3_1_w": w_init(ks[4], (F, C3_size, 1, 1)),
        "P3_1_b": w_init(ks[5], (F,)),
        "P6_w":   w_init(ks[6], (F, C5_size, 3, 3)),
        "P6_b":   w_init(ks[7], (F,)),
        "P7_2_w": w_init(ks[8], (F, F, 3, 3)),
        "P7_2_b": w_init(ks[9], (F,)),
    }

    C3 = jax.random.normal(ks[10], (N, C3_size, 4 * H5, 4 * W5), jnp.float32)
    C4 = jax.random.normal(ks[11], (N, C4_size, 2 * H5, 2 * W5), jnp.float32)
    C5 = jax.random.normal(ks[12], (N, C5_size, H5, W5), jnp.float32)

    fwd = jax.jit(pyramid_features_forward)
    outs = fwd(params, C3, C4, C5)
    outs = [jax.block_until_ready(o) for o in outs]

    refs = _ref_forward(params, C3, C4, C5)
    for name, o, r in zip(("P3", "P4", "P5", "P6", "P7"), outs, refs):
        assert o.shape == r.shape, (name, o.shape, r.shape)
        err = float(jnp.max(jnp.abs(o.astype(jnp.float32) - r)))
        # bf16 matmul operands (f32 accumulation) -> loosened tolerance.
        assert err < 5e-2, (name, err)

    print("KERNEL_OK")
</pallas_src>

<mosaic_0001>
module attributes {stable_mosaic.version = 11 : i64} {
  func.func @_c1x1_kernel(%arg0: i32, %arg1: memref<128x16xbf16, #tpu.memory_space<vmem>>, %arg2: memref<16x128xbf16, #tpu.memory_space<vmem>>, %arg3: memref<1x128xf32, #tpu.memory_space<vmem>>, %arg4: memref<128x128xf32, #tpu.memory_space<vmem>>) attributes {dimension_semantics = [#tpu.dimension_semantics<parallel>], iteration_bounds = array<i64: 1>, scalar_prefetch = 0 : i64, scratch_operands = 0 : i64, tpu.core_type = #tpu.core_type<tc>, window_params = [{transform_indices = @transform_0, window_bounds = array<i64: 128, 16>}, {pipeline_mode = #tpu.pipeline_mode<synchronous>, transform_indices = @transform_1, window_bounds = array<i64: 16, 128>}, {pipeline_mode = #tpu.pipeline_mode<synchronous>, transform_indices = @transform_2, window_bounds = array<i64: 1, 128>}, {transform_indices = @transform_3, window_bounds = array<i64: 128, 128>}]} {
    %c0 = arith.constant 0 : index
    %c0_0 = arith.constant 0 : index
    %0 = vector.load %arg1[%c0, %c0_0] : memref<128x16xbf16, #tpu.memory_space<vmem>>, vector<128x16xbf16>
    %c0_1 = arith.constant 0 : index
    %c0_2 = arith.constant 0 : index
    %1 = vector.load %arg2[%c0_1, %c0_2] : memref<16x128xbf16, #tpu.memory_space<vmem>>, vector<16x128xbf16>
    %cst = arith.constant dense<0.000000e+00> : vector<128x128xf32>
    %2 = tpu.matmul %0, %1, %cst {dimension_numbers = #tpu.dot_dimension_numbers<[1], [0], [0], [1], [0, 0, 1, 1], [], []>} : vector<128x16xbf16>, vector<16x128xbf16>, vector<128x128xf32> -> vector<128x128xf32>
    %c0_3 = arith.constant 0 : index
    %c0_4 = arith.constant 0 : index
    %3 = vector.load %arg3[%c0_3, %c0_4] : memref<1x128xf32, #tpu.memory_space<vmem>>, vector<1x128xf32>
    %4 = vector.broadcast %3 : vector<1x128xf32> to vector<128x128xf32>
    %5 = arith.addf %2, %4 : vector<128x128xf32>
    %c0_5 = arith.constant 0 : index
    %c0_6 = arith.constant 0 : index
    %6 = vector.load %arg4[%c0_5, %c0_6] : memref<128x128xf32, #tpu.memory_space<vmem>>, vector<128x128xf32>
    tpu.vector_store %arg4[%c0_5, %c0_6], %5 {strides = array<i32>} : memref<128x128xf32, #tpu.memory_space<vmem>>, vector<128x128xf32>,
    return
  }
  func.func @transform_0(%arg0: i32) -> (i32, i32) {
    %c0_i32 = arith.constant 0 : i32
    %c0_i32_0 = arith.constant 0 : i32
    return %arg0, %c0_i32 : i32, i32
  }
  func.func @transform_1(%arg0: i32) -> (i32, i32) {
    %c0_i32 = arith.constant 0 : i32
    %c0_i32_0 = arith.constant 0 : i32
    %c0_i32_1 = arith.constant 0 : i32
    return %c0_i32, %c0_i32_0 : i32, i32
  }
  func.func @transform_2(%arg0: i32) -> (i32, i32) {
    %c0_i32 = arith.constant 0 : i32
    %c0_i32_0 = arith.constant 0 : i32
    %c0_i32_1 = arith.constant 0 : i32
    return %c0_i32, %c0_i32_0 : i32, i32
  }
  func.func @transform_3(%arg0: i32) -> (i32, i32) {
    %c0_i32 = arith.constant 0 : i32
    %c0_i32_0 = arith.constant 0 : i32
    return %arg0, %c0_i32 : i32, i32
  }
}

module attributes {stable_mosaic.version = 11 : i64} {
  func.func @_c3x3_relu_kernel(%arg0: i32, %arg1: i32, %arg2: memref<32x144xbf16, #tpu.memory_space<vmem>>, %arg3: memref<144x128xbf16, #tpu.memory_space<vmem>>, %arg4: memref<1x128xf32, #tpu.memory_space<vmem>>, %arg5: memref<32x128xf32, #tpu.memory_space<vmem>>, %arg6: memref<32x128xbf16, #tpu.memory_space<vmem>>, %arg7: memref<32x128xf32, #tpu.memory_space<vmem>>) attributes {dimension_semantics = [#tpu.dimension_semantics<parallel>, #tpu.dimension_semantics<arbitrary>], iteration_bounds = array<i64: 1, 1>, scalar_prefetch = 0 : i64, scratch_operands = 1 : i64, tpu.core_type = #tpu.core_type<tc>, window_params = [{transform_indices = @transform_0, window_bounds = array<i64: 32, 144>}, {transform_indices = @transform_1, window_bounds = array<i64: 144, 128>}, {pipeline_mode = #tpu.pipeline_mode<synchronous>, transform_indices = @transform_2, window_bounds = array<i64: 1, 128>}, {transform_indices = @transform_3, window_bounds = array<i64: 32, 128>}, {transform_indices = @transform_4, window_bounds = array<i64: 32, 128>}]} {
    %c0_i32 = arith.constant 0 : i32
    %0 = arith.cmpi eq, %arg1, %c0_i32 : i32
    %1 = arith.extui %0 : i1 to i32
    %c0_i32_0 = arith.constant 0 : i32
    %2 = arith.cmpi ne, %1, %c0_i32_0 : i32
    scf.if %2 {
      %cst_10 = arith.constant 0.000000e+00 : f32
      %12 = vector.broadcast %cst_10 : f32 to vector<32x128xf32>
      %c0_11 = arith.constant 0 : index
      %c0_12 = arith.constant 0 : index
      %13 = vector.load %arg7[%c0_11, %c0_12] : memref<32x128xf32, #tpu.memory_space<vmem>>, vector<32x128xf32>
      tpu.vector_store %arg7[%c0_11, %c0_12], %12 {strides = array<i32>} : memref<32x128xf32, #tpu.memory_space<vmem>>, vector<32x128xf32>,
    } else {
    }
    %c0 = arith.constant 0 : index
    %c0_1 = arith.constant 0 : index
    %3 = vector.load %arg7[%c0, %c0_1] : memref<32x128xf32, #tpu.memory_space<vmem>>, vector<32x128xf32>
    %c0_2 = arith.constant 0 : index
    %c0_3 = arith.constant 0 : index
    %4 = vector.load %arg2[%c0_2, %c0_3] : memref<32x144xbf16, #tpu.memory_space<vmem>>, vector<32x144xbf16>
    %c0_4 = arith.constant 0 : index
    %c0_5 = arith.constant 0 : index
    %5 = vector.load %arg3[%c0_4, %c0_5] : memref<144x128xbf16, #tpu.memory_space<vmem>>, vector<144x128xbf16>
    %cst = arith.constant dense<0.000000e+00> : vector<32x128xf32>
    %6 = tpu.matmul %4, %5, %cst {dimension_numbers = #tpu.dot_dimension_numbers<[1], [0], [0], [1], [0, 0, 1, 1], [], []>} : vector<32x144xbf16>, vector<144x128xbf16>, vector<32x128xf32> -> vector<32x128xf32>
    %7 = arith.addf %3, %6 : vector<32x128xf32>
    %c0_6 = arith.constant 0 : index
    %c0_7 = arith.constant 0 : index
    %8 = vector.load %arg7[%c0_6, %c0_7] : memref<32x128xf32, #tpu.memory_space<vmem>>, vector<32x128xf32>
    tpu.vector_store %arg7[%c0_6, %c0_7], %7 {strides = array<i32>} : memref<32x128xf32, #tpu.memory_space<vmem>>, vector<32x128xf32>,
    %c0_i32_8 = arith.constant 0 : i32
    %9 = arith.cmpi eq, %arg1, %c0_i32_8 : i32
    %10 = arith.extui %9 : i1 to i32
    %c0_i32_9 = arith.constant 0 : i32
    %11 = arith.cmpi ne, %10, %c0_i32_9 : i32
    scf.if %11 {
      %c0_10 = arith.constant 0 : index
      %c0_11 = arith.constant 0 : index
      %12 = vector.load %arg7[%c0_10, %c0_11] : memref<32x128xf32, #tpu.memory_space<vmem>>, vector<32x128xf32>
      %c0_12 = arith.constant 0 : index
      %c0_13 = arith.constant 0 : index
      %13 = vector.load %arg4[%c0_12, %c0_13] : memref<1x128xf32, #tpu.memory_space<vmem>>, vector<1x128xf32>
      %14 = vector.broadcast %13 : vector<1x128xf32> to vector<32x128xf32>
      %15 = arith.addf %12, %14 : vector<32x128xf32>
      %c0_14 = arith.constant 0 : index
      %c0_15 = arith.constant 0 : index
      %16 = vector.load %arg5[%c0_14, %c0_15] : memref<32x128xf32, #tpu.memory_space<vmem>>, vector<32x128xf32>
      tpu.vector_store %arg5[%c0_14, %c0_15], %15 {strides = array<i32>} : memref<32x128xf32, #tpu.memory_space<vmem>>, vector<32x128xf32>,
      %cst_16 = arith.constant 0.000000e+00 : f32
      %17 = vector.broadcast %cst_16 : f32 to vector<32x128xf32>
      %18 = arith.maximumf %15, %17 : vector<32x128xf32>
      %19 = arith.truncf %18 : vector<32x128xf32> to vector<32x128xbf16>
      %c0_17 = arith.constant 0 : index
      %c0_18 = arith.constant 0 : index
      %20 = vector.load %arg6[%c0_17, %c0_18] : memref<32x128xbf16, #tpu.memory_space<vmem>>, vector<32x128xbf16>
      tpu.vector_store %arg6[%c0_17, %c0_18], %19 {strides = array<i32>} : memref<32x128xbf16, #tpu.memory_space<vmem>>, vector<32x128xbf16>,
    } else {
    }
    return
  }
  func.func @transform_0(%arg0: i32, %arg1: i32) -> (i32, i32) {
    %c0_i32 = arith.constant 0 : i32
    return %arg0, %arg1 : i32, i32
  }
  func.func @transform_1(%arg0: i32, %arg1: i32) -> (i32, i32) {
    %c0_i32 = arith.constant 0 : i32
    %c0_i32_0 = arith.constant 0 : i32
    return %arg1, %c0_i32 : i32, i32
  }
  func.func @transform_2(%arg0: i32, %arg1: i32) -> (i32, i32) {
    %c0_i32 = arith.constant 0 : i32
    %c0_i32_0 = arith.constant 0 : i32
    %c0_i32_1 = arith.constant 0 : i32
    return %c0_i32, %c0_i32_0 : i32, i32
  }
  func.func @transform_3(%arg0: i32, %arg1: i32) -> (i32, i32) {
    %c0_i32 = arith.constant 0 : i32
    %c0_i32_0 = arith.constant 0 : i32
    return %arg0, %c0_i32 : i32, i32
  }
  func.func @transform_4(%arg0: i32, %arg1: i32) -> (i32, i32) {
    %c0_i32 = arith.constant 0 : i32
    %c0_i32_0 = arith.constant 0 : i32
    return %arg0, %c0_i32 : i32, i32
  }
}

module attributes {stable_mosaic.version = 11 : i64} {
  func.func @_c1x1_skip_up_kernel(%arg0: i32, %arg1: memref<256x8xbf16, #tpu.memory_space<vmem>>, %arg2: memref<8x128xbf16, #tpu.memory_space<vmem>>, %arg3: memref<1x128xf32, #tpu.memory_space<vmem>>, %arg4: memref<64x128xf32, #tpu.memory_space<vmem>>, %arg5: memref<256x64xf32, #tpu.memory_space<vmem>>, %arg6: memref<256x128xf32, #tpu.memory_space<vmem>>) attributes {dimension_semantics = [#tpu.dimension_semantics<parallel>], iteration_bounds = array<i64: 2>, scalar_prefetch = 0 : i64, scratch_operands = 0 : i64, tpu.core_type = #tpu.core_type<tc>, window_params = [{transform_indices = @transform_0, window_bounds = array<i64: 256, 8>}, {pipeline_mode = #tpu.pipeline_mode<synchronous>, transform_indices = @transform_1, window_bounds = array<i64: 8, 128>}, {pipeline_mode = #tpu.pipeline_mode<synchronous>, transform_indices = @transform_2, window_bounds = array<i64: 1, 128>}, {transform_indices = @transform_3, window_bounds = array<i64: 64, 128>}, {pipeline_mode = #tpu.pipeline_mode<synchronous>, transform_indices = @transform_4, window_bounds = array<i64: 256, 64>}, {transform_indices = @transform_5, window_bounds = array<i64: 256, 128>}]} {
    %c0 = arith.constant 0 : index
    %c0_0 = arith.constant 0 : index
    %0 = vector.load %arg1[%c0, %c0_0] : memref<256x8xbf16, #tpu.memory_space<vmem>>, vector<256x8xbf16>
    %c0_1 = arith.constant 0 : index
    %c0_2 = arith.constant 0 : index
    %1 = vector.load %arg2[%c0_1, %c0_2] : memref<8x128xbf16, #tpu.memory_space<vmem>>, vector<8x128xbf16>
    %cst = arith.constant dense<0.000000e+00> : vector<256x128xf32>
    %2 = tpu.matmul %0, %1, %cst {dimension_numbers = #tpu.dot_dimension_numbers<[1], [0], [0], [1], [0, 0, 1, 1], [], []>} : vector<256x8xbf16>, vector<8x128xbf16>, vector<256x128xf32> -> vector<256x128xf32>
    %c0_3 = arith.constant 0 : index
    %c0_4 = arith.constant 0 : index
    %3 = vector.load %arg5[%c0_3, %c0_4] : memref<256x64xf32, #tpu.memory_space<vmem>>, vector<256x64xf32>
    %c0_5 = arith.constant 0 : index
    %c0_6 = arith.constant 0 : index
    %4 = vector.load %arg4[%c0_5, %c0_6] : memref<64x128xf32, #tpu.memory_space<vmem>>, vector<64x128xf32>
    %cst_7 = arith.constant dense<0.000000e+00> : vector<256x128xf32>
    %5 = tpu.matmul %3, %4, %cst_7 {dimension_numbers = #tpu.dot_dimension_numbers<[1], [0], [0], [1], [0, 0, 1, 1], [], []>} : vector<256x64xf32>, vector<64x128xf32>, vector<256x128xf32> -> vector<256x128xf32>
    %c0_8 = arith.constant 0 : index
    %c0_9 = arith.constant 0 : index
    %6 = vector.load %arg3[%c0_8, %c0_9] : memref<1x128xf32, #tpu.memory_space<vmem>>, vector<1x128xf32>
    %7 = vector.broadcast %6 : vector<1x128xf32> to vector<256x128xf32>
    %8 = arith.addf %2, %7 : vector<256x128xf32>
    %9 = arith.addf %8, %5 : vector<256x128xf32>
    %c0_10 = arith.constant 0 : index
    %c0_11 = arith.constant 0 : index
    %10 = vector.load %arg6[%c0_10, %c0_11] : memref<256x128xf32, #tpu.memory_space<vmem>>, vector<256x128xf32>
    tpu.vector_store %arg6[%c0_10, %c0_11], %9 {strides = array<i32>} : memref<256x128xf32, #tpu.memory_space<vmem>>, vector<256x128xf32>,
    return
  }
  func.func @transform_0(%arg0: i32) -> (i32, i32) {
    %c0_i32 = arith.constant 0 : i32
    %c0_i32_0 = arith.constant 0 : i32
    return %arg0, %c0_i32 : i32, i32
  }
  func.func @transform_1(%arg0: i32) -> (i32, i32) {
    %c0_i32 = arith.constant 0 : i32
    %c0_i32_0 = arith.constant 0 : i32
    %c0_i32_1 = arith.constant 0 : i32
    return %c0_i32, %c0_i32_0 : i32, i32
  }
  func.func @transform_2(%arg0: i32) -> (i32, i32) {
    %c0_i32 = arith.constant 0 : i32
    %c0_i32_0 = arith.constant 0 : i32
    %c0_i32_1 = arith.constant 0 : i32
    return %c0_i32, %c0_i32_0 : i32, i32
  }
  func.func @transform_3(%arg0: i32) -> (i32, i32) {
    %c0_i32 = arith.constant 0 : i32
    %c0_i32_0 = arith.constant 0 : i32
    return %arg0, %c0_i32 : i32, i32
  }
  func.func @transform_4(%arg0: i32) -> (i32, i32) {
    %c0_i32 = arith.constant 0 : i32
    %c0_i32_0 = arith.constant 0 : i32
    %c0_i32_1 = arith.constant 0 : i32
    return %c0_i32, %c0_i32_0 : i32, i32
  }
  func.func @transform_5(%arg0: i32) -> (i32, i32) {
    %c0_i32 = arith.constant 0 : i32
    %c0_i32_0 = arith.constant 0 : i32
    return %arg0, %c0_i32 : i32, i32
  }
}

module attributes {stable_mosaic.version = 11 : i64} {
  func.func @_c3x3_kernel(%arg0: i32, %arg1: i32, %arg2: memref<8x1024xbf16, #tpu.memory_space<vmem>>, %arg3: memref<1024x128xbf16, #tpu.memory_space<vmem>>, %arg4: memref<1x128xf32, #tpu.memory_space<vmem>>, %arg5: memref<8x128xf32, #tpu.memory_space<vmem>>, %arg6: memref<8x128xf32, #tpu.memory_space<vmem>>) attributes {dimension_semantics = [#tpu.dimension_semantics<parallel>, #tpu.dimension_semantics<arbitrary>], iteration_bounds = array<i64: 1, 2>, scalar_prefetch = 0 : i64, scratch_operands = 1 : i64, tpu.core_type = #tpu.core_type<tc>, window_params = [{transform_indices = @transform_0, window_bounds = array<i64: 8, 1024>}, {transform_indices = @transform_1, window_bounds = array<i64: 1024, 128>}, {pipeline_mode = #tpu.pipeline_mode<synchronous>, transform_indices = @transform_2, window_bounds = array<i64: 1, 128>}, {transform_indices = @transform_3, window_bounds = array<i64: 8, 128>}]} {
    %c0_i32 = arith.constant 0 : i32
    %0 = arith.cmpi eq, %arg1, %c0_i32 : i32
    %1 = arith.extui %0 : i1 to i32
    %c0_i32_0 = arith.constant 0 : i32
    %2 = arith.cmpi ne, %1, %c0_i32_0 : i32
    scf.if %2 {
      %cst_9 = arith.constant 0.000000e+00 : f32
      %12 = vector.broadcast %cst_9 : f32 to vector<8x128xf32>
      %c0_10 = arith.constant 0 : index
      %c0_11 = arith.constant 0 : index
      %13 = vector.load %arg6[%c0_10, %c0_11] : memref<8x128xf32, #tpu.memory_space<vmem>>, vector<8x128xf32>
      tpu.vector_store %arg6[%c0_10, %c0_11], %12 {strides = array<i32>} : memref<8x128xf32, #tpu.memory_space<vmem>>, vector<8x128xf32>,
    } else {
    }
    %c0 = arith.constant 0 : index
    %c0_1 = arith.constant 0 : index
    %3 = vector.load %arg6[%c0, %c0_1] : memref<8x128xf32, #tpu.memory_space<vmem>>, vector<8x128xf32>
    %c0_2 = arith.constant 0 : index
    %c0_3 = arith.constant 0 : index
    %4 = vector.load %arg2[%c0_2, %c0_3] : memref<8x1024xbf16, #tpu.memory_space<vmem>>, vector<8x1024xbf16>
    %c0_4 = arith.constant 0 : index
    %c0_5 = arith.constant 0 : index
    %5 = vector.load %arg3[%c0_4, %c0_5] : memref<1024x128xbf16, #tpu.memory_space<vmem>>, vector<1024x128xbf16>
    %cst = arith.constant dense<0.000000e+00> : vector<8x128xf32>
    %6 = tpu.matmul %4, %5, %cst {dimension_numbers = #tpu.dot_dimension_numbers<[1], [0], [0], [1], [0, 0, 1, 1], [], []>} : vector<8x1024xbf16>, vector<1024x128xbf16>, vector<8x128xf32> -> vector<8x128xf32>
    %7 = arith.addf %3, %6 : vector<8x128xf32>
    %c0_6 = arith.constant 0 : index
    %c0_7 = arith.constant 0 : index
    %8 = vector.load %arg6[%c0_6, %c0_7] : memref<8x128xf32, #tpu.memory_space<vmem>>, vector<8x128xf32>
    tpu.vector_store %arg6[%c0_6, %c0_7], %7 {strides = array<i32>} : memref<8x128xf32, #tpu.memory_space<vmem>>, vector<8x128xf32>,
    %c1_i32 = arith.constant 1 : i32
    %9 = arith.cmpi eq, %arg1, %c1_i32 : i32
    %10 = arith.extui %9 : i1 to i32
    %c0_i32_8 = arith.constant 0 : i32
    %11 = arith.cmpi ne, %10, %c0_i32_8 : i32
    scf.if %11 {
      %c0_9 = arith.constant 0 : index
      %c0_10 = arith.constant 0 : index
      %12 = vector.load %arg6[%c0_9, %c0_10] : memref<8x128xf32, #tpu.memory_space<vmem>>, vector<8x128xf32>
      %c0_11 = arith.constant 0 : index
      %c0_12 = arith.constant 0 : index
      %13 = vector.load %arg4[%c0_11, %c0_12] : memref<1x128xf32, #tpu.memory_space<vmem>>, vector<1x128xf32>
      %14 = vector.broadcast %13 : vector<1x128xf32> to vector<8x128xf32>
      %15 = arith.addf %12, %14 : vector<8x128xf32>
      %c0_13 = arith.constant 0 : index
      %c0_14 = arith.constant 0 : index
      %16 = vector.load %arg5[%c0_13, %c0_14] : memref<8x128xf32, #tpu.memory_space<vmem>>, vector<8x128xf32>
      tpu.vector_store %arg5[%c0_13, %c0_14], %15 {strides = array<i32>} : memref<8x128xf32, #tpu.memory_space<vmem>>, vector<8x128xf32>,
    } else {
    }
    return
  }
  func.func @transform_0(%arg0: i32, %arg1: i32) -> (i32, i32) {
    %c0_i32 = arith.constant 0 : i32
    return %arg0, %arg1 : i32, i32
  }
  func.func @transform_1(%arg0: i32, %arg1: i32) -> (i32, i32) {
    %c0_i32 = arith.constant 0 : i32
    %c0_i32_0 = arith.constant 0 : i32
    return %arg1, %c0_i32 : i32, i32
  }
  func.func @transform_2(%arg0: i32, %arg1: i32) -> (i32, i32) {
    %c0_i32 = arith.constant 0 : i32
    %c0_i32_0 = arith.constant 0 : i32
    %c0_i32_1 = arith.constant 0 : i32
    return %c0_i32, %c0_i32_0 : i32, i32
  }
  func.func @transform_3(%arg0: i32, %arg1: i32) -> (i32, i32) {
    %c0_i32 = arith.constant 0 : i32
    %c0_i32_0 = arith.constant 0 : i32
    return %arg0, %c0_i32 : i32, i32
  }
}

module attributes {stable_mosaic.version = 11 : i64} {
  func.func @_c1x1_skip_up_kernel(%arg0: i32, %arg1: memref<512x4xbf16, #tpu.memory_space<vmem>>, %arg2: memref<4x128xbf16, #tpu.memory_space<vmem>>, %arg3: memref<1x128xf32, #tpu.memory_space<vmem>>, %arg4: memref<128x128xf32, #tpu.memory_space<vmem>>, %arg5: memref<512x128xf32, #tpu.memory_space<vmem>>, %arg6: memref<512x128xf32, #tpu.memory_space<vmem>>) attributes {dimension_semantics = [#tpu.dimension_semantics<parallel>], iteration_bounds = array<i64: 4>, scalar_prefetch = 0 : i64, scratch_operands = 0 : i64, tpu.core_type = #tpu.core_type<tc>, window_params = [{transform_indices = @transform_0, window_bounds = array<i64: 512, 4>}, {pipeline_mode = #tpu.pipeline_mode<synchronous>, transform_indices = @transform_1, window_bounds = array<i64: 4, 128>}, {pipeline_mode = #tpu.pipeline_mode<synchronous>, transform_indices = @transform_2, window_bounds = array<i64: 1, 128>}, {transform_indices = @transform_3, window_bounds = array<i64: 128, 128>}, {pipeline_mode = #tpu.pipeline_mode<synchronous>, transform_indices = @transform_4, window_bounds = array<i64: 512, 128>}, {transform_indices = @transform_5, window_bounds = array<i64: 512, 128>}]} {
    %c0 = arith.constant 0 : index
    %c0_0 = arith.constant 0 : index
    %0 = vector.load %arg1[%c0, %c0_0] : memref<512x4xbf16, #tpu.memory_space<vmem>>, vector<512x4xbf16>
    %c0_1 = arith.constant 0 : index
    %c0_2 = arith.constant 0 : index
    %1 = vector.load %arg2[%c0_1, %c0_2] : memref<4x128xbf16, #tpu.memory_space<vmem>>, vector<4x128xbf16>
    %cst = arith.constant dense<0.000000e+00> : vector<512x128xf32>
    %2 = tpu.matmul %0, %1, %cst {dimension_numbers = #tpu.dot_dimension_numbers<[1], [0], [0], [1], [0, 0, 1, 1], [], []>} : vector<512x4xbf16>, vector<4x128xbf16>, vector<512x128xf32> -> vector<512x128xf32>
    %c0_3 = arith.constant 0 : index
    %c0_4 = arith.constant 0 : index
    %3 = vector.load %arg5[%c0_3, %c0_4] : memref<512x128xf32, #tpu.memory_space<vmem>>, vector<512x128xf32>
    %c0_5 = arith.constant 0 : index
    %c0_6 = arith.constant 0 : index
    %4 = vector.load %arg4[%c0_5, %c0_6] : memref<128x128xf32, #tpu.memory_space<vmem>>, vector<128x128xf32>
    %cst_7 = arith.constant dense<0.000000e+00> : vector<512x128xf32>
    %5 = tpu.matmul %3, %4, %cst_7 {dimension_numbers = #tpu.dot_dimension_numbers<[1], [0], [0], [1], [0, 0, 1, 1], [], []>} : vector<512x128xf32>, vector<128x128xf32>, vector<512x128xf32> -> vector<512x128xf32>
    %c0_8 = arith.constant 0 : index
    %c0_9 = arith.constant 0 : index
    %6 = vector.load %arg3[%c0_8, %c0_9] : memref<1x128xf32, #tpu.memory_space<vmem>>, vector<1x128xf32>
    %7 = vector.broadcast %6 : vector<1x128xf32> to vector<512x128xf32>
    %8 = arith.addf %2, %7 : vector<512x128xf32>
    %9 = arith.addf %8, %5 : vector<512x128xf32>
    %c0_10 = arith.constant 0 : index
    %c0_11 = arith.constant 0 : index
    %10 = vector.load %arg6[%c0_10, %c0_11] : memref<512x128xf32, #tpu.memory_space<vmem>>, vector<512x128xf32>
    tpu.vector_store %arg6[%c0_10, %c0_11], %9 {strides = array<i32>} : memref<512x128xf32, #tpu.memory_space<vmem>>, vector<512x128xf32>,
    return
  }
  func.func @transform_0(%arg0: i32) -> (i32, i32) {
    %c0_i32 = arith.constant 0 : i32
    %c0_i32_0 = arith.constant 0 : i32
    return %arg0, %c0_i32 : i32, i32
  }
  func.func @transform_1(%arg0: i32) -> (i32, i32) {
    %c0_i32 = arith.constant 0 : i32
    %c0_i32_0 = arith.constant 0 : i32
    %c0_i32_1 = arith.constant 0 : i32
    return %c0_i32, %c0_i32_0 : i32, i32
  }
  func.func @transform_2(%arg0: i32) -> (i32, i32) {
    %c0_i32 = arith.constant 0 : i32
    %c0_i32_0 = arith.constant 0 : i32
    %c0_i32_1 = arith.constant 0 : i32
    return %c0_i32, %c0_i32_0 : i32, i32
  }
  func.func @transform_3(%arg0: i32) -> (i32, i32) {
    %c0_i32 = arith.constant 0 : i32
    %c0_i32_0 = arith.constant 0 : i32
    return %arg0, %c0_i32 : i32, i32
  }
  func.func @transform_4(%arg0: i32) -> (i32, i32) {
    %c0_i32 = arith.constant 0 : i32
    %c0_i32_0 = arith.constant 0 : i32
    %c0_i32_1 = arith.constant 0 : i32
    return %c0_i32, %c0_i32_0 : i32, i32
  }
  func.func @transform_5(%arg0: i32) -> (i32, i32) {
    %c0_i32 = arith.constant 0 : i32
    %c0_i32_0 = arith.constant 0 : i32
    return %arg0, %c0_i32 : i32, i32
  }
}

</mosaic_0001>

<llo_original>
// kernel: pyramid_features_forward.5
$region0: #{pyramid_features_forward.5}
  #allocation0 [shape = 'u32[]', space=smem, size = 0x4, offset = 0x4, fixed_abs, tag = 'smem constant byte address 0x4 - core index']
  #allocation1 [shape = 'u32[144,128]{1,0:T(1,128)}', space=vmem, size = 0x12000, scoped, tag = 'internal scratch']
  %s0 = inlined_call_operand.vmem [shape: bf16[128,16], index: 0, kind: input, shape index: {}]
  %s1 = inlined_call_operand.vmem [shape: bf16[16,128], index: 1, kind: input, shape index: {}]
  %s2 = inlined_call_operand.vmem [shape: f32[1,128], index: 2, kind: input, shape index: {}]
  %s3 = inlined_call_operand.vmem [shape: f32[128,128], index: 3, kind: output, shape index: {}]
  %s4 = sld [smem:[#allocation0]]
  $region22: #{pyramid_features_forward.5} parent=0
    _
  %s6 = ssub.s32 1, %s4
  %s7 = scalar_select 0, %s6, %s4
  // Predicated region
  $region2: #{pyramid_features_forward.5} parent=0 // pred_check
    _
  $region3: #{pyramid_features_forward.5} parent=0 // pred_check_branch
    %9 = sbr.rel (0) target = $region5
  $region4: #{pyramid_features_forward.5} parent=0 // pred_region
    _
  $region5: #{pyramid_features_forward.5} parent=0 // pred_fallthru
    _
  // Predicated region
  $region6: #{pyramid_features_forward.5} parent=0 // pred_check
    _
  $region7: #{pyramid_features_forward.5} parent=0 // pred_check_branch
    %11 = sbr.rel (0) target = $region9
  $region8: #{pyramid_features_forward.5} parent=0 // pred_region
    _
  $region9: #{pyramid_features_forward.5} parent=0 // pred_fallthru
    _
  // Predicated region
  $region10: #{pyramid_features_forward.5} parent=0 // pred_check
    _
  $region11: #{pyramid_features_forward.5} parent=0 // pred_check_branch
    %13 = sbr.rel (0) target = $region13
  $region12: #{pyramid_features_forward.5} parent=0 // pred_region
    _
  $region13: #{pyramid_features_forward.5} parent=0 // pred_fallthru
    _
  %v15 = vld [vmem:[%s0] sm:$0xf]
  %v16 = vld [vmem:[%s0 + $0x4] sm:$0xf]
  %v17 = vld [vmem:[%s0 + $0x8] sm:$0xf]
  %v18 = vld [vmem:[%s0 + $0xc] sm:$0xf]
  %v19 = vld [vmem:[%s0 + $0x10] sm:$0xf]
  %v20 = vld [vmem:[%s0 + $0x14] sm:$0xf]
  %v21 = vld [vmem:[%s0 + $0x18] sm:$0xf]
  %v22 = vld [vmem:[%s0 + $0x1c] sm:$0xf]
  %v23 = vld [vmem:[%s0 + $0x20] sm:$0xf]
  %v24 = vld [vmem:[%s0 + $0x24] sm:$0xf]
  %v25 = vld [vmem:[%s0 + $0x28] sm:$0xf]
  %v26 = vld [vmem:[%s0 + $0x2c] sm:$0xf]
  %v27 = vld [vmem:[%s0 + $0x30] sm:$0xf]
  %v28 = vld [vmem:[%s0 + $0x34] sm:$0xf]
  %v29 = vld [vmem:[%s0 + $0x38] sm:$0xf]
  %v30 = vld [vmem:[%s0 + $0x3c] sm:$0xf]
  %v31 = vld [vmem:[%s1] sm:$0xf]
  %v32 = vld [vmem:[%s1 + $0x4] sm:$0xf]
  %v33 = vld [vmem:[%s2] sm:$0x1]
  %v35 = vlaneseq
  %v36 = vshrl.u32 %v35, 7
  %v37 = vsub.s32 0, %v36
  %v38 = vrot.slane %v33, %v37
  %v56 = vunpack.c.l.b16 %v15
  %v57 = vunpack.c.l.b16 %v16
  %v58 = vunpack.c.l.b16 %v17
  %v59 = vunpack.c.l.b16 %v18
  %v60 = vunpack.c.l.b16 %v19
  %v61 = vunpack.c.l.b16 %v20
  %v62 = vunpack.c.l.b16 %v21
  %v63 = vunpack.c.l.b16 %v22
  %v64 = vunpack.c.l.b16 %v23
  %v65 = vunpack.c.l.b16 %v24
  %v66 = vunpack.c.l.b16 %v25
  %v67 = vunpack.c.l.b16 %v26
  %v68 = vunpack.c.l.b16 %v27
  %v69 = vunpack.c.l.b16 %v28
  %v70 = vunpack.c.l.b16 %v29
  %v71 = vunpack.c.l.b16 %v30
  %v72 = vpack.c.b16 %v57, %v56
  %v73 = vpack.c.b16 %v59, %v58
  %v74 = vpack.c.b16 %v61, %v60
  %v75 = vpack.c.b16 %v63, %v62
  %v76 = vpack.c.b16 %v65, %v64
  %v77 = vpack.c.b16 %v67, %v66
  %v78 = vpack.c.b16 %v69, %v68
  %v79 = vpack.c.b16 %v71, %v70
  %v82 = vunpack.c.l.b16 %v31
  %v83 = vunpack.c.l.b16 %v32
  %v84 = vpack.c.b16 %v83, %v82
  %vm86 = vcmask 130048
  %v88 = vsel %vm86, %v72, 0
  %v91 = vsel %vm86, %v73, 0
  %v94 = vsel %vm86, %v74, 0
  %v97 = vsel %vm86, %v75, 0
  %v100 = vsel %vm86, %v76, 0
  %v103 = vsel %vm86, %v77, 0
  %v106 = vsel %vm86, %v78, 0
  %v109 = vsel %vm86, %v79, 0
  %111 = vmatprep.subr.bf16.mxu0 0
  %112 = vmatpush1.bf16.msra.mxu0 %v84
  %113 = vmatprep.subr.bf16.mxu0 0
  %114 = vmatpush1.bf16.msra.mxu0 0
  %115 = vmatprep.subr.bf16.mxu0 0
  %116 = vmatpush1.bf16.msra.mxu0 0
  %117 = vmatprep.subr.bf16.mxu0 0
  %118 = vmatpush1.bf16.msra.mxu0 0
  %119 = vmatprep.subr.bf16.mxu0 0
  %120 = vmatpush1.bf16.msra.mxu0 0
  %121 = vmatprep.subr.bf16.mxu0 0
  %122 = vmatpush1.bf16.msra.mxu0 0
  %123 = vmatprep.subr.bf16.mxu0 0
  %124 = vmatpush1.bf16.msra.mxu0 0
  %125 = vmatprep.subr.bf16.mxu0 0
  %126 = vmatpush1.bf16.msra.mxu0 0
  %127 = vmatprep.subr.bf16.mxu0 0
  %128 = vmatpush1.bf16.msra.mxu0 0
  %129 = vmatprep.subr.bf16.mxu0 0
  %130 = vmatpush1.bf16.msra.mxu0 0
  %131 = vmatprep.subr.bf16.mxu0 0
  %132 = vmatpush1.bf16.msra.mxu0 0
  %133 = vmatprep.subr.bf16.mxu0 0
  %134 = vmatpush1.bf16.msra.mxu0 0
  %135 = vmatprep.subr.bf16.mxu0 0
  %136 = vmatpush1.bf16.msra.mxu0 0
  %137 = vmatprep.subr.bf16.mxu0 0
  %138 = vmatpush1.bf16.msra.mxu0 0
  %139 = vmatprep.subr.bf16.mxu0 0
  %140 = vmatpush1.bf16.msra.mxu0 0
  %141 = vmatprep.subr.bf16.mxu0 0
  %142 = vmatpush1.bf16.msra.mxu0 0
  %143 = vmatprep.mubr.bf16.mxu0 0
  %144 = vmatmul.mubr.bf16.gmra.mrb[0].mxu0 %v88
  %v145 = vpop.f32.mrb[0].mxu0
  %v146 = vadd.f32 %v38, %v145
  %v147 = vpop.f32.mrb[0].mxu0
  %v148 = vpop.f32.mrb[0].mxu0
  %v149 = vadd.f32 %v38, %v148
  %v150 = vpop.f32.mrb[0].mxu0
  %151 = vmatprep.mubr.bf16.mxu0 0
  %152 = vmatmul.mubr.bf16.gmra.mrb[0].mxu0 %v91
  %v153 = vpop.f32.mrb[0].mxu0
  %v154 = vadd.f32 %v38, %v153
  %v155 = vpop.f32.mrb[0].mxu0
  %v156 = vpop.f32.mrb[0].mxu0
  %v157 = vadd.f32 %v38, %v156
  %v158 = vpop.f32.mrb[0].mxu0
  %159 = vmatprep.mubr.bf16.mxu0 0
  %160 = vmatmul.mubr.bf16.gmra.mrb[0].mxu0 %v94
  %v161 = vpop.f32.mrb[0].mxu0
  %v162 = vadd.f32 %v38, %v161
  %v163 = vpop.f32.mrb[0].mxu0
  %v164 = vpop.f32.mrb[0].mxu0
  %v165 = vadd.f32 %v38, %v164
  %v166 = vpop.f32.mrb[0].mxu0
  %167 = vmatprep.mubr.bf16.mxu0 0
  %168 = vmatmul.mubr.bf16.gmra.mrb[0].mxu0 %v97
  %v169 = vpop.f32.mrb[0].mxu0
  %v170 = vadd.f32 %v38, %v169
  %v171 = vpop.f32.mrb[0].mxu0
  %v172 = vpop.f32.mrb[0].mxu0
  %v173 = vadd.f32 %v38, %v172
  %v174 = vpop.f32.mrb[0].mxu0
  %175 = vmatprep.mubr.bf16.mxu0 0
  %176 = vmatmul.mubr.bf16.gmra.mrb[0].mxu0 %v100
  %v177 = vpop.f32.mrb[0].mxu0
  %v178 = vadd.f32 %v38, %v177
  %v179 = vpop.f32.mrb[0].mxu0
  %v180 = vpop.f32.mrb[0].mxu0
  %v181 = vadd.f32 %v38, %v180
  %v182 = vpop.f32.mrb[0].mxu0
  %183 = vmatprep.mubr.bf16.mxu0 0
  %184 = vmatmul.mubr.bf16.gmra.mrb[0].mxu0 %v103
  %v185 = vpop.f32.mrb[0].mxu0
  %v186 = vadd.f32 %v38, %v185
  %v187 = vpop.f32.mrb[0].mxu0
  %v188 = vpop.f32.mrb[0].mxu0
  %v189 = vadd.f32 %v38, %v188
  %v190 = vpop.f32.mrb[0].mxu0
  %191 = vmatprep.mubr.bf16.mxu0 0
  %192 = vmatmul.mubr.bf16.gmra.mrb[0].mxu0 %v106
  %v193 = vpop.f32.mrb[0].mxu0
  %v194 = vadd.f32 %v38, %v193
  %v195 = vpop.f32.mrb[0].mxu0
  %v196 = vpop.f32.mrb[0].mxu0
  %v197 = vadd.f32 %v38, %v196
  %v198 = vpop.f32.mrb[0].mxu0
  %199 = vmatprep.mubr.bf16.mxu0 0
  %200 = vmatmul.mubr.bf16.gmra.mrb[0].mxu0 %v109
  %v201 = vpop.f32.mrb[0].mxu0
  %v202 = vadd.f32 %v38, %v201
  %v203 = vpop.f32.mrb[0].mxu0
  %v204 = vpop.f32.mrb[0].mxu0
  %v205 = vadd.f32 %v38, %v204
  %v206 = vpop.f32.mrb[0].mxu0
  %207 = vdwg.mxu0
  %208 = vst [vmem:[%s3] sm:$0xff] %v146
  %209 = vst [vmem:[%s3 + $0x8] sm:$0xff] %v149
  %210 = vst [vmem:[%s3 + $0x10] sm:$0xff] %v154
  %211 = vst [vmem:[%s3 + $0x18] sm:$0xff] %v157
  %212 = vst [vmem:[%s3 + $0x20] sm:$0xff] %v162
  %213 = vst [vmem:[%s3 + $0x28] sm:$0xff] %v165
  %214 = vst [vmem:[%s3 + $0x30] sm:$0xff] %v170
  %215 = vst [vmem:[%s3 + $0x38] sm:$0xff] %v173
  %216 = vst [vmem:[%s3 + $0x40] sm:$0xff] %v178
  %217 = vst [vmem:[%s3 + $0x48] sm:$0xff] %v181
  %218 = vst [vmem:[%s3 + $0x50] sm:$0xff] %v186
  %219 = vst [vmem:[%s3 + $0x58] sm:$0xff] %v189
  %220 = vst [vmem:[%s3 + $0x60] sm:$0xff] %v194
  %221 = vst [vmem:[%s3 + $0x68] sm:$0xff] %v197
  %222 = vst [vmem:[%s3 + $0x70] sm:$0xff] %v202
  %223 = vst [vmem:[%s3 + $0x78] sm:$0xff] %v205
  // Predicated region
  $region14: #{pyramid_features_forward.5} parent=0 // pred_check
    _
  $region15: #{pyramid_features_forward.5} parent=0 // pred_check_branch
    %225 = sbr.rel (0) target = $region17
  $region16: #{pyramid_features_forward.5} parent=0 // pred_region
    _
  $region17: #{pyramid_features_forward.5} parent=0 // pred_fallthru
    _
  // Predicated region
  $region18: #{pyramid_features_forward.5} parent=0 // pred_check
    _
  $region19: #{pyramid_features_forward.5} parent=0 // pred_check_branch
    %227 = sbr.rel (0) target = $region21
  $region20: #{pyramid_features_forward.5} parent=0 // pred_region
    _
  $region21: #{pyramid_features_forward.5} parent=0 // pred_fallthru
    _

// kernel: pyramid_features_forward.8
$region0: #{pyramid_features_forward.8}
  #allocation0 [shape = 'u32[]', space=smem, size = 0x4, offset = 0x4, fixed_abs, tag = 'smem constant byte address 0x4 - core index']
  #allocation1 [shape = 'u32[144,128]{1,0:T(1,128)}', space=vmem, size = 0x12000, scoped, tag = 'internal scratch']
  #allocation2 [shape = 'f32[32,128]{1,0:T(8,128)}', space=vmem, size = 0x4000, scoped, tag = 'scratch operand']
  %s0 = inlined_call_operand.vmem [shape: bf16[32,144], index: 0, kind: input, shape index: {}]
  %s1 = inlined_call_operand.vmem [shape: bf16[144,128], index: 1, kind: input, shape index: {}]
  %s2 = inlined_call_operand.vmem [shape: f32[1,128], index: 2, kind: input, shape index: {}]
  %s3 = inlined_call_operand.hbm [shape: f32[32,128], index: 3, kind: output, shape index: {0}]
  %s4 = inlined_call_operand.vmem [shape: bf16[32,128], index: 4, kind: output, shape index: {1}]
  %5 = xla_tuple %s3, %s4
  %s6 = sld [smem:[#allocation0]]
  $region38: #{pyramid_features_forward.8} parent=0
    _
  %s8 = ssub.s32 1, %s6
  %s9 = scalar_select 0, %s8, %s6
  $region1: #{pyramid_features_forward.8} parent=0
    #allocation3 [shape = 'u8[16384]{0}', space=vmem, size = 0x4000, scoped, tag = 'output window, operand 0, single buffered']
    #allocation4 [shape = 's32[1]{0}', space=sflag, size = 0x4, scoped, tag = 'scoped memory for pyramid_features_forward.8']
    %10 = vsyncpa [#allocation4], 0
    // Predicated region
    $region2: #{pyramid_features_forward.8} parent=1 // pred_check
      _
    $region3: #{pyramid_features_forward.8} parent=1 // pred_check_branch
      %12 = sbr.rel (0) target = $region5
    $region4: #{pyramid_features_forward.8} parent=1 // pred_region
      _
    $region5: #{pyramid_features_forward.8} parent=1 // pred_fallthru
      _
    // Predicated region
    $region6: #{pyramid_features_forward.8} parent=1 // pred_check
      _
    $region7: #{pyramid_features_forward.8} parent=1 // pred_check_branch
      %14 = sbr.rel (0) target = $region9
    $region8: #{pyramid_features_forward.8} parent=1 // pred_region
      _
    $region9: #{pyramid_features_forward.8} parent=1 // pred_fallthru
      _
    // Predicated region
    $region10: #{pyramid_features_forward.8} parent=1 // pred_check
      _
    $region11: #{pyramid_features_forward.8} parent=1 // pred_check_branch
      %16 = sbr.rel (0) target = $region13
    $region12: #{pyramid_features_forward.8} parent=1 // pred_region
      _
    $region13: #{pyramid_features_forward.8} parent=1 // pred_fallthru
      _
    %p18 = scmp.eq.s32.totalorder 0, 0
    // Predicated region
    $region14: #{pyramid_features_forward.8} parent=1 // pred_check
      %p19 = pneg %p18
    $region15: #{pyramid_features_forward.8} parent=1 // pred_check_branch
      %21 = sbr.rel (%p19) target = $region17
    $region16: #{pyramid_features_forward.8} parent=1 // pred_region
      %22 = vst [vmem:[#allocation2] sm:$0xff] 0.0
      %23 = vst [vmem:[#allocation2 + $0x8] sm:$0xff] 0.0
      %24 = vst [vmem:[#allocation2 + $0x10] sm:$0xff] 0.0
      %25 = vst [vmem:[#allocation2 + $0x18] sm:$0xff] 0.0
    $region17: #{pyramid_features_forward.8} parent=1 // pred_fallthru
      _
    %v26 = vld [vmem:[#allocation2] sm:$0xff]
    %v27 = vld [vmem:[#allocation2 + $0x8] sm:$0xff]
    %v28 = vld [vmem:[#allocation2 + $0x10] sm:$0xff]
    %v29 = vld [vmem:[#allocation2 + $0x18] sm:$0xff]
    %v30 = vld [vmem:[%s0] sm:$0xff]
    %v31 = vld [vmem:[%s0 + $0x8] sm:$0xff]
    %v32 = vld [vmem:[%s0 + $0x10] sm:$0xff]
    %v33 = vld [vmem:[%s0 + $0x18] sm:$0xff]
    %v34 = vld [vmem:[%s1] sm:$0xf]
    %v35 = vld [vmem:[%s1 + $0x4] sm:$0xf]
    %v36 = vld [vmem:[%s1 + $0x8] sm:$0xf]
    %v37 = vld [vmem:[%s1 + $0xc] sm:$0xf]
    %v38 = vld [vmem:[%s1 + $0x10] sm:$0xf]
    %v39 = vld [vmem:[%s1 + $0x14] sm:$0xf]
    %v40 = vld [vmem:[%s1 + $0x18] sm:$0xf]
    %v41 = vld [vmem:[%s1 + $0x1c] sm:$0xf]
    %v42 = vld [vmem:[%s1 + $0x20] sm:$0xf]
    %v43 = vld [vmem:[%s1 + $0x24] sm:$0xf]
    %v44 = vld [vmem:[%s1 + $0x28] sm:$0xf]
    %v45 = vld [vmem:[%s1 + $0x2c] sm:$0xf]
    %v46 = vld [vmem:[%s1 + $0x30] sm:$0xf]
    %v47 = vld [vmem:[%s1 + $0x34] sm:$0xf]
    %v48 = vld [vmem:[%s1 + $0x38] sm:$0xf]
    %v49 = vld [vmem:[%s1 + $0x3c] sm:$0xf]
    %v50 = vld [vmem:[%s1 + $0x40] sm:$0xf]
    %v51 = vld [vmem:[%s1 + $0x44] sm:$0xf]
    %v56 = vunpack.c.l.b16 %v30
    %v57 = vunpack.c.h.b16 %v30
    %v58 = vunpack.c.l.b16 %v31
    %v59 = vunpack.c.h.b16 %v31
    %v60 = vunpack.c.l.b16 %v32
    %v61 = vunpack.c.h.b16 %v32
    %v62 = vunpack.c.l.b16 %v33
    %v63 = vunpack.c.h.b16 %v33
    %v64 = vpack.c.b16 %v58, %v56
    %v65 = vpack.c.b16 %v59, %v57
    %v66 = vpack.c.b16 %v62, %v60
    %v67 = vpack.c.b16 %v63, %v61
    %v88 = vunpack.c.l.b16 %v34
    %v89 = vunpack.c.l.b16 %v35
    %v90 = vunpack.c.l.b16 %v36
    %v91 = vunpack.c.l.b16 %v37
    %v92 = vunpack.c.l.b16 %v38
    %v93 = vunpack.c.l.b16 %v39
    %v94 = vunpack.c.l.b16 %v40
    %v95 = vunpack.c.l.b16 %v41
    %v96 = vunpack.c.l.b16 %v42
    %v97 = vunpack.c.l.b16 %v43
    %v98 = vunpack.c.l.b16 %v44
    %v99 = vunpack.c.l.b16 %v45
    %v100 = vunpack.c.l.b16 %v46
    %v101 = vunpack.c.l.b16 %v47
    %v102 = vunpack.c.l.b16 %v48
    %v103 = vunpack.c.l.b16 %v49
    %v104 = vunpack.c.l.b16 %v50
    %v105 = vunpack.c.l.b16 %v51
    %v106 = vpack.c.b16 %v89, %v88
    %v107 = vpack.c.b16 %v91, %v90
    %v108 = vpack.c.b16 %v93, %v92
    %v109 = vpack.c.b16 %v95, %v94
    %v110 = vpack.c.b16 %v97, %v96
    %v111 = vpack.c.b16 %v99, %v98
    %v112 = vpack.c.b16 %v101, %v100
    %v113 = vpack.c.b16 %v103, %v102
    %v114 = vpack.c.b16 %v105, %v104
    %vm124 = vcmask 130048
    %v126 = vsel %vm124, %v65, 0
    %v129 = vsel %vm124, %v67, 0
    %131 = vmatprep.subr.bf16.mxu0 0
    %132 = vmatpush1.bf16.msra.mxu0 %v106
    %133 = vmatprep.subr.bf16.mxu0 0
    %134 = vmatpush1.bf16.msra.mxu0 %v107
    %135 = vmatprep.subr.bf16.mxu0 0
    %136 = vmatpush1.bf16.msra.mxu0 %v108
    %137 = vmatprep.subr.bf16.mxu0 0
    %138 = vmatpush1.bf16.msra.mxu0 %v109
    %139 = vmatprep.subr.bf16.mxu0 0
    %140 = vmatpush1.bf16.msra.mxu0 %v110
    %141 = vmatprep.subr.bf16.mxu0 0
    %142 = vmatpush1.bf16.msra.mxu0 %v111
    %143 = vmatprep.subr.bf16.mxu0 0
    %144 = vmatpush1.bf16.msra.mxu0 %v112
    %145 = vmatprep.subr.bf16.mxu0 0
    %146 = vmatpush1.bf16.msra.mxu0 %v113
    %147 = vmatprep.subr.bf16.mxu0 0
    %148 = vmatpush1.bf16.msra.mxu0 %v114
    %149 = vmatprep.subr.bf16.mxu0 0
    %150 = vmatpush1.bf16.msra.mxu0 0
    %151 = vmatprep.subr.bf16.mxu0 0
    %152 = vmatpush1.bf16.msra.mxu0 0
    %153 = vmatprep.subr.bf16.mxu0 0
    %154 = vmatpush1.bf16.msra.mxu0 0
    %155 = vmatprep.subr.bf16.mxu0 0
    %156 = vmatpush1.bf16.msra.mxu0 0
    %157 = vmatprep.subr.bf16.mxu0 0
    %158 = vmatpush1.bf16.msra.mxu0 0
    %159 = vmatprep.subr.bf16.mxu0 0
    %160 = vmatpush1.bf16.msra.mxu0 0
    %161 = vmatprep.subr.bf16.mxu0 0
    %162 = vmatpush1.bf16.msra.mxu0 0
    %163 = vmatprep.mubr.bf16.mxu0 %v126
    %164 = vmatmul.mubr.bf16.gmra.mrb[0].mxu0 %v64
    %v165 = vpop.f32.mrb[0].mxu0
    %v166 = vadd.f32 0.0, %v165
    %v167 = vpop.f32.mrb[0].mxu0
    %v168 = vpop.f32.mrb[0].mxu0
    %v169 = vadd.f32 0.0, %v168
    %v170 = vpop.f32.mrb[0].mxu0
    %171 = vmatprep.mubr.bf16.mxu0 %v129
    %172 = vmatmul.mubr.bf16.gmra.mrb[0].mxu0 %v66
    %v173 = vpop.f32.mrb[0].mxu0
    %v174 = vadd.f32 0.0, %v173
    %v175 = vpop.f32.mrb[0].mxu0
    %v176 = vpop.f32.mrb[0].mxu0
    %v177 = vadd.f32 0.0, %v176
    %v178 = vpop.f32.mrb[0].mxu0
    %179 = vdwg.mxu0
    %v180 = vadd.f32 %v26, %v166
    %v181 = vadd.f32 %v27, %v169
    %v182 = vadd.f32 %v28, %v174
    %v183 = vadd.f32 %v29, %v177
    %184 = vst [vmem:[#allocation2] sm:$0xff] %v180
    %185 = vst [vmem:[#allocation2 + $0x8] sm:$0xff] %v181
    %186 = vst [vmem:[#allocation2 + $0x10] sm:$0xff] %v182
    %187 = vst [vmem:[#allocation2 + $0x18] sm:$0xff] %v183
    // Predicated region
    $region18: #{pyramid_features_forward.8} parent=1 // pred_check
      %p188 = pneg %p18
    $region19: #{pyramid_features_forward.8} parent=1 // pred_check_branch
      %190 = sbr.rel (%p188) target = $region21
    $region20: #{pyramid_features_forward.8} parent=1 // pred_region
      %v191 = vld [vmem:[#allocation2] sm:$0xff]
      %v192 = vld [vmem:[#allocation2 + $0x8] sm:$0xff]
      %v193 = vld [vmem:[#allocation2 + $0x10] sm:$0xff]
      %v194 = vld [vmem:[#allocation2 + $0x18] sm:$0xff]
      %v195 = vld [vmem:[%s2] sm:$0x1]
      %v197 = vlaneseq
      %v198 = vshrl.u32 %v197, 7
      %v199 = vsub.s32 0, %v198
      %v200 = vrot.slane %v195, %v199
      %v202 = vadd.f32 %v191, %v200
      %v203 = vadd.f32 %v192, %v200
      %v204 = vadd.f32 %v193, %v200
      %v205 = vadd.f32 %v194, %v200
      %206 = vst [vmem:[#allocation3] sm:$0xff] %v202
      %207 = vst [vmem:[#allocation3 + $0x8] sm:$0xff] %v203
      %208 = vst [vmem:[#allocation3 + $0x10] sm:$0xff] %v204
      %209 = vst [vmem:[#allocation3 + $0x18] sm:$0xff] %v205
      %v210 = vmax.f32 %v202, 0.0
      %v211 = vmax.f32 %v203, 0.0
      %v212 = vmax.f32 %v204, 0.0
      %v213 = vmax.f32 %v205, 0.0
      %v214 = vpack.c.bf16 %v211, %v210
      %v215 = vpack.c.bf16 %v213, %v212
      %v218 = vunpack.c.l.b16 %v214
      %v219 = vunpack.c.h.b16 %v214
      %v220 = vunpack.c.l.b16 %v215
      %v221 = vunpack.c.h.b16 %v215
      %v222 = vpack.c.b16 %v218, %v218
      %v223 = vpack.c.b16 %v219, %v219
      %v224 = vpack.c.b16 %v220, %v220
      %v225 = vpack.c.b16 %v221, %v221
      %230 = vst [vmem:[%s4] sm:$0xf] %v222
      %231 = vst [vmem:[%s4 + $0x4] sm:$0xf] %v223
      %232 = vst [vmem:[%s4 + $0x8] sm:$0xf] %v224
      %233 = vst [vmem:[%s4 + $0xc] sm:$0xf] %v225
    $region21: #{pyramid_features_forward.8} parent=1 // pred_fallthru
      _
    // Predicated region
    $region22: #{pyramid_features_forward.8} parent=1 // pred_check
      _
    $region23: #{pyramid_features_forward.8} parent=1 // pred_check_branch
      %235 = sbr.rel (0) target = $region25
    $region24: #{pyramid_features_forward.8} parent=1 // pred_region
      %s237 = ssub.s32 512, 512
      %238 = vsyncadd [#allocation4], %s237
      %s239 = sshll.u32 [#allocation3], 4
      %s240 = int_to_ptr.vmem [resolvable:$true] %s239
      %245 = dma.vmem_to_hbm [thread:$0]  %s240, 512, %s3, [#allocation4], 128, 128, 8
    $region25: #{pyramid_features_forward.8} parent=1 // pred_fallthru
      _
    // Predicated region
    $region26: #{pyramid_features_forward.8} parent=1 // pred_check
      _
    $region27: #{pyramid_features_forward.8} parent=1 // pred_check_branch
      %247 = sbr.rel (0) target = $region29
    $region28: #{pyramid_features_forward.8} parent=1 // pred_region
      _
    $region29: #{pyramid_features_forward.8} parent=1 // pred_fallthru
      _
    // Predicated region
    $region30: #{pyramid_features_forward.8} parent=1 // pred_check
      _
    $region31: #{pyramid_features_forward.8} parent=1 // pred_check_branch
      %249 = sbr.rel (0) target = $region33
    $region32: #{pyramid_features_forward.8} parent=1 // pred_region
      %250 = dma.done [#allocation4], 512
    $region33: #{pyramid_features_forward.8} parent=1 // pred_fallthru
      _
    // Predicated region
    $region34: #{pyramid_features_forward.8} parent=1 // pred_check
      _
    $region35: #{pyramid_features_forward.8} parent=1 // pred_check_branch
      %252 = sbr.rel (0) target = $region37
    $region36: #{pyramid_features_forward.8} parent=1 // pred_region
      _
    $region37: #{pyramid_features_forward.8} parent=1 // pred_fallthru
      _
    %253 = vsyncpa [#allocation4], 1

// kernel: pyramid_features_forward.6
$region0: #{pyramid_features_forward.6}
  #allocation0 [shape = 'u32[]', space=smem, size = 0x4, offset = 0x4, fixed_abs, tag = 'smem constant byte address 0x4 - core index']
  #allocation1 [shape = 'u32[144,128]{1,0:T(1,128)}', space=vmem, size = 0x12000, scoped, tag = 'internal scratch']
  %s0 = inlined_call_operand.vmem [shape: bf16[512,8], index: 0, kind: input, shape index: {}]
  %s1 = inlined_call_operand.vmem [shape: bf16[8,128], index: 1, kind: input, shape index: {}]
  %s2 = inlined_call_operand.vmem [shape: f32[1,128], index: 2, kind: input, shape index: {}]
  %s3 = inlined_call_operand.vmem [shape: f32[128,128], index: 3, kind: input, shape index: {}]
  %s4 = inlined_call_operand.vmem [shape: f32[256,64], index: 4, kind: input, shape index: {}]
  %s5 = inlined_call_operand.vmem [shape: f32[512,128], index: 5, kind: output, shape index: {}]
  %s6 = sld [smem:[#allocation0]]
  $region53: #{pyramid_features_forward.6} parent=0
    _
  %s8 = ssub.s32 1, %s6
  %s9 = scalar_select 0, %s8, %s6
  loop: start=0, step=1, limit=4
  $region2: #{pyramid_features_forward.6} parent=0 // loop_pre_header
    _
  $region3: #{pyramid_features_forward.6} parent=0 // loop_header
    %s11 = sphi 0, %s15
    %p12 = scmp.ge.s32.totalorder %s11, 4
    %s21 = sphi 0, %s23
    %s24 = sphi 0, %s21
    %s25 = sphi 0, %s24
    %s41 = sphi 0, %s25
    %s45 = sphi 0, %s45
    %s47 = sphi 0, %s45
    %s48 = sphi 0, %s47
    %s62 = sphi 0, %s48
    %s66 = sphi 0, %s66
    %s68 = sphi 0, %s66
    %s69 = sphi 0, %s68
    %s83 = sphi 0, %s69
    %s89 = sphi 0, %s91
    %s92 = sphi 0, %s89
    %s93 = sphi 0, %s92
    %s109 = sphi 0, %s93
    %s113 = sphi 0, %s113
    %s115 = sphi 0, %s113
    %s116 = sphi 0, %s115
    %s130 = sphi 0, %s116
    %s136 = sphi 0, %s138
    %s139 = sphi 0, %s136
    %s140 = sphi 0, %s139
    %s156 = sphi 0, %s140
  $region4: #{pyramid_features_forward.6} parent=0 // loop_header_branch
    %14 = sbr.rel (%p12) target = $region8
  $region5: #{pyramid_features_forward.6} parent=0 // loop_body
    %s16 = ssub.s32 %s11, 1
    %s17 = ssub.s32 %s11, 2
    %s18 = sadd.s32 %s11, 1
    %s19 = ssub.s32 %s11, %s18
    %p20 = scmp.eq.s32.totalorder %s19, 0
    %s22 = sadd.s32 %s21, 1
    %s23 = scalar_select %p20, %s21, %s22
    %p26 = pneg %p20
    %p27 = scmp.eq.s32.totalorder %s11, 1
    %p28 = por %p26, %p27
    %p29 = scmp.ne.s32.totalorder %s21, %s24
    %p30 = scmp.eq.s32.totalorder %s11, 0
    %p31 = por %p29, %p30
    %p32 = scmp.ne.s32.totalorder %s21, %s24
    %p33 = scmp.eq.s32.totalorder %s16, 1
    %p34 = por %p32, %p33
    %p35 = scmp.ne.s32.totalorder %s24, %s25
    %p36 = scmp.eq.s32.totalorder %s16, 0
    %p37 = por %p35, %p36
    %p38 = scmp.ne.s32.totalorder %s24, %s25
    %p39 = scmp.eq.s32.totalorder %s17, 1
    %p40 = por %p38, %p39
    %p42 = scmp.ne.s32.totalorder %s25, %s41
    %p43 = scmp.eq.s32.totalorder %s17, 0
    %p44 = por %p42, %p43
    %s46 = sadd.s32 %s45, 1
    %p49 = scmp.eq.s32.totalorder %s11, 1
    %p50 = scmp.ne.s32.totalorder %s45, %s47
    %p51 = scmp.eq.s32.totalorder %s11, 0
    %p52 = por %p50, %p51
    %p53 = scmp.ne.s32.totalorder %s45, %s47
    %p54 = scmp.eq.s32.totalorder %s16, 1
    %p55 = por %p53, %p54
    %p56 = scmp.ne.s32.totalorder %s47, %s48
    %p57 = scmp.eq.s32.totalorder %s16, 0
    %p58 = por %p56, %p57
    %p59 = scmp.ne.s32.totalorder %s47, %s48
    %p60 = scmp.eq.s32.totalorder %s17, 1
    %p61 = por %p59, %p60
    %p63 = scmp.ne.s32.totalorder %s48, %s62
    %p64 = scmp.eq.s32.totalorder %s17, 0
    %p65 = por %p63, %p64
    %s67 = sadd.s32 %s66, 1
    %p70 = scmp.eq.s32.totalorder %s11, 1
    %p71 = scmp.ne.s32.totalorder %s66, %s68
    %p72 = scmp.eq.s32.totalorder %s11, 0
    %p73 = por %p71, %p72
    %p74 = scmp.ne.s32.totalorder %s66, %s68
    %p75 = scmp.eq.s32.totalorder %s16, 1
    %p76 = por %p74, %p75
    %p77 = scmp.ne.s32.totalorder %s68, %s69
    %p78 = scmp.eq.s32.totalorder %s16, 0
    %p79 = por %p77, %p78
    %p80 = scmp.ne.s32.totalorder %s68, %s69
    %p81 = scmp.eq.s32.totalorder %s17, 1
    %p82 = por %p80, %p81
    %p84 = scmp.ne.s32.totalorder %s69, %s83
    %p85 = scmp.eq.s32.totalorder %s17, 0
    %p86 = por %p84, %p85
    %s87 = ssub.s32 %s11, %s18
    %p88 = scmp.eq.s32.totalorder %s87, 0
    %s90 = sadd.s32 %s89, 1
    %s91 = scalar_select %p88, %s89, %s90
    %p94 = pneg %p88
    %p95 = scmp.eq.s32.totalorder %s11, 1
    %p96 = por %p94, %p95
    %p97 = scmp.ne.s32.totalorder %s89, %s92
    %p98 = scmp.eq.s32.totalorder %s11, 0
    %p99 = por %p97, %p98
    %p100 = scmp.ne.s32.totalorder %s89, %s92
    %p101 = scmp.eq.s32.totalorder %s16, 1
    %p102 = por %p100, %p101
    %p103 = scmp.ne.s32.totalorder %s92, %s93
    %p104 = scmp.eq.s32.totalorder %s16, 0
    %p105 = por %p103, %p104
    %p106 = scmp.ne.s32.totalorder %s92, %s93
    %p107 = scmp.eq.s32.totalorder %s17, 1
    %p108 = por %p106, %p107
    %p110 = scmp.ne.s32.totalorder %s93, %s109
    %p111 = scmp.eq.s32.totalorder %s17, 0
    %p112 = por %p110, %p111
    %s114 = sadd.s32 %s113, 1
    %p117 = scmp.eq.s32.totalorder %s11, 1
    %p118 = scmp.ne.s32.totalorder %s113, %s115
    %p119 = scmp.eq.s32.totalorder %s11, 0
    %p120 = por %p118, %p119
    %p121 = scmp.ne.s32.totalorder %s113, %s115
    %p122 = scmp.eq.s32.totalorder %s16, 1
    %p123 = por %p121, %p122
    %p124 = scmp.ne.s32.totalorder %s115, %s116
    %p125 = scmp.eq.s32.totalorder %s16, 0
    %p126 = por %p124, %p125
    %p127 = scmp.ne.s32.totalorder %s115, %s116
    %p128 = scmp.eq.s32.totalorder %s17, 1
    %p129 = por %p127, %p128
    %p131 = scmp.ne.s32.totalorder %s116, %s130
    %p132 = scmp.eq.s32.totalorder %s17, 0
    %p133 = por %p131, %p132
    %s134 = ssub.s32 %s11, %s18
    %p135 = scmp.eq.s32.totalorder %s134, 0
    %s137 = sadd.s32 %s136, 1
    %s138 = scalar_select %p135, %s136, %s137
    %p141 = pneg %p135
    %p142 = scmp.eq.s32.totalorder %s11, 1
    %p143 = por %p141, %p142
    %p144 = scmp.ne.s32.totalorder %s136, %s139
    %p145 = scmp.eq.s32.totalorder %s11, 0
    %p146 = por %p144, %p145
    %p147 = scmp.ne.s32.totalorder %s136, %s139
    %p148 = scmp.eq.s32.totalorder %s16, 1
    %p149 = por %p147, %p148
    %p150 = scmp.ne.s32.totalorder %s139, %s140
    %p151 = scmp.eq.s32.totalorder %s16, 0
    %p152 = por %p150, %p151
    %p153 = scmp.ne.s32.totalorder %s139, %s140
    %p154 = scmp.eq.s32.totalorder %s17, 1
    %p155 = por %p153, %p154
    %p157 = scmp.ne.s32.totalorder %s140, %s156
    %p158 = scmp.eq.s32.totalorder %s17, 0
    %p159 = por %p157, %p158
    %p160 = scmp.le.s32.totalorder 1, %s11
    %p161 = scmp.lt.s32.totalorder %s11, 3
    %p162 = pnand %p160, %p161
    %p163 = pneg %p162
    // Predicated region
    $region9: #{pyramid_features_forward.6} parent=5 // pred_check
      _
    $region10: #{pyramid_features_forward.6} parent=5 // pred_check_branch
      %165 = sbr.rel (%p162) target = $region12
    $region11: #{pyramid_features_forward.6} parent=5 // pred_region
      %s166 = ssub.s32 %s11, 1
      // Predicated region
      $region13: #{pyramid_features_forward.6} parent=11 // pred_check
        %p167 = pneg %p58
      $region14: #{pyramid_features_forward.6} parent=11 // pred_check_branch
        %169 = sbr.rel (%p167) target = $region16
      $region15: #{pyramid_features_forward.6} parent=11 // pred_region
        _
      $region16: #{pyramid_features_forward.6} parent=11 // pred_fallthru
        _
      // Predicated region
      $region17: #{pyramid_features_forward.6} parent=11 // pred_check
        %p170 = pneg %p79
      $region18: #{pyramid_features_forward.6} parent=11 // pred_check_branch
        %172 = sbr.rel (%p170) target = $region20
      $region19: #{pyramid_features_forward.6} parent=11 // pred_region
        _
      $region20: #{pyramid_features_forward.6} parent=11 // pred_fallthru
        _
      // Predicated region
      $region21: #{pyramid_features_forward.6} parent=11 // pred_check
        %p173 = pneg %p126
      $region22: #{pyramid_features_forward.6} parent=11 // pred_check_branch
        %175 = sbr.rel (%p173) target = $region24
      $region23: #{pyramid_features_forward.6} parent=11 // pred_region
        _
      $region24: #{pyramid_features_forward.6} parent=11 // pred_fallthru
        _
    $region12: #{pyramid_features_forward.6} parent=5 // pred_fallthru
      _
    %p176 = scmp.lt.s32.totalorder %s11, 2
    // Predicated region
    $region25: #{pyramid_features_forward.6} parent=5 // pred_check
      %p177 = pneg %p176
    $region26: #{pyramid_features_forward.6} parent=5 // pred_check_branch
      %179 = sbr.rel (%p177) target = $region28
    $region27: #{pyramid_features_forward.6} parent=5 // pred_region
      // Predicated region
      $region29: #{pyramid_features_forward.6} parent=27 // pred_check
        %p180 = pneg %p31
      $region30: #{pyramid_features_forward.6} parent=27 // pred_check_branch
        %182 = sbr.rel (%p180) target = $region32
      $region31: #{pyramid_features_forward.6} parent=27 // pred_region
        %s183 = smul.u32 32, %s11
        %p184 = scmp.lt.s32.totalorder %s183, 63
        %s185 = scalar_select %p184, %s183, 63
        %s186 = smul.addr %s185, 4
        %s187 = scalar_lea.vmem %s0, %s186
        %s188 = smul.u32 32, %s11
      $region32: #{pyramid_features_forward.6} parent=27 // pred_fallthru
        _
      // Predicated region
      $region33: #{pyramid_features_forward.6} parent=27 // pred_check
        %p189 = pneg %p99
      $region34: #{pyramid_features_forward.6} parent=27 // pred_check_branch
        %191 = sbr.rel (%p189) target = $region36
      $region35: #{pyramid_features_forward.6} parent=27 // pred_region
        %s192 = smul.u32 8, %s11
        %p193 = scmp.lt.s32.totalorder %s192, 15
        %s194 = scalar_select %p193, %s192, 15
        %s195 = smul.addr %s194, 8
        %s196 = scalar_lea.vmem %s3, %s195
        %s197 = smul.u32 8, %s11
      $region36: #{pyramid_features_forward.6} parent=27 // pred_fallthru
        _
    $region28: #{pyramid_features_forward.6} parent=5 // pred_fallthru
      _
    %p198 = scmp.le.s32.totalorder 1, %s11
    %p199 = scmp.lt.s32.totalorder %s11, 3
    %p200 = pnand %p198, %p199
    %p201 = pneg %p200
    // Predicated region
    $region37: #{pyramid_features_forward.6} parent=5 // pred_check
      _
    $region38: #{pyramid_features_forward.6} parent=5 // pred_check_branch
      %203 = sbr.rel (%p200) target = $region40
    $region39: #{pyramid_features_forward.6} parent=5 // pred_region
      %s204 = ssub.s32 %s11, 1
      %s205 = smul.u32 32, %s16
      %p206 = scmp.lt.s32.totalorder %s205, 63
      %s207 = scalar_select %p206, %s205, 63
      %s208 = smul.addr %s207, 4
      %s209 = scalar_lea.vmem %s0, %s208
      %p210 = pneg %p37
      %p211 = pneg %p34
      %p212 = pneg %p58
      %p213 = pneg %p55
      %p214 = pneg %p79
      %p215 = pneg %p76
      %s216 = smul.u32 8, %s16
      %p217 = scmp.lt.s32.totalorder %s216, 15
      %s218 = scalar_select %p217, %s216, 15
      %s219 = smul.addr %s218, 8
      %s220 = scalar_lea.vmem %s3, %s219
      %p221 = pneg %p105
      %p222 = pneg %p102
      %p223 = pneg %p126
      %p224 = pneg %p123
      %p225 = pneg %p152
      %p226 = pneg %p149
      %s227 = smul.u32 32, %s16
      %p228 = scmp.lt.s32.totalorder %s227, 63
      %s229 = scalar_select %p228, %s227, 63
      %s230 = smul.addr %s229, 8
      %s231 = scalar_lea.vmem %s5, %s230
      %s232 = smul.u32 32, %s16
      %p233 = scmp.lt.s32.totalorder %s232, 63
      %s234 = scalar_select %p233, %s232, 63
      %s235 = smul.addr %s234, 4
      %s236 = scalar_lea.vmem %s0, %s235
      %s237 = smul.u32 32, %s16
      %s238 = smul.u32 8, %s16
      %p239 = scmp.lt.s32.totalorder %s238, 15
      %s240 = scalar_select %p239, %s238, 15
      %s241 = smul.addr %s240, 8
      %s242 = scalar_lea.vmem %s3, %s241
      %s243 = smul.u32 8, %s16
      %s244 = smul.u32 32, %s16
      %p245 = scmp.lt.s32.totalorder %s244, 63
      %s246 = scalar_select %p245, %s244, 63
      %s247 = smul.addr %s246, 8
      %s248 = scalar_lea.vmem %s5, %s247
      %s249 = smul.u32 32, %s16
      %v251 = vld [vmem:[%s236] sm:$0xf]
      %v252 = vld [vmem:[%s236 + $0x4] sm:$0xf]
      %v253 = vld [vmem:[%s236 + $0x8] sm:$0xf]
      %v254 = vld [vmem:[%s236 + $0xc] sm:$0xf]
      %v255 = vld [vmem:[%s236 + $0x10] sm:$0xf]
      %v256 = vld [vmem:[%s236 + $0x14] sm:$0xf]
      %v257 = vld [vmem:[%s236 + $0x18] sm:$0xf]
      %v258 = vld [vmem:[%s236 + $0x1c] sm:$0xf]
      %v259 = vld [vmem:[%s236 + $0x20] sm:$0xf]
      %v260 = vld [vmem:[%s236 + $0x24] sm:$0xf]
      %v261 = vld [vmem:[%s236 + $0x28] sm:$0xf]
      %v262 = vld [vmem:[%s236 + $0x2c] sm:$0xf]
      %v263 = vld [vmem:[%s236 + $0x30] sm:$0xf]
      %v264 = vld [vmem:[%s236 + $0x34] sm:$0xf]
      %v265 = vld [vmem:[%s236 + $0x38] sm:$0xf]
      %v266 = vld [vmem:[%s236 + $0x3c] sm:$0xf]
      %v267 = vld [vmem:[%s236 + $0x40] sm:$0xf]
      %v268 = vld [vmem:[%s236 + $0x44] sm:$0xf]
      %v269 = vld [vmem:[%s236 + $0x48] sm:$0xf]
      %v270 = vld [vmem:[%s236 + $0x4c] sm:$0xf]
      %v271 = vld [vmem:[%s236 + $0x50] sm:$0xf]
      %v272 = vld [vmem:[%s236 + $0x54] sm:$0xf]
      %v273 = vld [vmem:[%s236 + $0x58] sm:$0xf]
      %v274 = vld [vmem:[%s236 + $0x5c] sm:$0xf]
      %v275 = vld [vmem:[%s236 + $0x60] sm:$0xf]
      %v276 = vld [vmem:[%s236 + $0x64] sm:$0xf]
      %v277 = vld [vmem:[%s236 + $0x68] sm:$0xf]
      %v278 = vld [vmem:[%s236 + $0x6c] sm:$0xf]
      %v279 = vld [vmem:[%s236 + $0x70] sm:$0xf]
      %v280 = vld [vmem:[%s236 + $0x74] sm:$0xf]
      %v281 = vld [vmem:[%s236 + $0x78] sm:$0xf]
      %v282 = vld [vmem:[%s236 + $0x7c] sm:$0xf]
      %v283 = vld [vmem:[%s1] sm:$0xf]
      %v284 = vld [vmem:[%s4] sm:$0xff]
      %v285 = vld [vmem:[%s4 + $0x8] sm:$0xff]
      %v286 = vld [vmem:[%s4 + $0x10] sm:$0xff]
      %v287 = vld [vmem:[%s4 + $0x18] sm:$0xff]
      %v288 = vld [vmem:[%s4 + $0x20] sm:$0xff]
      %v289 = vld [vmem:[%s4 + $0x28] sm:$0xff]
      %v290 = vld [vmem:[%s4 + $0x30] sm:$0xff]
      %v291 = vld [vmem:[%s4 + $0x38] sm:$0xff]
      %v292 = vld [vmem:[%s4 + $0x40] sm:$0xff]
      %v293 = vld [vmem:[%s4 + $0x48] sm:$0xff]
      %v294 = vld [vmem:[%s4 + $0x50] sm:$0xff]
      %v295 = vld [vmem:[%s4 + $0x58] sm:$0xff]
      %v296 = vld [vmem:[%s4 + $0x60] sm:$0xff]
      %v297 = vld [vmem:[%s4 + $0x68] sm:$0xff]
      %v298 = vld [vmem:[%s4 + $0x70] sm:$0xff]
      %v299 = vld [vmem:[%s4 + $0x78] sm:$0xff]
      %v300 = vld [vmem:[%s4 + $0x80] sm:$0xff]
      %v301 = vld [vmem:[%s4 + $0x88] sm:$0xff]
      %v302 = vld [vmem:[%s4 + $0x90] sm:$0xff]
      %v303 = vld [vmem:[%s4 + $0x98] sm:$0xff]
      %v304 = vld [vmem:[%s4 + $0xa0] sm:$0xff]
      %v305 = vld [vmem:[%s4 + $0xa8] sm:$0xff]
      %v306 = vld [vmem:[%s4 + $0xb0] sm:$0xff]
      %v307 = vld [vmem:[%s4 + $0xb8] sm:$0xff]
      %v308 = vld [vmem:[%s4 + $0xc0] sm:$0xff]
      %v309 = vld [vmem:[%s4 + $0xc8] sm:$0xff]
      %v310 = vld [vmem:[%s4 + $0xd0] sm:$0xff]
      %v311 = vld [vmem:[%s4 + $0xd8] sm:$0xff]
      %v312 = vld [vmem:[%s4 + $0xe0] sm:$0xff]
      %v313 = vld [vmem:[%s4 + $0xe8] sm:$0xff]
      %v314 = vld [vmem:[%s4 + $0xf0] sm:$0xff]
      %v315 = vld [vmem:[%s4 + $0xf8] sm:$0xff]
      %v316 = vld [vmem:[%s242] sm:$0xff]
      %v317 = vld [vmem:[%s242 + $0x8] sm:$0xff]
      %v318 = vld [vmem:[%s242 + $0x10] sm:$0xff]
      %v319 = vld [vmem:[%s242 + $0x18] sm:$0xff]
      %v320 = vld [vmem:[%s242 + $0x20] sm:$0xff]
      %v321 = vld [vmem:[%s242 + $0x28] sm:$0xff]
      %v322 = vld [vmem:[%s242 + $0x30] sm:$0xff]
      %v323 = vld [vmem:[%s242 + $0x38] sm:$0xff]
      %vm324 = vcmask 523264
      %v326 = vsel %vm324, %v284, 0
      %v329 = vsel %vm324, %v285, 0
      %v332 = vsel %vm324, %v286, 0
      %v335 = vsel %vm324, %v287, 0
      %v338 = vsel %vm324, %v288, 0
      %v341 = vsel %vm324, %v289, 0
      %v344 = vsel %vm324, %v290, 0
      %v347 = vsel %vm324, %v291, 0
      %v350 = vsel %vm324, %v292, 0
      %v353 = vsel %vm324, %v293, 0
      %v356 = vsel %vm324, %v294, 0
      %v359 = vsel %vm324, %v295, 0
      %v362 = vsel %vm324, %v296, 0
      %v365 = vsel %vm324, %v297, 0
      %v368 = vsel %vm324, %v298, 0
      %v371 = vsel %vm324, %v299, 0
      %v374 = vsel %vm324, %v300, 0
      %v377 = vsel %vm324, %v301, 0
      %v380 = vsel %vm324, %v302, 0
      %v383 = vsel %vm324, %v303, 0
      %v386 = vsel %vm324, %v304, 0
      %v389 = vsel %vm324, %v305, 0
      %v392 = vsel %vm324, %v306, 0
      %v395 = vsel %vm324, %v307, 0
      %v398 = vsel %vm324, %v308, 0
      %v401 = vsel %vm324, %v309, 0
      %v404 = vsel %vm324, %v310, 0
      %v407 = vsel %vm324, %v311, 0
      %v410 = vsel %vm324, %v312, 0
      %v413 = vsel %vm324, %v313, 0
      %v416 = vsel %vm324, %v314, 0
      %v419 = vsel %vm324, %v315, 0
      %421 = vmatprep.subr.mxu0 0.0
      %422 = vmatpush1.msra.mxu0 %v316
      %423 = vmatprep.subr.mxu0 0.0
      %424 = vmatpush1.msra.mxu0 %v317
      %425 = vmatprep.subr.mxu0 0.0
      %426 = vmatpush1.msra.mxu0 %v318
      %427 = vmatprep.subr.mxu0 0.0
      %428 = vmatpush1.msra.mxu0 %v319
      %429 = vmatprep.subr.mxu0 0.0
      %430 = vmatpush1.msra.mxu0 %v320
      %431 = vmatprep.subr.mxu0 0.0
      %432 = vmatpush1.msra.mxu0 %v321
      %433 = vmatprep.subr.mxu0 0.0
      %434 = vmatpush1.msra.mxu0 %v322
      %435 = vmatprep.subr.mxu0 0.0
      %436 = vmatpush1.msra.mxu0 %v323
      %437 = vmatprep.subr.mxu0 0.0
      %438 = vmatpush1.msra.mxu0 0.0
      %439 = vmatprep.subr.mxu0 0.0
      %440 = vmatpush1.msra.mxu0 0.0
      %441 = vmatprep.subr.mxu0 0.0
      %442 = vmatpush1.msra.mxu0 0.0
      %443 = vmatprep.subr.mxu0 0.0
      %444 = vmatpush1.msra.mxu0 0.0
      %445 = vmatprep.subr.mxu0 0.0
      %446 = vmatpush1.msra.mxu0 0.0
      %447 = vmatprep.subr.mxu0 0.0
      %448 = vmatpush1.msra.mxu0 0.0
      %449 = vmatprep.subr.mxu0 0.0
      %450 = vmatpush1.msra.mxu0 0.0
      %451 = vmatprep.subr.mxu0 0.0
      %452 = vmatpush1.msra.mxu0 0.0
      %453 = vmatprep.subr.mxu0 0.0
      %454 = vmatpush1.msra.mxu0 0.0
      %455 = vmatprep.subr.mxu0 0.0
      %456 = vmatpush1.msra.mxu0 0.0
      %457 = vmatprep.subr.mxu0 0.0
      %458 = vmatpush1.msra.mxu0 0.0
      %459 = vmatprep.subr.mxu0 0.0
      %460 = vmatpush1.msra.mxu0 0.0
      %461 = vmatprep.subr.mxu0 0.0
      %462 = vmatpush1.msra.mxu0 0.0
      %463 = vmatprep.subr.mxu0 0.0
      %464 = vmatpush1.msra.mxu0 0.0
      %465 = vmatprep.subr.mxu0 0.0
      %466 = vmatpush1.msra.mxu0 0.0
      %467 = vmatprep.subr.mxu0 0.0
      %468 = vmatpush1.msra.mxu0 0.0
      %469 = vmatprep.subr.mxu0 0.0
      %470 = vmatpush1.msra.mxu0 0.0
      %471 = vmatprep.subr.mxu0 0.0
      %472 = vmatpush1.msra.mxu0 0.0
      %473 = vmatprep.subr.mxu0 0.0
      %474 = vmatpush1.msra.mxu0 0.0
      %475 = vmatprep.subr.mxu0 0.0
      %476 = vmatpush1.msra.mxu0 0.0
      %477 = vmatprep.subr.mxu0 0.0
      %478 = vmatpush1.msra.mxu0 0.0
      %479 = vmatprep.subr.mxu0 0.0
      %480 = vmatpush1.msra.mxu0 0.0
      %481 = vmatprep.subr.mxu0 0.0
      %482 = vmatpush1.msra.mxu0 0.0
      %483 = vmatprep.subr.mxu0 0.0
      %484 = vmatpush1.msra.mxu0 0.0
      %485 = vmatprep.mubr.f32.mxu0 0.0
      %486 = vmatmul.mubr.f32.gmra.mrb[0].mxu0 %v326
      %v487 = vpop.f32.mrb[0].mxu0
      %v488 = vadd.f32 0.0, %v487
      %v489 = vpop.f32.mrb[0].mxu0
      %490 = vmatprep.mubr.f32.mxu0 0.0
      %491 = vmatmul.mubr.f32.gmra.mrb[0].mxu0 %v329
      %v492 = vpop.f32.mrb[0].mxu0
      %v493 = vadd.f32 0.0, %v492
      %v494 = vpop.f32.mrb[0].mxu0
      %495 = vmatprep.mubr.f32.mxu0 0.0
      %496 = vmatmul.mubr.f32.gmra.mrb[0].mxu0 %v332
      %v497 = vpop.f32.mrb[0].mxu0
      %v498 = vadd.f32 0.0, %v497
      %v499 = vpop.f32.mrb[0].mxu0
      %500 = vmatprep.mubr.f32.mxu0 0.0
      %501 = vmatmul.mubr.f32.gmra.mrb[0].mxu0 %v335
      %v502 = vpop.f32.mrb[0].mxu0
      %v503 = vadd.f32 0.0, %v502
      %v504 = vpop.f32.mrb[0].mxu0
      %505 = vmatprep.mubr.f32.mxu0 0.0
      %506 = vmatmul.mubr.f32.gmra.mrb[0].mxu0 %v338
      %v507 = vpop.f32.mrb[0].mxu0
      %v508 = vadd.f32 0.0, %v507
      %v509 = vpop.f32.mrb[0].mxu0
      %510 = vmatprep.mubr.f32.mxu0 0.0
      %511 = vmatmul.mubr.f32.gmra.mrb[0].mxu0 %v341
      %v512 = vpop.f32.mrb[0].mxu0
      %v513 = vadd.f32 0.0, %v512
      %v514 = vpop.f32.mrb[0].mxu0
      %515 = vmatprep.mubr.f32.mxu0 0.0
      %516 = vmatmul.mubr.f32.gmra.mrb[0].mxu0 %v344
      %v517 = vpop.f32.mrb[0].mxu0
      %v518 = vadd.f32 0.0, %v517
      %v519 = vpop.f32.mrb[0].mxu0
      %520 = vmatprep.mubr.f32.mxu0 0.0
      %521 = vmatmul.mubr.f32.gmra.mrb[0].mxu0 %v347
      %v522 = vpop.f32.mrb[0].mxu0
      %v523 = vadd.f32 0.0, %v522
      %v524 = vpop.f32.mrb[0].mxu0
      %525 = vmatprep.mubr.f32.mxu0 0.0
      %526 = vmatmul.mubr.f32.gmra.mrb[0].mxu0 %v350
      %v527 = vpop.f32.mrb[0].mxu0
      %v528 = vadd.f32 0.0, %v527
      %v529 = vpop.f32.mrb[0].mxu0
      %530 = vmatprep.mubr.f32.mxu0 0.0
      %531 = vmatmul.mubr.f32.gmra.mrb[0].mxu0 %v353
      %v532 = vpop.f32.mrb[0].mxu0
      %v533 = vadd.f32 0.0, %v532
      %v534 = vpop.f32.mrb[0].mxu0
      %535 = vmatprep.mubr.f32.mxu0 0.0
      %536 = vmatmul.mubr.f32.gmra.mrb[0].mxu0 %v356
      %v537 = vpop.f32.mrb[0].mxu0
      %v538 = vadd.f32 0.0, %v537
      %v539 = vpop.f32.mrb[0].mxu0
      %540 = vmatprep.mubr.f32.mxu0 0.0
      %541 = vmatmul.mubr.f32.gmra.mrb[0].mxu0 %v359
      %v542 = vpop.f32.mrb[0].mxu0
      %v543 = vadd.f32 0.0, %v542
      %v544 = vpop.f32.mrb[0].mxu0
      %545 = vmatprep.mubr.f32.mxu0 0.0
      %546 = vmatmul.mubr.f32.gmra.mrb[0].mxu0 %v362
      %v547 = vpop.f32.mrb[0].mxu0
      %v548 = vadd.f32 0.0, %v547
      %v549 = vpop.f32.mrb[0].mxu0
      %550 = vmatprep.mubr.f32.mxu0 0.0
      %551 = vmatmul.mubr.f32.gmra.mrb[0].mxu0 %v365
      %v552 = vpop.f32.mrb[0].mxu0
      %v553 = vadd.f32 0.0, %v552
      %v554 = vpop.f32.mrb[0].mxu0
      %555 = vmatprep.mubr.f32.mxu0 0.0
      %556 = vmatmul.mubr.f32.gmra.mrb[0].mxu0 %v368
      %v557 = vpop.f32.mrb[0].mxu0
      %v558 = vadd.f32 0.0, %v557
      %v559 = vpop.f32.mrb[0].mxu0
      %560 = vmatprep.mubr.f32.mxu0 0.0
      %561 = vmatmul.mubr.f32.gmra.mrb[0].mxu0 %v371
      %v562 = vpop.f32.mrb[0].mxu0
      %v563 = vadd.f32 0.0, %v562
      %v564 = vpop.f32.mrb[0].mxu0
      %565 = vmatprep.mubr.f32.mxu0 0.0
      %566 = vmatmul.mubr.f32.gmra.mrb[0].mxu0 %v374
      %v567 = vpop.f32.mrb[0].mxu0
      %v568 = vadd.f32 0.0, %v567
      %v569 = vpop.f32.mrb[0].mxu0
      %570 = vmatprep.mubr.f32.mxu0 0.0
      %571 = vmatmul.mubr.f32.gmra.mrb[0].mxu0 %v377
      %v572 = vpop.f32.mrb[0].mxu0
      %v573 = vadd.f32 0.0, %v572
      %v574 = vpop.f32.mrb[0].mxu0
      %575 = vmatprep.mubr.f32.mxu0 0.0
      %576 = vmatmul.mubr.f32.gmra.mrb[0].mxu0 %v380
      %v577 = vpop.f32.mrb[0].mxu0
      %v578 = vadd.f32 0.0, %v577
      %v579 = vpop.f32.mrb[0].mxu0
      %580 = vmatprep.mubr.f32.mxu0 0.0
      %581 = vmatmul.mubr.f32.gmra.mrb[0].mxu0 %v383
      %v582 = vpop.f32.mrb[0].mxu0
      %v583 = vadd.f32 0.0, %v582
      %v584 = vpop.f32.mrb[0].mxu0
      %585 = vmatprep.mubr.f32.mxu0 0.0
      %586 = vmatmul.mubr.f32.gmra.mrb[0].mxu0 %v386
      %v587 = vpop.f32.mrb[0].mxu0
      %v588 = vadd.f32 0.0, %v587
      %v589 = vpop.f32.mrb[0].mxu0
      %590 = vmatprep.mubr.f32.mxu0 0.0
      %591 = vmatmul.mubr.f32.gmra.mrb[0].mxu0 %v389
      %v592 = vpop.f32.mrb[0].mxu0
      %v593 = vadd.f32 0.0, %v592
      %v594 = vpop.f32.mrb[0].mxu0
      %595 = vmatprep.mubr.f32.mxu0 0.0
      %596 = vmatmul.mubr.f32.gmra.mrb[0].mxu0 %v392
      %v597 = vpop.f32.mrb[0].mxu0
      %v598 = vadd.f32 0.0, %v597
      %v599 = vpop.f32.mrb[0].mxu0
      %600 = vmatprep.mubr.f32.mxu0 0.0
      %601 = vmatmul.mubr.f32.gmra.mrb[0].mxu0 %v395
      %v602 = vpop.f32.mrb[0].mxu0
      %v603 = vadd.f32 0.0, %v602
      %v604 = vpop.f32.mrb[0].mxu0
      %605 = vmatprep.mubr.f32.mxu0 0.0
      %606 = vmatmul.mubr.f32.gmra.mrb[0].mxu0 %v398
      %v607 = vpop.f32.mrb[0].mxu0
      %v608 = vadd.f32 0.0, %v607
      %v609 = vpop.f32.mrb[0].mxu0
      %610 = vmatprep.mubr.f32.mxu0 0.0
      %611 = vmatmul.mubr.f32.gmra.mrb[0].mxu0 %v401
      %v612 = vpop.f32.mrb[0].mxu0
      %v613 = vadd.f32 0.0, %v612
      %v614 = vpop.f32.mrb[0].mxu0
      %615 = vmatprep.mubr.f32.mxu0 0.0
      %616 = vmatmul.mubr.f32.gmra.mrb[0].mxu0 %v404
      %v617 = vpop.f32.mrb[0].mxu0
      %v618 = vadd.f32 0.0, %v617
      %v619 = vpop.f32.mrb[0].mxu0
      %620 = vmatprep.mubr.f32.mxu0 0.0
      %621 = vmatmul.mubr.f32.gmra.mrb[0].mxu0 %v407
      %v622 = vpop.f32.mrb[0].mxu0
      %v623 = vadd.f32 0.0, %v622
      %v624 = vpop.f32.mrb[0].mxu0
      %625 = vmatprep.mubr.f32.mxu0 0.0
      %626 = vmatmul.mubr.f32.gmra.mrb[0].mxu0 %v410
      %v627 = vpop.f32.mrb[0].mxu0
      %v628 = vadd.f32 0.0, %v627
      %v629 = vpop.f32.mrb[0].mxu0
      %630 = vmatprep.mubr.f32.mxu0 0.0
      %631 = vmatmul.mubr.f32.gmra.mrb[0].mxu0 %v413
      %v632 = vpop.f32.mrb[0].mxu0
      %v633 = vadd.f32 0.0, %v632
      %v634 = vpop.f32.mrb[0].mxu0
      %635 = vmatprep.mubr.f32.mxu0 0.0
      %636 = vmatmul.mubr.f32.gmra.mrb[0].mxu0 %v416
      %v637 = vpop.f32.mrb[0].mxu0
      %v638 = vadd.f32 0.0, %v637
      %v639 = vpop.f32.mrb[0].mxu0
      %640 = vmatprep.mubr.f32.mxu0 0.0
      %641 = vmatmul.mubr.f32.gmra.mrb[0].mxu0 %v419
      %v642 = vpop.f32.mrb[0].mxu0
      %v643 = vadd.f32 0.0, %v642
      %v644 = vpop.f32.mrb[0].mxu0
      %645 = vdwg.mxu0
      %v646 = vld [vmem:[%s2] sm:$0x1]
      %v648 = vlaneseq
      %v649 = vshrl.u32 %v648, 7
      %v650 = vsub.s32 0, %v649
      %v651 = vrot.slane %v646, %v650
      %v685 = vunpack.c.l.b16 %v251
      %v686 = vunpack.c.l.b16 %v252
      %v687 = vunpack.c.l.b16 %v253
      %v688 = vunpack.c.l.b16 %v254
      %v689 = vunpack.c.l.b16 %v255
      %v690 = vunpack.c.l.b16 %v256
      %v691 = vunpack.c.l.b16 %v257
      %v692 = vunpack.c.l.b16 %v258
      %v693 = vunpack.c.l.b16 %v259
      %v694 = vunpack.c.l.b16 %v260
      %v695 = vunpack.c.l.b16 %v261
      %v696 = vunpack.c.l.b16 %v262
      %v697 = vunpack.c.l.b16 %v263
      %v698 = vunpack.c.l.b16 %v264
      %v699 = vunpack.c.l.b16 %v265
      %v700 = vunpack.c.l.b16 %v266
      %v701 = vunpack.c.l.b16 %v267
      %v702 = vunpack.c.l.b16 %v268
      %v703 = vunpack.c.l.b16 %v269
      %v704 = vunpack.c.l.b16 %v270
      %v705 = vunpack.c.l.b16 %v271
      %v706 = vunpack.c.l.b16 %v272
      %v707 = vunpack.c.l.b16 %v273
      %v708 = vunpack.c.l.b16 %v274
      %v709 = vunpack.c.l.b16 %v275
      %v710 = vunpack.c.l.b16 %v276
      %v711 = vunpack.c.l.b16 %v277
      %v712 = vunpack.c.l.b16 %v278
      %v713 = vunpack.c.l.b16 %v279
      %v714 = vunpack.c.l.b16 %v280
      %v715 = vunpack.c.l.b16 %v281
      %v716 = vunpack.c.l.b16 %v282
      %v717 = vpack.c.b16 %v686, %v685
      %v718 = vpack.c.b16 %v688, %v687
      %v719 = vpack.c.b16 %v690, %v689
      %v720 = vpack.c.b16 %v692, %v691
      %v721 = vpack.c.b16 %v694, %v693
      %v722 = vpack.c.b16 %v696, %v695
      %v723 = vpack.c.b16 %v698, %v697
      %v724 = vpack.c.b16 %v700, %v699
      %v725 = vpack.c.b16 %v702, %v701
      %v726 = vpack.c.b16 %v704, %v703
      %v727 = vpack.c.b16 %v706, %v705
      %v728 = vpack.c.b16 %v708, %v707
      %v729 = vpack.c.b16 %v710, %v709
      %v730 = vpack.c.b16 %v712, %v711
      %v731 = vpack.c.b16 %v714, %v713
      %v732 = vpack.c.b16 %v716, %v715
      %vm733 = vcmask 64512
      %v735 = vsel %vm733, %v717, 0
      %v738 = vsel %vm733, %v718, 0
      %v741 = vsel %vm733, %v719, 0
      %v744 = vsel %vm733, %v720, 0
      %v747 = vsel %vm733, %v721, 0
      %v750 = vsel %vm733, %v722, 0
      %v753 = vsel %vm733, %v723, 0
      %v756 = vsel %vm733, %v724, 0
      %v759 = vsel %vm733, %v725, 0
      %v762 = vsel %vm733, %v726, 0
      %v765 = vsel %vm733, %v727, 0
      %v768 = vsel %vm733, %v728, 0
      %v771 = vsel %vm733, %v729, 0
      %v774 = vsel %vm733, %v730, 0
      %v777 = vsel %vm733, %v731, 0
      %v780 = vsel %vm733, %v732, 0
      %vm782 = vcmask 1043456
      %v784 = vsel %vm782, %v283, 0
      %786 = vmatprep.subr.bf16.mxu0 0
      %787 = vmatpush1.bf16.msra.mxu0 %v784
      %788 = vmatprep.subr.bf16.mxu0 0
      %789 = vmatpush1.bf16.msra.mxu0 0
      %790 = vmatprep.subr.bf16.mxu0 0
      %791 = vmatpush1.bf16.msra.mxu0 0
      %792 = vmatprep.subr.bf16.mxu0 0
      %793 = vmatpush1.bf16.msra.mxu0 0
      %794 = vmatprep.subr.bf16.mxu0 0
      %795 = vmatpush1.bf16.msra.mxu0 0
      %796 = vmatprep.subr.bf16.mxu0 0
      %797 = vmatpush1.bf16.msra.mxu0 0
      %798 = vmatprep.subr.bf16.mxu0 0
      %799 = vmatpush1.bf16.msra.mxu0 0
      %800 = vmatprep.subr.bf16.mxu0 0
      %801 = vmatpush1.bf16.msra.mxu0 0
      %802 = vmatprep.subr.bf16.mxu0 0
      %803 = vmatpush1.bf16.msra.mxu0 0
      %804 = vmatprep.subr.bf16.mxu0 0
      %805 = vmatpush1.bf16.msra.mxu0 0
      %806 = vmatprep.subr.bf16.mxu0 0
      %807 = vmatpush1.bf16.msra.mxu0 0
      %808 = vmatprep.subr.bf16.mxu0 0
      %809 = vmatpush1.bf16.msra.mxu0 0
      %810 = vmatprep.subr.bf16.mxu0 0
      %811 = vmatpush1.bf16.msra.mxu0 0
      %812 = vmatprep.subr.bf16.mxu0 0
      %813 = vmatpush1.bf16.msra.mxu0 0
      %814 = vmatprep.subr.bf16.mxu0 0
      %815 = vmatpush1.bf16.msra.mxu0 0
      %816 = vmatprep.subr.bf16.mxu0 0
      %817 = vmatpush1.bf16.msra.mxu0 0
      %818 = vmatprep.mubr.bf16.mxu0 0
      %819 = vmatmul.mubr.bf16.gmra.mrb[0].mxu0 %v735
      %v820 = vpop.f32.mrb[0].mxu0
      %v821 = vadd.f32 %v651, %v820
      %v822 = vpop.f32.mrb[0].mxu0
      %v823 = vpop.f32.mrb[0].mxu0
      %v824 = vadd.f32 %v651, %v823
      %v825 = vpop.f32.mrb[0].mxu0
      %826 = vmatprep.mubr.bf16.mxu0 0
      %827 = vmatmul.mubr.bf16.gmra.mrb[0].mxu0 %v738
      %v828 = vpop.f32.mrb[0].mxu0
      %v829 = vadd.f32 %v651, %v828
      %v830 = vpop.f32.mrb[0].mxu0
      %v831 = vpop.f32.mrb[0].mxu0
      %v832 = vadd.f32 %v651, %v831
      %v833 = vpop.f32.mrb[0].mxu0
      %834 = vmatprep.mubr.bf16.mxu0 0
      %835 = vmatmul.mubr.bf16.gmra.mrb[0].mxu0 %v741
      %v836 = vpop.f32.mrb[0].mxu0
      %v837 = vadd.f32 %v651, %v836
      %v838 = vpop.f32.mrb[0].mxu0
      %v839 = vpop.f32.mrb[0].mxu0
      %v840 = vadd.f32 %v651, %v839
      %v841 = vpop.f32.mrb[0].mxu0
      %842 = vmatprep.mubr.bf16.mxu0 0
      %843 = vmatmul.mubr.bf16.gmra.mrb[0].mxu0 %v744
      %v844 = vpop.f32.mrb[0].mxu0
      %v845 = vadd.f32 %v651, %v844
      %v846 = vpop.f32.mrb[0].mxu0
      %v847 = vpop.f32.mrb[0].mxu0
      %v848 = vadd.f32 %v651, %v847
      %v849 = vpop.f32.mrb[0].mxu0
      %850 = vmatprep.mubr.bf16.mxu0 0
      %851 = vmatmul.mubr.bf16.gmra.mrb[0].mxu0 %v747
      %v852 = vpop.f32.mrb[0].mxu0
      %v853 = vadd.f32 %v651, %v852
      %v854 = vpop.f32.mrb[0].mxu0
      %v855 = vpop.f32.mrb[0].mxu0
      %v856 = vadd.f32 %v651, %v855
      %v857 = vpop.f32.mrb[0].mxu0
      %858 = vmatprep.mubr.bf16.mxu0 0
      %859 = vmatmul.mubr.bf16.gmra.mrb[0].mxu0 %v750
      %v860 = vpop.f32.mrb[0].mxu0
      %v861 = vadd.f32 %v651, %v860
      %v862 = vpop.f32.mrb[0].mxu0
      %v863 = vpop.f32.mrb[0].mxu0
      %v864 = vadd.f32 %v651, %v863
      %v865 = vpop.f32.mrb[0].mxu0
      %866 = vmatprep.mubr.bf16.mxu0 0
      %867 = vmatmul.mubr.bf16.gmra.mrb[0].mxu0 %v753
      %v868 = vpop.f32.mrb[0].mxu0
      %v869 = vadd.f32 %v651, %v868
      %v870 = vpop.f32.mrb[0].mxu0
      %v871 = vpop.f32.mrb[0].mxu0
      %v872 = vadd.f32 %v651, %v871
      %v873 = vpop.f32.mrb[0].mxu0
      %874 = vmatprep.mubr.bf16.mxu0 0
      %875 = vmatmul.mubr.bf16.gmra.mrb[0].mxu0 %v756
      %v876 = vpop.f32.mrb[0].mxu0
      %v877 = vadd.f32 %v651, %v876
      %v878 = vpop.f32.mrb[0].mxu0
      %v879 = vpop.f32.mrb[0].mxu0
      %v880 = vadd.f32 %v651, %v879
      %v881 = vpop.f32.mrb[0].mxu0
      %882 = vmatprep.mubr.bf16.mxu0 0
      %883 = vmatmul.mubr.bf16.gmra.mrb[0].mxu0 %v759
      %v884 = vpop.f32.mrb[0].mxu0
      %v885 = vadd.f32 %v651, %v884
      %v886 = vpop.f32.mrb[0].mxu0
      %v887 = vpop.f32.mrb[0].mxu0
      %v888 = vadd.f32 %v651, %v887
      %v889 = vpop.f32.mrb[0].mxu0
      %890 = vmatprep.mubr.bf16.mxu0 0
      %891 = vmatmul.mubr.bf16.gmra.mrb[0].mxu0 %v762
      %v892 = vpop.f32.mrb[0].mxu0
      %v893 = vadd.f32 %v651, %v892
      %v894 = vpop.f32.mrb[0].mxu0
      %v895 = vpop.f32.mrb[0].mxu0
      %v896 = vadd.f32 %v651, %v895
      %v897 = vpop.f32.mrb[0].mxu0
      %898 = vmatprep.mubr.bf16.mxu0 0
      %899 = vmatmul.mubr.bf16.gmra.mrb[0].mxu0 %v765
      %v900 = vpop.f32.mrb[0].mxu0
      %v901 = vadd.f32 %v651, %v900
      %v902 = vpop.f32.mrb[0].mxu0
      %v903 = vpop.f32.mrb[0].mxu0
      %v904 = vadd.f32 %v651, %v903
      %v905 = vpop.f32.mrb[0].mxu0
      %906 = vmatprep.mubr.bf16.mxu0 0
      %907 = vmatmul.mubr.bf16.gmra.mrb[0].mxu0 %v768
      %v908 = vpop.f32.mrb[0].mxu0
      %v909 = vadd.f32 %v651, %v908
      %v910 = vpop.f32.mrb[0].mxu0
      %v911 = vpop.f32.mrb[0].mxu0
      %v912 = vadd.f32 %v651, %v911
      %v913 = vpop.f32.mrb[0].mxu0
      %914 = vmatprep.mubr.bf16.mxu0 0
      %915 = vmatmul.mubr.bf16.gmra.mrb[0].mxu0 %v771
      %v916 = vpop.f32.mrb[0].mxu0
      %v917 = vadd.f32 %v651, %v916
      %v918 = vpop.f32.mrb[0].mxu0
      %v919 = vpop.f32.mrb[0].mxu0
      %v920 = vadd.f32 %v651, %v919
      %v921 = vpop.f32.mrb[0].mxu0
      %922 = vmatprep.mubr.bf16.mxu0 0
      %923 = vmatmul.mubr.bf16.gmra.mrb[0].mxu0 %v774
      %v924 = vpop.f32.mrb[0].mxu0
      %v925 = vadd.f32 %v651, %v924
      %v926 = vpop.f32.mrb[0].mxu0
      %v927 = vpop.f32.mrb[0].mxu0
      %v928 = vadd.f32 %v651, %v927
      %v929 = vpop.f32.mrb[0].mxu0
      %930 = vmatprep.mubr.bf16.mxu0 0
      %931 = vmatmul.mubr.bf16.gmra.mrb[0].mxu0 %v777
      %v932 = vpop.f32.mrb[0].mxu0
      %v933 = vadd.f32 %v651, %v932
      %v934 = vpop.f32.mrb[0].mxu0
      %v935 = vpop.f32.mrb[0].mxu0
      %v936 = vadd.f32 %v651, %v935
      %v937 = vpop.f32.mrb[0].mxu0
      %938 = vmatprep.mubr.bf16.mxu0 0
      %939 = vmatmul.mubr.bf16.gmra.mrb[0].mxu0 %v780
      %v940 = vpop.f32.mrb[0].mxu0
      %v941 = vadd.f32 %v651, %v940
      %v942 = vpop.f32.mrb[0].mxu0
      %v943 = vpop.f32.mrb[0].mxu0
      %v944 = vadd.f32 %v651, %v943
      %v945 = vpop.f32.mrb[0].mxu0
      %946 = vdwg.mxu0
      %v947 = vadd.f32 %v821, %v488
      %v948 = vadd.f32 %v824, %v493
      %v949 = vadd.f32 %v829, %v498
      %v950 = vadd.f32 %v832, %v503
      %v951 = vadd.f32 %v837, %v508
      %v952 = vadd.f32 %v840, %v513
      %v953 = vadd.f32 %v845, %v518
      %v954 = vadd.f32 %v848, %v523
      %v955 = vadd.f32 %v853, %v528
      %v956 = vadd.f32 %v856, %v533
      %v957 = vadd.f32 %v861, %v538
      %v958 = vadd.f32 %v864, %v543
      %v959 = vadd.f32 %v869, %v548
      %v960 = vadd.f32 %v872, %v553
      %v961 = vadd.f32 %v877, %v558
      %v962 = vadd.f32 %v880, %v563
      %v963 = vadd.f32 %v885, %v568
      %v964 = vadd.f32 %v888, %v573
      %v965 = vadd.f32 %v893, %v578
      %v966 = vadd.f32 %v896, %v583
      %v967 = vadd.f32 %v901, %v588
      %v968 = vadd.f32 %v904, %v593
      %v969 = vadd.f32 %v909, %v598
      %v970 = vadd.f32 %v912, %v603
      %v971 = vadd.f32 %v917, %v608
      %v972 = vadd.f32 %v920, %v613
      %v973 = vadd.f32 %v925, %v618
      %v974 = vadd.f32 %v928, %v623
      %v975 = vadd.f32 %v933, %v628
      %v976 = vadd.f32 %v936, %v633
      %v977 = vadd.f32 %v941, %v638
      %v978 = vadd.f32 %v944, %v643
      %979 = vst [vmem:[%s248] sm:$0xff] %v947
      %980 = vst [vmem:[%s248 + $0x8] sm:$0xff] %v948
      %981 = vst [vmem:[%s248 + $0x10] sm:$0xff] %v949
      %982 = vst [vmem:[%s248 + $0x18] sm:$0xff] %v950
      %983 = vst [vmem:[%s248 + $0x20] sm:$0xff] %v951
      %984 = vst [vmem:[%s248 + $0x28] sm:$0xff] %v952
      %985 = vst [vmem:[%s248 + $0x30] sm:$0xff] %v953
      %986 = vst [vmem:[%s248 + $0x38] sm:$0xff] %v954
      %987 = vst [vmem:[%s248 + $0x40] sm:$0xff] %v955
      %988 = vst [vmem:[%s248 + $0x48] sm:$0xff] %v956
      %989 = vst [vmem:[%s248 + $0x50] sm:$0xff] %v957
      %990 = vst [vmem:[%s248 + $0x58] sm:$0xff] %v958
      %991 = vst [vmem:[%s248 + $0x60] sm:$0xff] %v959
      %992 = vst [vmem:[%s248 + $0x68] sm:$0xff] %v960
      %993 = vst [vmem:[%s248 + $0x70] sm:$0xff] %v961
      %994 = vst [vmem:[%s248 + $0x78] sm:$0xff] %v962
      %995 = vst [vmem:[%s248 + $0x80] sm:$0xff] %v963
      %996 = vst [vmem:[%s248 + $0x88] sm:$0xff] %v964
      %997 = vst [vmem:[%s248 + $0x90] sm:$0xff] %v965
      %998 = vst [vmem:[%s248 + $0x98] sm:$0xff] %v966
      %999 = vst [vmem:[%s248 + $0xa0] sm:$0xff] %v967
      %1000 = vst [vmem:[%s248 + $0xa8] sm:$0xff] %v968
      %1001 = vst [vmem:[%s248 + $0xb0] sm:$0xff] %v969
      %1002 = vst [vmem:[%s248 + $0xb8] sm:$0xff] %v970
      %1003 = vst [vmem:[%s248 + $0xc0] sm:$0xff] %v971
      %1004 = vst [vmem:[%s248 + $0xc8] sm:$0xff] %v972
      %1005 = vst [vmem:[%s248 + $0xd0] sm:$0xff] %v973
      %1006 = vst [vmem:[%s248 + $0xd8] sm:$0xff] %v974
      %1007 = vst [vmem:[%s248 + $0xe0] sm:$0xff] %v975
      %1008 = vst [vmem:[%s248 + $0xe8] sm:$0xff] %v976
      %1009 = vst [vmem:[%s248 + $0xf0] sm:$0xff] %v977
      %1010 = vst [vmem:[%s248 + $0xf8] sm:$0xff] %v978
      %s1011 = smul.u32 32, %s16
      %p1012 = scmp.lt.s32.totalorder %s1011, 63
      %s1013 = scalar_select %p1012, %s1011, 63
      %s1014 = smul.addr %s1013, 8
      %s1015 = scalar_lea.vmem %s5, %s1014
      // Predicated region
      $region41: #{pyramid_features_forward.6} parent=39 // pred_check
        %p1016 = pneg %p149
      $region42: #{pyramid_features_forward.6} parent=39 // pred_check_branch
        %1018 = sbr.rel (%p1016) target = $region44
      $region43: #{pyramid_features_forward.6} parent=39 // pred_region
        %s1019 = smul.u32 32, %s16
      $region44: #{pyramid_features_forward.6} parent=39 // pred_fallthru
        _
    $region40: #{pyramid_features_forward.6} parent=5 // pred_fallthru
      _
    %p1020 = scmp.le.s32.totalorder 2, %s11
    // Predicated region
    $region45: #{pyramid_features_forward.6} parent=5 // pred_check
      %p1021 = pneg %p1020
    $region46: #{pyramid_features_forward.6} parent=5 // pred_check_branch
      %1023 = sbr.rel (%p1021) target = $region48
    $region47: #{pyramid_features_forward.6} parent=5 // pred_region
      %s1024 = ssub.s32 %s11, 2
      // Predicated region
      $region49: #{pyramid_features_forward.6} parent=47 // pred_check
        %p1025 = pneg %p155
      $region50: #{pyramid_features_forward.6} parent=47 // pred_check_branch
        %1027 = sbr.rel (%p1025) target = $region52
      $region51: #{pyramid_features_forward.6} parent=47 // pred_region
        %s1028 = smul.u32 32, %s17
        %p1029 = scmp.lt.s32.totalorder %s1028, 63
        %s1030 = scalar_select %p1029, %s1028, 63
        %s1031 = smul.addr %s1030, 8
        %s1032 = scalar_lea.vmem %s5, %s1031
      $region52: #{pyramid_features_forward.6} parent=47 // pred_fallthru
        _
    $region48: #{pyramid_features_forward.6} parent=5 // pred_fallthru
      _
  $region6: #{pyramid_features_forward.6} parent=0 // loop_footer
    %s15 = sadd.s32 1, %s11
  $region7: #{pyramid_features_forward.6} parent=0 // loop_footer_branch
    %10 = sbr.rel target = $region3
  $region8: #{pyramid_features_forward.6} parent=0 // loop_exit
    _

// kernel: pyramid_features_forward.9
$region0: #{pyramid_features_forward.9}
  #allocation0 [shape = 'u32[]', space=smem, size = 0x4, offset = 0x4, fixed_abs, tag = 'smem constant byte address 0x4 - core index']
  #allocation1 [shape = 'u32[144,128]{1,0:T(1,128)}', space=vmem, size = 0x12000, scoped, tag = 'internal scratch']
  #allocation2 [shape = 'f32[8,128]{1,0:T(8,128)}', space=vmem, size = 0x1000, scoped, tag = 'scratch operand']
  %s0 = inlined_call_operand.vmem [shape: bf16[8,2048], index: 0, kind: input, shape index: {}]
  %s1 = inlined_call_operand.vmem [shape: bf16[2048,128], index: 1, kind: input, shape index: {}]
  %s2 = inlined_call_operand.vmem [shape: f32[1,128], index: 2, kind: input, shape index: {}]
  %s3 = inlined_call_operand.hbm [shape: f32[8,128], index: 3, kind: output, shape index: {}]
  %s4 = sld [smem:[#allocation0]]
  $region53: #{pyramid_features_forward.9} parent=0
    _
  %s6 = ssub.s32 1, %s4
  %s7 = scalar_select 0, %s6, %s4
  $region1: #{pyramid_features_forward.9} parent=0
    #allocation3 [shape = 'u8[4096]{0}', space=vmem, size = 0x1000, scoped, tag = 'output window, operand 0, single buffered']
    #allocation4 [shape = 's32[2]{0}', space=sflag, size = 0x8, scoped, tag = 'scoped memory for pyramid_features_forward.9']
    %8 = vsyncpa [#allocation4], 0
    loop: start=0, step=1, limit=4
    $region2: #{pyramid_features_forward.9} parent=1 // loop_pre_header
      _
    $region3: #{pyramid_features_forward.9} parent=1 // loop_header
      %s10 = sphi 0, %s14
      %p11 = scmp.ge.s32.totalorder %s10, 4
      %s17 = sphi 0, %s29
      %s18 = sphi 0, %s25
      %s19 = sphi 0, %s17
      %s20 = sphi 0, %s18
      %s21 = sphi 0, %s19
      %s22 = sphi 0, %s20
      %s34 = sphi 0, %s36
      %s37 = sphi 0, %s34
      %s38 = sphi 0, %s37
      %s54 = sphi 0, %s38
      %s60 = sphi 0, %s62
      %s63 = sphi 0, %s60
      %s64 = sphi 0, %s63
      %s80 = sphi 0, %s64
      %s84 = sphi 0, %s84
      %s86 = sphi 0, %s84
      %s87 = sphi 0, %s86
      %s101 = sphi 0, %s87
      %s107 = sphi 0, %s109
      %s110 = sphi 0, %s107
      %s111 = sphi 0, %s110
      %s127 = sphi 0, %s111
    $region4: #{pyramid_features_forward.9} parent=1 // loop_header_branch
      %13 = sbr.rel (%p11) target = $region8
    $region5: #{pyramid_features_forward.9} parent=1 // loop_body
      %s15 = ssub.s32 %s10, 1
      %s16 = ssub.s32 %s10, 2
      %s23 = sadd.s32 1, %s18
      %p24 = scmp.ge.s32.totalorder %s23, 2
      %s25 = scalar_select %p24, 0, %s23
      %s26 = sadd.s32 1, %s17
      %s27 = scalar_select %p24, %s26, %s17
      %p28 = scmp.ge.s32.totalorder %s27, 1
      %s29 = scalar_select %p28, 0, %s27
      %s30 = ssub.s32 %s17, %s29
      %s31 = ssub.s32 %s18, %s25
      %s32 = sor.u32 %s30, %s31
      %p33 = scmp.eq.s32.totalorder %s32, 0
      %s35 = sadd.s32 %s34, 1
      %s36 = scalar_select %p33, %s34, %s35
      %p39 = pneg %p33
      %p40 = scmp.eq.s32.totalorder %s10, 1
      %p41 = por %p39, %p40
      %p42 = scmp.ne.s32.totalorder %s34, %s37
      %p43 = scmp.eq.s32.totalorder %s10, 0
      %p44 = por %p42, %p43
      %p45 = scmp.ne.s32.totalorder %s34, %s37
      %p46 = scmp.eq.s32.totalorder %s15, 1
      %p47 = por %p45, %p46
      %p48 = scmp.ne.s32.totalorder %s37, %s38
      %p49 = scmp.eq.s32.totalorder %s15, 0
      %p50 = por %p48, %p49
      %p51 = scmp.ne.s32.totalorder %s37, %s38
      %p52 = scmp.eq.s32.totalorder %s16, 1
      %p53 = por %p51, %p52
      %p55 = scmp.ne.s32.totalorder %s38, %s54
      %p56 = scmp.eq.s32.totalorder %s16, 0
      %p57 = por %p55, %p56
      %s58 = ssub.s32 %s18, %s25
      %p59 = scmp.eq.s32.totalorder %s58, 0
      %s61 = sadd.s32 %s60, 1
      %s62 = scalar_select %p59, %s60, %s61
      %p65 = pneg %p59
      %p66 = scmp.eq.s32.totalorder %s10, 1
      %p67 = por %p65, %p66
      %p68 = scmp.ne.s32.totalorder %s60, %s63
      %p69 = scmp.eq.s32.totalorder %s10, 0
      %p70 = por %p68, %p69
      %p71 = scmp.ne.s32.totalorder %s60, %s63
      %p72 = scmp.eq.s32.totalorder %s15, 1
      %p73 = por %p71, %p72
      %p74 = scmp.ne.s32.totalorder %s63, %s64
      %p75 = scmp.eq.s32.totalorder %s15, 0
      %p76 = por %p74, %p75
      %p77 = scmp.ne.s32.totalorder %s63, %s64
      %p78 = scmp.eq.s32.totalorder %s16, 1
      %p79 = por %p77, %p78
      %p81 = scmp.ne.s32.totalorder %s64, %s80
      %p82 = scmp.eq.s32.totalorder %s16, 0
      %p83 = por %p81, %p82
      %s85 = sadd.s32 %s84, 1
      %p88 = scmp.eq.s32.totalorder %s10, 1
      %p89 = scmp.ne.s32.totalorder %s84, %s86
      %p90 = scmp.eq.s32.totalorder %s10, 0
      %p91 = por %p89, %p90
      %p92 = scmp.ne.s32.totalorder %s84, %s86
      %p93 = scmp.eq.s32.totalorder %s15, 1
      %p94 = por %p92, %p93
      %p95 = scmp.ne.s32.totalorder %s86, %s87
      %p96 = scmp.eq.s32.totalorder %s15, 0
      %p97 = por %p95, %p96
      %p98 = scmp.ne.s32.totalorder %s86, %s87
      %p99 = scmp.eq.s32.totalorder %s16, 1
      %p100 = por %p98, %p99
      %p102 = scmp.ne.s32.totalorder %s87, %s101
      %p103 = scmp.eq.s32.totalorder %s16, 0
      %p104 = por %p102, %p103
      %s105 = ssub.s32 %s17, %s29
      %p106 = scmp.eq.s32.totalorder %s105, 0
      %s108 = sadd.s32 %s107, 1
      %s109 = scalar_select %p106, %s107, %s108
      %p112 = pneg %p106
      %p113 = scmp.eq.s32.totalorder %s10, 1
      %p114 = por %p112, %p113
      %p115 = scmp.ne.s32.totalorder %s107, %s110
      %p116 = scmp.eq.s32.totalorder %s10, 0
      %p117 = por %p115, %p116
      %p118 = scmp.ne.s32.totalorder %s107, %s110
      %p119 = scmp.eq.s32.totalorder %s15, 1
      %p120 = por %p118, %p119
      %p121 = scmp.ne.s32.totalorder %s110, %s111
      %p122 = scmp.eq.s32.totalorder %s15, 0
      %p123 = por %p121, %p122
      %p124 = scmp.ne.s32.totalorder %s110, %s111
      %p125 = scmp.eq.s32.totalorder %s16, 1
      %p126 = por %p124, %p125
      %p128 = scmp.ne.s32.totalorder %s111, %s127
      %p129 = scmp.eq.s32.totalorder %s16, 0
      %p130 = por %p128, %p129
      %p131 = scmp.le.s32.totalorder 1, %s10
      %p132 = scmp.lt.s32.totalorder %s10, 3
      %p133 = pnand %p131, %p132
      %p134 = pneg %p133
      // Predicated region
      $region9: #{pyramid_features_forward.9} parent=5 // pred_check
        _
      $region10: #{pyramid_features_forward.9} parent=5 // pred_check_branch
        %136 = sbr.rel (%p133) target = $region12
      $region11: #{pyramid_features_forward.9} parent=5 // pred_region
        %s137 = ssub.s32 %s10, 1
        // Predicated region
        $region13: #{pyramid_features_forward.9} parent=11 // pred_check
          %p138 = pneg %p97
        $region14: #{pyramid_features_forward.9} parent=11 // pred_check_branch
          %140 = sbr.rel (%p138) target = $region16
        $region15: #{pyramid_features_forward.9} parent=11 // pred_region
          _
        $region16: #{pyramid_features_forward.9} parent=11 // pred_fallthru
          _
      $region12: #{pyramid_features_forward.9} parent=5 // pred_fallthru
        _
      %p141 = scmp.lt.s32.totalorder %s10, 2
      // Predicated region
      $region17: #{pyramid_features_forward.9} parent=5 // pred_check
        %p142 = pneg %p141
      $region18: #{pyramid_features_forward.9} parent=5 // pred_check_branch
        %144 = sbr.rel (%p142) target = $region20
      $region19: #{pyramid_features_forward.9} parent=5 // pred_region
        // Predicated region
        $region21: #{pyramid_features_forward.9} parent=19 // pred_check
          %p145 = pneg %p44
        $region22: #{pyramid_features_forward.9} parent=19 // pred_check_branch
          %147 = sbr.rel (%p145) target = $region24
        $region23: #{pyramid_features_forward.9} parent=19 // pred_region
          %s148 = smul.u32 8, %s18
          %p149 = scmp.lt.s32.totalorder %s17, 0
          %s150 = scalar_select %p149, %s17, 0
          %p151 = scmp.lt.s32.totalorder %s148, 15
          %s152 = scalar_select %p151, %s148, 15
          %s153 = smul.addr %s150, 16
          %s154 = sadd.s32 %s152, %s153
          %s155 = smul.addr %s154, 4
          %s156 = scalar_lea.vmem %s0, %s155
          %s157 = smul.u32 8, %s18
        $region24: #{pyramid_features_forward.9} parent=19 // pred_fallthru
          _
        // Predicated region
        $region25: #{pyramid_features_forward.9} parent=19 // pred_check
          %p158 = pneg %p70
        $region26: #{pyramid_features_forward.9} parent=19 // pred_check_branch
          %160 = sbr.rel (%p158) target = $region28
        $region27: #{pyramid_features_forward.9} parent=19 // pred_region
          %s161 = smul.u32 128, %s18
          %p162 = scmp.lt.s32.totalorder %s161, 255
          %s163 = scalar_select %p162, %s161, 255
          %s164 = smul.addr %s163, 4
          %s165 = scalar_lea.vmem %s1, %s164
          %s166 = smul.u32 128, %s18
        $region28: #{pyramid_features_forward.9} parent=19 // pred_fallthru
          _
      $region20: #{pyramid_features_forward.9} parent=5 // pred_fallthru
        _
      %p167 = scmp.le.s32.totalorder 1, %s10
      %p168 = scmp.lt.s32.totalorder %s10, 3
      %p169 = pnand %p167, %p168
      %p170 = pneg %p169
      // Predicated region
      $region29: #{pyramid_features_forward.9} parent=5 // pred_check
        _
      $region30: #{pyramid_features_forward.9} parent=5 // pred_check_branch
        %172 = sbr.rel (%p169) target = $region32
      $region31: #{pyramid_features_forward.9} parent=5 // pred_region
        %s173 = ssub.s32 %s10, 1
        %s174 = smul.u32 8, %s20
        %p175 = scmp.lt.s32.totalorder %s19, 0
        %s176 = scalar_select %p175, %s19, 0
        %p177 = scmp.lt.s32.totalorder %s174, 15
        %s178 = scalar_select %p177, %s174, 15
        %s179 = smul.addr %s176, 16
        %s180 = sadd.s32 %s178, %s179
        %s181 = smul.addr %s180, 4
        %s182 = scalar_lea.vmem %s0, %s181
        %p183 = pneg %p50
        %p184 = pneg %p47
        %s185 = smul.u32 128, %s20
        %p186 = scmp.lt.s32.totalorder %s185, 255
        %s187 = scalar_select %p186, %s185, 255
        %s188 = smul.addr %s187, 4
        %s189 = scalar_lea.vmem %s1, %s188
        %p190 = pneg %p76
        %p191 = pneg %p73
        %p192 = pneg %p97
        %p193 = pneg %p94
        %p194 = pneg %p123
        %p195 = pneg %p120
        %s196 = smul.u32 8, %s20
        %p197 = scmp.lt.s32.totalorder %s19, 0
        %s198 = scalar_select %p197, %s19, 0
        %p199 = scmp.lt.s32.totalorder %s196, 15
        %s200 = scalar_select %p199, %s196, 15
        %s201 = smul.addr %s198, 16
        %s202 = sadd.s32 %s200, %s201
        %s203 = smul.addr %s202, 4
        %s204 = scalar_lea.vmem %s0, %s203
        %s205 = smul.u32 8, %s20
        %s206 = smul.u32 128, %s20
        %p207 = scmp.lt.s32.totalorder %s206, 255
        %s208 = scalar_select %p207, %s206, 255
        %s209 = smul.addr %s208, 4
        %s210 = scalar_lea.vmem %s1, %s209
        %s211 = smul.u32 128, %s20
        %p213 = scmp.eq.s32.totalorder %s20, 0
        // Predicated region
        $region33: #{pyramid_features_forward.9} parent=31 // pred_check
          %p214 = pneg %p213
        $region34: #{pyramid_features_forward.9} parent=31 // pred_check_branch
          %216 = sbr.rel (%p214) target = $region36
        $region35: #{pyramid_features_forward.9} parent=31 // pred_region
          %217 = vst [vmem:[#allocation2] sm:$0xff] 0.0
        $region36: #{pyramid_features_forward.9} parent=31 // pred_fallthru
          _
        %v218 = vld [vmem:[#allocation2] sm:$0xff]
        %v219 = vld [vmem:[%s204] sm:$0xff]
        %v220 = vld [vmem:[%s204 + $0x8] sm:$0xff]
        %v221 = vld [vmem:[%s204 + $0x10] sm:$0xff]
        %v222 = vld [vmem:[%s204 + $0x18] sm:$0xff]
        %v223 = vld [vmem:[%s210] sm:$0xf]
        %v224 = vld [vmem:[%s210 + $0x4] sm:$0xf]
        %v225 = vld [vmem:[%s210 + $0x8] sm:$0xf]
        %v226 = vld [vmem:[%s210 + $0xc] sm:$0xf]
        %v227 = vld [vmem:[%s210 + $0x10] sm:$0xf]
        %v228 = vld [vmem:[%s210 + $0x14] sm:$0xf]
        %v229 = vld [vmem:[%s210 + $0x18] sm:$0xf]
        %v230 = vld [vmem:[%s210 + $0x1c] sm:$0xf]
        %v231 = vld [vmem:[%s210 + $0x20] sm:$0xf]
        %v232 = vld [vmem:[%s210 + $0x24] sm:$0xf]
        %v233 = vld [vmem:[%s210 + $0x28] sm:$0xf]
        %v234 = vld [vmem:[%s210 + $0x2c] sm:$0xf]
        %v235 = vld [vmem:[%s210 + $0x30] sm:$0xf]
        %v236 = vld [vmem:[%s210 + $0x34] sm:$0xf]
        %v237 = vld [vmem:[%s210 + $0x38] sm:$0xf]
        %v238 = vld [vmem:[%s210 + $0x3c] sm:$0xf]
        %v239 = vld [vmem:[%s210 + $0x40] sm:$0xf]
        %v240 = vld [vmem:[%s210 + $0x44] sm:$0xf]
        %v241 = vld [vmem:[%s210 + $0x48] sm:$0xf]
        %v242 = vld [vmem:[%s210 + $0x4c] sm:$0xf]
        %v243 = vld [vmem:[%s210 + $0x50] sm:$0xf]
        %v244 = vld [vmem:[%s210 + $0x54] sm:$0xf]
        %v245 = vld [vmem:[%s210 + $0x58] sm:$0xf]
        %v246 = vld [vmem:[%s210 + $0x5c] sm:$0xf]
        %v247 = vld [vmem:[%s210 + $0x60] sm:$0xf]
        %v248 = vld [vmem:[%s210 + $0x64] sm:$0xf]
        %v249 = vld [vmem:[%s210 + $0x68] sm:$0xf]
        %v250 = vld [vmem:[%s210 + $0x6c] sm:$0xf]
        %v251 = vld [vmem:[%s210 + $0x70] sm:$0xf]
        %v252 = vld [vmem:[%s210 + $0x74] sm:$0xf]
        %v253 = vld [vmem:[%s210 + $0x78] sm:$0xf]
        %v254 = vld [vmem:[%s210 + $0x7c] sm:$0xf]
        %v255 = vld [vmem:[%s210 + $0x80] sm:$0xf]
        %v256 = vld [vmem:[%s210 + $0x84] sm:$0xf]
        %v257 = vld [vmem:[%s210 + $0x88] sm:$0xf]
        %v258 = vld [vmem:[%s210 + $0x8c] sm:$0xf]
        %v259 = vld [vmem:[%s210 + $0x90] sm:$0xf]
        %v260 = vld [vmem:[%s210 + $0x94] sm:$0xf]
        %v261 = vld [vmem:[%s210 + $0x98] sm:$0xf]
        %v262 = vld [vmem:[%s210 + $0x9c] sm:$0xf]
        %v263 = vld [vmem:[%s210 + $0xa0] sm:$0xf]
        %v264 = vld [vmem:[%s210 + $0xa4] sm:$0xf]
        %v265 = vld [vmem:[%s210 + $0xa8] sm:$0xf]
        %v266 = vld [vmem:[%s210 + $0xac] sm:$0xf]
        %v267 = vld [vmem:[%s210 + $0xb0] sm:$0xf]
        %v268 = vld [vmem:[%s210 + $0xb4] sm:$0xf]
        %v269 = vld [vmem:[%s210 + $0xb8] sm:$0xf]
        %v270 = vld [vmem:[%s210 + $0xbc] sm:$0xf]
        %v271 = vld [vmem:[%s210 + $0xc0] sm:$0xf]
        %v272 = vld [vmem:[%s210 + $0xc4] sm:$0xf]
        %v273 = vld [vmem:[%s210 + $0xc8] sm:$0xf]
        %v274 = vld [vmem:[%s210 + $0xcc] sm:$0xf]
        %v275 = vld [vmem:[%s210 + $0xd0] sm:$0xf]
        %v276 = vld [vmem:[%s210 + $0xd4] sm:$0xf]
        %v277 = vld [vmem:[%s210 + $0xd8] sm:$0xf]
        %v278 = vld [vmem:[%s210 + $0xdc] sm:$0xf]
        %v279 = vld [vmem:[%s210 + $0xe0] sm:$0xf]
        %v280 = vld [vmem:[%s210 + $0xe4] sm:$0xf]
        %v281 = vld [vmem:[%s210 + $0xe8] sm:$0xf]
        %v282 = vld [vmem:[%s210 + $0xec] sm:$0xf]
        %v283 = vld [vmem:[%s210 + $0xf0] sm:$0xf]
        %v284 = vld [vmem:[%s210 + $0xf4] sm:$0xf]
        %v285 = vld [vmem:[%s210 + $0xf8] sm:$0xf]
        %v286 = vld [vmem:[%s210 + $0xfc] sm:$0xf]
        %v287 = vld [vmem:[%s210 + $0x100] sm:$0xf]
        %v288 = vld [vmem:[%s210 + $0x104] sm:$0xf]
        %v289 = vld [vmem:[%s210 + $0x108] sm:$0xf]
        %v290 = vld [vmem:[%s210 + $0x10c] sm:$0xf]
        %v291 = vld [vmem:[%s210 + $0x110] sm:$0xf]
        %v292 = vld [vmem:[%s210 + $0x114] sm:$0xf]
        %v293 = vld [vmem:[%s210 + $0x118] sm:$0xf]
        %v294 = vld [vmem:[%s210 + $0x11c] sm:$0xf]
        %v295 = vld [vmem:[%s210 + $0x120] sm:$0xf]
        %v296 = vld [vmem:[%s210 + $0x124] sm:$0xf]
        %v297 = vld [vmem:[%s210 + $0x128] sm:$0xf]
        %v298 = vld [vmem:[%s210 + $0x12c] sm:$0xf]
        %v299 = vld [vmem:[%s210 + $0x130] sm:$0xf]
        %v300 = vld [vmem:[%s210 + $0x134] sm:$0xf]
        %v301 = vld [vmem:[%s210 + $0x138] sm:$0xf]
        %v302 = vld [vmem:[%s210 + $0x13c] sm:$0xf]
        %v303 = vld [vmem:[%s210 + $0x140] sm:$0xf]
        %v304 = vld [vmem:[%s210 + $0x144] sm:$0xf]
        %v305 = vld [vmem:[%s210 + $0x148] sm:$0xf]
        %v306 = vld [vmem:[%s210 + $0x14c] sm:$0xf]
        %v307 = vld [vmem:[%s210 + $0x150] sm:$0xf]
        %v308 = vld [vmem:[%s210 + $0x154] sm:$0xf]
        %v309 = vld [vmem:[%s210 + $0x158] sm:$0xf]
        %v310 = vld [vmem:[%s210 + $0x15c] sm:$0xf]
        %v311 = vld [vmem:[%s210 + $0x160] sm:$0xf]
        %v312 = vld [vmem:[%s210 + $0x164] sm:$0xf]
        %v313 = vld [vmem:[%s210 + $0x168] sm:$0xf]
        %v314 = vld [vmem:[%s210 + $0x16c] sm:$0xf]
        %v315 = vld [vmem:[%s210 + $0x170] sm:$0xf]
        %v316 = vld [vmem:[%s210 + $0x174] sm:$0xf]
        %v317 = vld [vmem:[%s210 + $0x178] sm:$0xf]
        %v318 = vld [vmem:[%s210 + $0x17c] sm:$0xf]
        %v319 = vld [vmem:[%s210 + $0x180] sm:$0xf]
        %v320 = vld [vmem:[%s210 + $0x184] sm:$0xf]
        %v321 = vld [vmem:[%s210 + $0x188] sm:$0xf]
        %v322 = vld [vmem:[%s210 + $0x18c] sm:$0xf]
        %v323 = vld [vmem:[%s210 + $0x190] sm:$0xf]
        %v324 = vld [vmem:[%s210 + $0x194] sm:$0xf]
        %v325 = vld [vmem:[%s210 + $0x198] sm:$0xf]
        %v326 = vld [vmem:[%s210 + $0x19c] sm:$0xf]
        %v327 = vld [vmem:[%s210 + $0x1a0] sm:$0xf]
        %v328 = vld [vmem:[%s210 + $0x1a4] sm:$0xf]
        %v329 = vld [vmem:[%s210 + $0x1a8] sm:$0xf]
        %v330 = vld [vmem:[%s210 + $0x1ac] sm:$0xf]
        %v331 = vld [vmem:[%s210 + $0x1b0] sm:$0xf]
        %v332 = vld [vmem:[%s210 + $0x1b4] sm:$0xf]
        %v333 = vld [vmem:[%s210 + $0x1b8] sm:$0xf]
        %v334 = vld [vmem:[%s210 + $0x1bc] sm:$0xf]
        %v335 = vld [vmem:[%s210 + $0x1c0] sm:$0xf]
        %v336 = vld [vmem:[%s210 + $0x1c4] sm:$0xf]
        %v337 = vld [vmem:[%s210 + $0x1c8] sm:$0xf]
        %v338 = vld [vmem:[%s210 + $0x1cc] sm:$0xf]
        %v339 = vld [vmem:[%s210 + $0x1d0] sm:$0xf]
        %v340 = vld [vmem:[%s210 + $0x1d4] sm:$0xf]
        %v341 = vld [vmem:[%s210 + $0x1d8] sm:$0xf]
        %v342 = vld [vmem:[%s210 + $0x1dc] sm:$0xf]
        %v343 = vld [vmem:[%s210 + $0x1e0] sm:$0xf]
        %v344 = vld [vmem:[%s210 + $0x1e4] sm:$0xf]
        %v345 = vld [vmem:[%s210 + $0x1e8] sm:$0xf]
        %v346 = vld [vmem:[%s210 + $0x1ec] sm:$0xf]
        %v347 = vld [vmem:[%s210 + $0x1f0] sm:$0xf]
        %v348 = vld [vmem:[%s210 + $0x1f4] sm:$0xf]
        %v349 = vld [vmem:[%s210 + $0x1f8] sm:$0xf]
        %v350 = vld [vmem:[%s210 + $0x1fc] sm:$0xf]
        %v355 = vunpack.c.l.b16 %v219
        %v356 = vunpack.c.h.b16 %v219
        %v357 = vunpack.c.l.b16 %v220
        %v358 = vunpack.c.h.b16 %v220
        %v359 = vunpack.c.l.b16 %v221
        %v360 = vunpack.c.h.b16 %v221
        %v361 = vunpack.c.l.b16 %v222
        %v362 = vunpack.c.h.b16 %v222
        %v363 = vpack.c.b16 %v355, %v355
        %v364 = vpack.c.b16 %v356, %v356
        %v365 = vpack.c.b16 %v357, %v357
        %v366 = vpack.c.b16 %v358, %v358
        %v367 = vpack.c.b16 %v359, %v359
        %v368 = vpack.c.b16 %v360, %v360
        %v369 = vpack.c.b16 %v361, %v361
        %v370 = vpack.c.b16 %v362, %v362
        %v507 = vunpack.c.l.b16 %v223
        %v508 = vunpack.c.l.b16 %v224
        %v509 = vunpack.c.l.b16 %v225
        %v510 = vunpack.c.l.b16 %v226
        %v511 = vunpack.c.l.b16 %v227
        %v512 = vunpack.c.l.b16 %v228
        %v513 = vunpack.c.l.b16 %v229
        %v514 = vunpack.c.l.b16 %v230
        %v515 = vunpack.c.l.b16 %v231
        %v516 = vunpack.c.l.b16 %v232
        %v517 = vunpack.c.l.b16 %v233
        %v518 = vunpack.c.l.b16 %v234
        %v519 = vunpack.c.l.b16 %v235
        %v520 = vunpack.c.l.b16 %v236
        %v521 = vunpack.c.l.b16 %v237
        %v522 = vunpack.c.l.b16 %v238
        %v523 = vunpack.c.l.b16 %v239
        %v524 = vunpack.c.l.b16 %v240
        %v525 = vunpack.c.l.b16 %v241
        %v526 = vunpack.c.l.b16 %v242
        %v527 = vunpack.c.l.b16 %v243
        %v528 = vunpack.c.l.b16 %v244
        %v529 = vunpack.c.l.b16 %v245
        %v530 = vunpack.c.l.b16 %v246
        %v531 = vunpack.c.l.b16 %v247
        %v532 = vunpack.c.l.b16 %v248
        %v533 = vunpack.c.l.b16 %v249
        %v534 = vunpack.c.l.b16 %v250
        %v535 = vunpack.c.l.b16 %v251
        %v536 = vunpack.c.l.b16 %v252
        %v537 = vunpack.c.l.b16 %v253
        %v538 = vunpack.c.l.b16 %v254
        %v539 = vunpack.c.l.b16 %v255
        %v540 = vunpack.c.l.b16 %v256
        %v541 = vunpack.c.l.b16 %v257
        %v542 = vunpack.c.l.b16 %v258
        %v543 = vunpack.c.l.b16 %v259
        %v544 = vunpack.c.l.b16 %v260
        %v545 = vunpack.c.l.b16 %v261
        %v546 = vunpack.c.l.b16 %v262
        %v547 = vunpack.c.l.b16 %v263
        %v548 = vunpack.c.l.b16 %v264
        %v549 = vunpack.c.l.b16 %v265
        %v550 = vunpack.c.l.b16 %v266
        %v551 = vunpack.c.l.b16 %v267
        %v552 = vunpack.c.l.b16 %v268
        %v553 = vunpack.c.l.b16 %v269
        %v554 = vunpack.c.l.b16 %v270
        %v555 = vunpack.c.l.b16 %v271
        %v556 = vunpack.c.l.b16 %v272
        %v557 = vunpack.c.l.b16 %v273
        %v558 = vunpack.c.l.b16 %v274
        %v559 = vunpack.c.l.b16 %v275
        %v560 = vunpack.c.l.b16 %v276
        %v561 = vunpack.c.l.b16 %v277
        %v562 = vunpack.c.l.b16 %v278
        %v563 = vunpack.c.l.b16 %v279
        %v564 = vunpack.c.l.b16 %v280
        %v565 = vunpack.c.l.b16 %v281
        %v566 = vunpack.c.l.b16 %v282
        %v567 = vunpack.c.l.b16 %v283
        %v568 = vunpack.c.l.b16 %v284
        %v569 = vunpack.c.l.b16 %v285
        %v570 = vunpack.c.l.b16 %v286
        %v571 = vunpack.c.l.b16 %v287
        %v572 = vunpack.c.l.b16 %v288
        %v573 = vunpack.c.l.b16 %v289
        %v574 = vunpack.c.l.b16 %v290
        %v575 = vunpack.c.l.b16 %v291
        %v576 = vunpack.c.l.b16 %v292
        %v577 = vunpack.c.l.b16 %v293
        %v578 = vunpack.c.l.b16 %v294
        %v579 = vunpack.c.l.b16 %v295
        %v580 = vunpack.c.l.b16 %v296
        %v581 = vunpack.c.l.b16 %v297
        %v582 = vunpack.c.l.b16 %v298
        %v583 = vunpack.c.l.b16 %v299
        %v584 = vunpack.c.l.b16 %v300
        %v585 = vunpack.c.l.b16 %v301
        %v586 = vunpack.c.l.b16 %v302
        %v587 = vunpack.c.l.b16 %v303
        %v588 = vunpack.c.l.b16 %v304
        %v589 = vunpack.c.l.b16 %v305
        %v590 = vunpack.c.l.b16 %v306
        %v591 = vunpack.c.l.b16 %v307
        %v592 = vunpack.c.l.b16 %v308
        %v593 = vunpack.c.l.b16 %v309
        %v594 = vunpack.c.l.b16 %v310
        %v595 = vunpack.c.l.b16 %v311
        %v596 = vunpack.c.l.b16 %v312
        %v597 = vunpack.c.l.b16 %v313
        %v598 = vunpack.c.l.b16 %v314
        %v599 = vunpack.c.l.b16 %v315
        %v600 = vunpack.c.l.b16 %v316
        %v601 = vunpack.c.l.b16 %v317
        %v602 = vunpack.c.l.b16 %v318
        %v603 = vunpack.c.l.b16 %v319
        %v604 = vunpack.c.l.b16 %v320
        %v605 = vunpack.c.l.b16 %v321
        %v606 = vunpack.c.l.b16 %v322
        %v607 = vunpack.c.l.b16 %v323
        %v608 = vunpack.c.l.b16 %v324
        %v609 = vunpack.c.l.b16 %v325
        %v610 = vunpack.c.l.b16 %v326
        %v611 = vunpack.c.l.b16 %v327
        %v612 = vunpack.c.l.b16 %v328
        %v613 = vunpack.c.l.b16 %v329
        %v614 = vunpack.c.l.b16 %v330
        %v615 = vunpack.c.l.b16 %v331
        %v616 = vunpack.c.l.b16 %v332
        %v617 = vunpack.c.l.b16 %v333
        %v618 = vunpack.c.l.b16 %v334
        %v619 = vunpack.c.l.b16 %v335
        %v620 = vunpack.c.l.b16 %v336
        %v621 = vunpack.c.l.b16 %v337
        %v622 = vunpack.c.l.b16 %v338
        %v623 = vunpack.c.l.b16 %v339
        %v624 = vunpack.c.l.b16 %v340
        %v625 = vunpack.c.l.b16 %v341
        %v626 = vunpack.c.l.b16 %v342
        %v627 = vunpack.c.l.b16 %v343
        %v628 = vunpack.c.l.b16 %v344
        %v629 = vunpack.c.l.b16 %v345
        %v630 = vunpack.c.l.b16 %v346
        %v631 = vunpack.c.l.b16 %v347
        %v632 = vunpack.c.l.b16 %v348
        %v633 = vunpack.c.l.b16 %v349
        %v634 = vunpack.c.l.b16 %v350
        %v635 = vpack.c.b16 %v508, %v507
        %v636 = vpack.c.b16 %v510, %v509
        %v637 = vpack.c.b16 %v512, %v511
        %v638 = vpack.c.b16 %v514, %v513
        %v639 = vpack.c.b16 %v516, %v515
        %v640 = vpack.c.b16 %v518, %v517
        %v641 = vpack.c.b16 %v520, %v519
        %v642 = vpack.c.b16 %v522, %v521
        %v643 = vpack.c.b16 %v524, %v523
        %v644 = vpack.c.b16 %v526, %v525
        %v645 = vpack.c.b16 %v528, %v527
        %v646 = vpack.c.b16 %v530, %v529
        %v647 = vpack.c.b16 %v532, %v531
        %v648 = vpack.c.b16 %v534, %v533
        %v649 = vpack.c.b16 %v536, %v535
        %v650 = vpack.c.b16 %v538, %v537
        %v651 = vpack.c.b16 %v540, %v539
        %v652 = vpack.c.b16 %v542, %v541
        %v653 = vpack.c.b16 %v544, %v543
        %v654 = vpack.c.b16 %v546, %v545
        %v655 = vpack.c.b16 %v548, %v547
        %v656 = vpack.c.b16 %v550, %v549
        %v657 = vpack.c.b16 %v552, %v551
        %v658 = vpack.c.b16 %v554, %v553
        %v659 = vpack.c.b16 %v556, %v555
        %v660 = vpack.c.b16 %v558, %v557
        %v661 = vpack.c.b16 %v560, %v559
        %v662 = vpack.c.b16 %v562, %v561
        %v663 = vpack.c.b16 %v564, %v563
        %v664 = vpack.c.b16 %v566, %v565
        %v665 = vpack.c.b16 %v568, %v567
        %v666 = vpack.c.b16 %v570, %v569
        %v667 = vpack.c.b16 %v572, %v571
        %v668 = vpack.c.b16 %v574, %v573
        %v669 = vpack.c.b16 %v576, %v575
        %v670 = vpack.c.b16 %v578, %v577
        %v671 = vpack.c.b16 %v580, %v579
        %v672 = vpack.c.b16 %v582, %v581
        %v673 = vpack.c.b16 %v584, %v583
        %v674 = vpack.c.b16 %v586, %v585
        %v675 = vpack.c.b16 %v588, %v587
        %v676 = vpack.c.b16 %v590, %v589
        %v677 = vpack.c.b16 %v592, %v591
        %v678 = vpack.c.b16 %v594, %v593
        %v679 = vpack.c.b16 %v596, %v595
        %v680 = vpack.c.b16 %v598, %v597
        %v681 = vpack.c.b16 %v600, %v599
        %v682 = vpack.c.b16 %v602, %v601
        %v683 = vpack.c.b16 %v604, %v603
        %v684 = vpack.c.b16 %v606, %v605
        %v685 = vpack.c.b16 %v608, %v607
        %v686 = vpack.c.b16 %v610, %v609
        %v687 = vpack.c.b16 %v612, %v611
        %v688 = vpack.c.b16 %v614, %v613
        %v689 = vpack.c.b16 %v616, %v615
        %v690 = vpack.c.b16 %v618, %v617
        %v691 = vpack.c.b16 %v620, %v619
        %v692 = vpack.c.b16 %v622, %v621
        %v693 = vpack.c.b16 %v624, %v623
        %v694 = vpack.c.b16 %v626, %v625
        %v695 = vpack.c.b16 %v628, %v627
        %v696 = vpack.c.b16 %v630, %v629
        %v697 = vpack.c.b16 %v632, %v631
        %v698 = vpack.c.b16 %v634, %v633
        %763 = vmatprep.subr.bf16.mxu0 0
        %764 = vmatpush1.bf16.msra.mxu0 %v635
        %765 = vmatprep.subr.bf16.mxu0 0
        %766 = vmatpush1.bf16.msra.mxu0 %v636
        %767 = vmatprep.subr.bf16.mxu0 0
        %768 = vmatpush1.bf16.msra.mxu0 %v637
        %769 = vmatprep.subr.bf16.mxu0 0
        %770 = vmatpush1.bf16.msra.mxu0 %v638
        %771 = vmatprep.subr.bf16.mxu0 0
        %772 = vmatpush1.bf16.msra.mxu0 %v639
        %773 = vmatprep.subr.bf16.mxu0 0
        %774 = vmatpush1.bf16.msra.mxu0 %v640
        %775 = vmatprep.subr.bf16.mxu0 0
        %776 = vmatpush1.bf16.msra.mxu0 %v641
        %777 = vmatprep.subr.bf16.mxu0 0
        %778 = vmatpush1.bf16.msra.mxu0 %v642
        %779 = vmatprep.subr.bf16.mxu0 0
        %780 = vmatpush1.bf16.msra.mxu0 %v643
        %781 = vmatprep.subr.bf16.mxu0 0
        %782 = vmatpush1.bf16.msra.mxu0 %v644
        %783 = vmatprep.subr.bf16.mxu0 0
        %784 = vmatpush1.bf16.msra.mxu0 %v645
        %785 = vmatprep.subr.bf16.mxu0 0
        %786 = vmatpush1.bf16.msra.mxu0 %v646
        %787 = vmatprep.subr.bf16.mxu0 0
        %788 = vmatpush1.bf16.msra.mxu0 %v647
        %789 = vmatprep.subr.bf16.mxu0 0
        %790 = vmatpush1.bf16.msra.mxu0 %v648
        %791 = vmatprep.subr.bf16.mxu0 0
        %792 = vmatpush1.bf16.msra.mxu0 %v649
        %793 = vmatprep.subr.bf16.mxu0 0
        %794 = vmatpush1.bf16.msra.mxu0 %v650
        %795 = vmatprep.mubr.bf16.mxu0 %v364
        %796 = vmatmul.mubr.bf16.gmra.mrb[0].mxu0 %v363
        %v797 = vpop.f32.mrb[0].mxu0
        %v798 = vadd.f32 0.0, %v797
        %v799 = vpop.f32.mrb[0].mxu0
        %v800 = vpop.f32.mrb[0].mxu0
        %v801 = vpop.f32.mrb[0].mxu0
        %802 = vdwg.mxu0
        %803 = vmatprep.subr.bf16.mxu0 0
        %804 = vmatpush1.bf16.msra.mxu0 %v651
        %805 = vmatprep.subr.bf16.mxu0 0
        %806 = vmatpush1.bf16.msra.mxu0 %v652
        %807 = vmatprep.subr.bf16.mxu0 0
        %808 = vmatpush1.bf16.msra.mxu0 %v653
        %809 = vmatprep.subr.bf16.mxu0 0
        %810 = vmatpush1.bf16.msra.mxu0 %v654
        %811 = vmatprep.subr.bf16.mxu0 0
        %812 = vmatpush1.bf16.msra.mxu0 %v655
        %813 = vmatprep.subr.bf16.mxu0 0
        %814 = vmatpush1.bf16.msra.mxu0 %v656
        %815 = vmatprep.subr.bf16.mxu0 0
        %816 = vmatpush1.bf16.msra.mxu0 %v657
        %817 = vmatprep.subr.bf16.mxu0 0
        %818 = vmatpush1.bf16.msra.mxu0 %v658
        %819 = vmatprep.subr.bf16.mxu0 0
        %820 = vmatpush1.bf16.msra.mxu0 %v659
        %821 = vmatprep.subr.bf16.mxu0 0
        %822 = vmatpush1.bf16.msra.mxu0 %v660
        %823 = vmatprep.subr.bf16.mxu0 0
        %824 = vmatpush1.bf16.msra.mxu0 %v661
        %825 = vmatprep.subr.bf16.mxu0 0
        %826 = vmatpush1.bf16.msra.mxu0 %v662
        %827 = vmatprep.subr.bf16.mxu0 0
        %828 = vmatpush1.bf16.msra.mxu0 %v663
        %829 = vmatprep.subr.bf16.mxu0 0
        %830 = vmatpush1.bf16.msra.mxu0 %v664
        %831 = vmatprep.subr.bf16.mxu0 0
        %832 = vmatpush1.bf16.msra.mxu0 %v665
        %833 = vmatprep.subr.bf16.mxu0 0
        %834 = vmatpush1.bf16.msra.mxu0 %v666
        %835 = vmatprep.mubr.bf16.mxu0 %v366
        %836 = vmatmul.mubr.bf16.gmra.mrb[0].mxu0 %v365
        %v837 = vpop.f32.mrb[0].mxu0
        %v838 = vadd.f32 %v798, %v837
        %v839 = vpop.f32.mrb[0].mxu0
        %v840 = vpop.f32.mrb[0].mxu0
        %v841 = vpop.f32.mrb[0].mxu0
        %842 = vdwg.mxu0
        %843 = vmatprep.subr.bf16.mxu0 0
        %844 = vmatpush1.bf16.msra.mxu0 %v667
        %845 = vmatprep.subr.bf16.mxu0 0
        %846 = vmatpush1.bf16.msra.mxu0 %v668
        %847 = vmatprep.subr.bf16.mxu0 0
        %848 = vmatpush1.bf16.msra.mxu0 %v669
        %849 = vmatprep.subr.bf16.mxu0 0
        %850 = vmatpush1.bf16.msra.mxu0 %v670
        %851 = vmatprep.subr.bf16.mxu0 0
        %852 = vmatpush1.bf16.msra.mxu0 %v671
        %853 = vmatprep.subr.bf16.mxu0 0
        %854 = vmatpush1.bf16.msra.mxu0 %v672
        %855 = vmatprep.subr.bf16.mxu0 0
        %856 = vmatpush1.bf16.msra.mxu0 %v673
        %857 = vmatprep.subr.bf16.mxu0 0
        %858 = vmatpush1.bf16.msra.mxu0 %v674
        %859 = vmatprep.subr.bf16.mxu0 0
        %860 = vmatpush1.bf16.msra.mxu0 %v675
        %861 = vmatprep.subr.bf16.mxu0 0
        %862 = vmatpush1.bf16.msra.mxu0 %v676
        %863 = vmatprep.subr.bf16.mxu0 0
        %864 = vmatpush1.bf16.msra.mxu0 %v677
        %865 = vmatprep.subr.bf16.mxu0 0
        %866 = vmatpush1.bf16.msra.mxu0 %v678
        %867 = vmatprep.subr.bf16.mxu0 0
        %868 = vmatpush1.bf16.msra.mxu0 %v679
        %869 = vmatprep.subr.bf16.mxu0 0
        %870 = vmatpush1.bf16.msra.mxu0 %v680
        %871 = vmatprep.subr.bf16.mxu0 0
        %872 = vmatpush1.bf16.msra.mxu0 %v681
        %873 = vmatprep.subr.bf16.mxu0 0
        %874 = vmatpush1.bf16.msra.mxu0 %v682
        %875 = vmatprep.mubr.bf16.mxu0 %v368
        %876 = vmatmul.mubr.bf16.gmra.mrb[0].mxu0 %v367
        %v877 = vpop.f32.mrb[0].mxu0
        %v878 = vadd.f32 %v838, %v877
        %v879 = vpop.f32.mrb[0].mxu0
        %v880 = vpop.f32.mrb[0].mxu0
        %v881 = vpop.f32.mrb[0].mxu0
        %882 = vdwg.mxu0
        %883 = vmatprep.subr.bf16.mxu0 0
        %884 = vmatpush1.bf16.msra.mxu0 %v683
        %885 = vmatprep.subr.bf16.mxu0 0
        %886 = vmatpush1.bf16.msra.mxu0 %v684
        %887 = vmatprep.subr.bf16.mxu0 0
        %888 = vmatpush1.bf16.msra.mxu0 %v685
        %889 = vmatprep.subr.bf16.mxu0 0
        %890 = vmatpush1.bf16.msra.mxu0 %v686
        %891 = vmatprep.subr.bf16.mxu0 0
        %892 = vmatpush1.bf16.msra.mxu0 %v687
        %893 = vmatprep.subr.bf16.mxu0 0
        %894 = vmatpush1.bf16.msra.mxu0 %v688
        %895 = vmatprep.subr.bf16.mxu0 0
        %896 = vmatpush1.bf16.msra.mxu0 %v689
        %897 = vmatprep.subr.bf16.mxu0 0
        %898 = vmatpush1.bf16.msra.mxu0 %v690
        %899 = vmatprep.subr.bf16.mxu0 0
        %900 = vmatpush1.bf16.msra.mxu0 %v691
        %901 = vmatprep.subr.bf16.mxu0 0
        %902 = vmatpush1.bf16.msra.mxu0 %v692
        %903 = vmatprep.subr.bf16.mxu0 0
        %904 = vmatpush1.bf16.msra.mxu0 %v693
        %905 = vmatprep.subr.bf16.mxu0 0
        %906 = vmatpush1.bf16.msra.mxu0 %v694
        %907 = vmatprep.subr.bf16.mxu0 0
        %908 = vmatpush1.bf16.msra.mxu0 %v695
        %909 = vmatprep.subr.bf16.mxu0 0
        %910 = vmatpush1.bf16.msra.mxu0 %v696
        %911 = vmatprep.subr.bf16.mxu0 0
        %912 = vmatpush1.bf16.msra.mxu0 %v697
        %913 = vmatprep.subr.bf16.mxu0 0
        %914 = vmatpush1.bf16.msra.mxu0 %v698
        %915 = vmatprep.mubr.bf16.mxu0 %v370
        %916 = vmatmul.mubr.bf16.gmra.mrb[0].mxu0 %v369
        %v917 = vpop.f32.mrb[0].mxu0
        %v918 = vadd.f32 %v878, %v917
        %v919 = vpop.f32.mrb[0].mxu0
        %v920 = vpop.f32.mrb[0].mxu0
        %v921 = vpop.f32.mrb[0].mxu0
        %922 = vdwg.mxu0
        %v923 = vadd.f32 %v218, %v918
        %924 = vst [vmem:[#allocation2] sm:$0xff] %v923
        %p925 = scmp.eq.s32.totalorder %s20, 1
        // Predicated region
        $region37: #{pyramid_features_forward.9} parent=31 // pred_check
          %p926 = pneg %p925
        $region38: #{pyramid_features_forward.9} parent=31 // pred_check_branch
          %928 = sbr.rel (%p926) target = $region40
        $region39: #{pyramid_features_forward.9} parent=31 // pred_region
          %v929 = vld [vmem:[#allocation2] sm:$0xff]
          %v930 = vld [vmem:[%s2] sm:$0x1]
          %v932 = vlaneseq
          %v933 = vshrl.u32 %v932, 7
          %v934 = vsub.s32 0, %v933
          %v935 = vrot.slane %v930, %v934
          %v937 = vadd.f32 %v929, %v935
          %938 = vst [vmem:[#allocation3] sm:$0xff] %v937
        $region40: #{pyramid_features_forward.9} parent=31 // pred_fallthru
          _
        // Predicated region
        $region41: #{pyramid_features_forward.9} parent=31 // pred_check
          %p939 = pneg %p120
        $region42: #{pyramid_features_forward.9} parent=31 // pred_check_branch
          %941 = sbr.rel (%p939) target = $region44
        $region43: #{pyramid_features_forward.9} parent=31 // pred_region
          %s943 = ssub.s32 128, 128
          %944 = vsyncadd [#allocation4], %s943
          %s945 = smul.addr %s19, 128
          %s946 = scalar_lea.hbm %s3, %s945
          %s948 = sshll.u32 [#allocation3], 4
          %s949 = int_to_ptr.vmem [resolvable:$true] %s948
          %951 = dma.vmem_to_hbm [thread:$0]  %s949, 128, %s946, [#allocation4]
        $region44: #{pyramid_features_forward.9} parent=31 // pred_fallthru
          _
        // Predicated region
        $region45: #{pyramid_features_forward.9} parent=31 // pred_check
          %p952 = pneg %p120
        $region46: #{pyramid_features_forward.9} parent=31 // pred_check_branch
          %954 = sbr.rel (%p952) target = $region48
        $region47: #{pyramid_features_forward.9} parent=31 // pred_region
          %955 = dma.done [#allocation4], 128
        $region48: #{pyramid_features_forward.9} parent=31 // pred_fallthru
          _
      $region32: #{pyramid_features_forward.9} parent=5 // pred_fallthru
        _
      %p956 = scmp.le.s32.totalorder 2, %s10
      // Predicated region
      $region49: #{pyramid_features_forward.9} parent=5 // pred_check
        %p957 = pneg %p956
      $region50: #{pyramid_features_forward.9} parent=5 // pred_check_branch
        %959 = sbr.rel (%p957) target = $region52
      $region51: #{pyramid_features_forward.9} parent=5 // pred_region
        %s960 = ssub.s32 %s10, 2
      $region52: #{pyramid_features_forward.9} parent=5 // pred_fallthru
        _
    $region6: #{pyramid_features_forward.9} parent=1 // loop_footer
      %s14 = sadd.s32 1, %s10
    $region7: #{pyramid_features_forward.9} parent=1 // loop_footer_branch
      %9 = sbr.rel target = $region3
    $region8: #{pyramid_features_forward.9} parent=1 // loop_exit
      _
    %961 = vsyncpa [#allocation4], 1
    %s962 = scalar_lea.sflag [#allocation4], 1
    %963 = vsyncpa %s962, 1

// kernel: pyramid_features_forward.7
$region0: #{pyramid_features_forward.7}
  #allocation0 [shape = 'u32[]', space=smem, size = 0x4, offset = 0x4, fixed_abs, tag = 'smem constant byte address 0x4 - core index']
  #allocation1 [shape = 'u32[144,128]{1,0:T(1,128)}', space=vmem, size = 0x12000, scoped, tag = 'internal scratch']
  %s0 = inlined_call_operand.vmem [shape: bf16[2048,4], index: 0, kind: input, shape index: {}]
  %s1 = inlined_call_operand.vmem [shape: bf16[4,128], index: 1, kind: input, shape index: {}]
  %s2 = inlined_call_operand.vmem [shape: f32[1,128], index: 2, kind: input, shape index: {}]
  %s3 = inlined_call_operand.vmem [shape: f32[512,128], index: 3, kind: input, shape index: {}]
  %s4 = inlined_call_operand.vmem [shape: f32[512,128], index: 4, kind: input, shape index: {}]
  %s5 = inlined_call_operand.hbm [shape: f32[2048,128], index: 5, kind: output, shape index: {}]
  %s6 = sld [smem:[#allocation0]]
  $region53: #{pyramid_features_forward.7} parent=0
    _
  %s8 = ssub.s32 1, %s6
  %s9 = scalar_select 0, %s8, %s6
  $region1: #{pyramid_features_forward.7} parent=0
    #allocation2 [shape = 'u8[524288]{0}', space=vmem, size = 0x80000, scoped, tag = 'output window, operand 0']
    #allocation3 [shape = 's32[2]{0}', space=sflag, size = 0x8, scoped, tag = 'scoped memory for pyramid_features_forward.7']
    %10 = vsyncpa [#allocation3], 0
    %s11 = scalar_lea.sflag [#allocation3], 1
    %12 = vsyncpa %s11, 0
    loop: start=0, step=1, limit=6
    $region2: #{pyramid_features_forward.7} parent=1 // loop_pre_header
      _
    $region3: #{pyramid_features_forward.7} parent=1 // loop_header
      %s14 = sphi 0, %s18
      %p15 = scmp.ge.s32.totalorder %s14, 6
      %s24 = sphi 0, %s26
      %s27 = sphi 0, %s24
      %s28 = sphi 0, %s27
      %s44 = sphi 0, %s28
      %s48 = sphi 0, %s48
      %s50 = sphi 0, %s48
      %s51 = sphi 0, %s50
      %s65 = sphi 0, %s51
      %s69 = sphi 0, %s69
      %s71 = sphi 0, %s69
      %s72 = sphi 0, %s71
      %s86 = sphi 0, %s72
      %s92 = sphi 0, %s94
      %s95 = sphi 0, %s92
      %s96 = sphi 0, %s95
      %s112 = sphi 0, %s96
      %s116 = sphi 0, %s116
      %s118 = sphi 0, %s116
      %s119 = sphi 0, %s118
      %s133 = sphi 0, %s119
      %s139 = sphi 0, %s141
      %s142 = sphi 0, %s139
      %s143 = sphi 0, %s142
      %s159 = sphi 0, %s143
    $region4: #{pyramid_features_forward.7} parent=1 // loop_header_branch
      %17 = sbr.rel (%p15) target = $region8
    $region5: #{pyramid_features_forward.7} parent=1 // loop_body
      %s19 = ssub.s32 %s14, 1
      %s20 = ssub.s32 %s14, 2
      %s21 = sadd.s32 %s14, 1
      %s22 = ssub.s32 %s14, %s21
      %p23 = scmp.eq.s32.totalorder %s22, 0
      %s25 = sadd.s32 %s24, 1
      %s26 = scalar_select %p23, %s24, %s25
      %p29 = pneg %p23
      %p30 = scmp.eq.s32.totalorder %s14, 3
      %p31 = por %p29, %p30
      %p32 = scmp.ne.s32.totalorder %s24, %s27
      %p33 = scmp.eq.s32.totalorder %s14, 0
      %p34 = por %p32, %p33
      %p35 = scmp.ne.s32.totalorder %s24, %s27
      %p36 = scmp.eq.s32.totalorder %s19, 3
      %p37 = por %p35, %p36
      %p38 = scmp.ne.s32.totalorder %s27, %s28
      %p39 = scmp.eq.s32.totalorder %s19, 0
      %p40 = por %p38, %p39
      %p41 = scmp.ne.s32.totalorder %s27, %s28
      %p42 = scmp.eq.s32.totalorder %s20, 3
      %p43 = por %p41, %p42
      %p45 = scmp.ne.s32.totalorder %s28, %s44
      %p46 = scmp.eq.s32.totalorder %s20, 0
      %p47 = por %p45, %p46
      %s49 = sadd.s32 %s48, 1
      %p52 = scmp.eq.s32.totalorder %s14, 3
      %p53 = scmp.ne.s32.totalorder %s48, %s50
      %p54 = scmp.eq.s32.totalorder %s14, 0
      %p55 = por %p53, %p54
      %p56 = scmp.ne.s32.totalorder %s48, %s50
      %p57 = scmp.eq.s32.totalorder %s19, 3
      %p58 = por %p56, %p57
      %p59 = scmp.ne.s32.totalorder %s50, %s51
      %p60 = scmp.eq.s32.totalorder %s19, 0
      %p61 = por %p59, %p60
      %p62 = scmp.ne.s32.totalorder %s50, %s51
      %p63 = scmp.eq.s32.totalorder %s20, 3
      %p64 = por %p62, %p63
      %p66 = scmp.ne.s32.totalorder %s51, %s65
      %p67 = scmp.eq.s32.totalorder %s20, 0
      %p68 = por %p66, %p67
      %s70 = sadd.s32 %s69, 1
      %p73 = scmp.eq.s32.totalorder %s14, 3
      %p74 = scmp.ne.s32.totalorder %s69, %s71
      %p75 = scmp.eq.s32.totalorder %s14, 0
      %p76 = por %p74, %p75
      %p77 = scmp.ne.s32.totalorder %s69, %s71
      %p78 = scmp.eq.s32.totalorder %s19, 3
      %p79 = por %p77, %p78
      %p80 = scmp.ne.s32.totalorder %s71, %s72
      %p81 = scmp.eq.s32.totalorder %s19, 0
      %p82 = por %p80, %p81
      %p83 = scmp.ne.s32.totalorder %s71, %s72
      %p84 = scmp.eq.s32.totalorder %s20, 3
      %p85 = por %p83, %p84
      %p87 = scmp.ne.s32.totalorder %s72, %s86
      %p88 = scmp.eq.s32.totalorder %s20, 0
      %p89 = por %p87, %p88
      %s90 = ssub.s32 %s14, %s21
      %p91 = scmp.eq.s32.totalorder %s90, 0
      %s93 = sadd.s32 %s92, 1
      %s94 = scalar_select %p91, %s92, %s93
      %p97 = pneg %p91
      %p98 = scmp.eq.s32.totalorder %s14, 3
      %p99 = por %p97, %p98
      %p100 = scmp.ne.s32.totalorder %s92, %s95
      %p101 = scmp.eq.s32.totalorder %s14, 0
      %p102 = por %p100, %p101
      %p103 = scmp.ne.s32.totalorder %s92, %s95
      %p104 = scmp.eq.s32.totalorder %s19, 3
      %p105 = por %p103, %p104
      %p106 = scmp.ne.s32.totalorder %s95, %s96
      %p107 = scmp.eq.s32.totalorder %s19, 0
      %p108 = por %p106, %p107
      %p109 = scmp.ne.s32.totalorder %s95, %s96
      %p110 = scmp.eq.s32.totalorder %s20, 3
      %p111 = por %p109, %p110
      %p113 = scmp.ne.s32.totalorder %s96, %s112
      %p114 = scmp.eq.s32.totalorder %s20, 0
      %p115 = por %p113, %p114
      %s117 = sadd.s32 %s116, 1
      %p120 = scmp.eq.s32.totalorder %s14, 3
      %p121 = scmp.ne.s32.totalorder %s116, %s118
      %p122 = scmp.eq.s32.totalorder %s14, 0
      %p123 = por %p121, %p122
      %p124 = scmp.ne.s32.totalorder %s116, %s118
      %p125 = scmp.eq.s32.totalorder %s19, 3
      %p126 = por %p124, %p125
      %p127 = scmp.ne.s32.totalorder %s118, %s119
      %p128 = scmp.eq.s32.totalorder %s19, 0
      %p129 = por %p127, %p128
      %p130 = scmp.ne.s32.totalorder %s118, %s119
      %p131 = scmp.eq.s32.totalorder %s20, 3
      %p132 = por %p130, %p131
      %p134 = scmp.ne.s32.totalorder %s119, %s133
      %p135 = scmp.eq.s32.totalorder %s20, 0
      %p136 = por %p134, %p135
      %s137 = ssub.s32 %s14, %s21
      %p138 = scmp.eq.s32.totalorder %s137, 0
      %s140 = sadd.s32 %s139, 1
      %s141 = scalar_select %p138, %s139, %s140
      %p144 = pneg %p138
      %p145 = scmp.eq.s32.totalorder %s14, 3
      %p146 = por %p144, %p145
      %p147 = scmp.ne.s32.totalorder %s139, %s142
      %p148 = scmp.eq.s32.totalorder %s14, 0
      %p149 = por %p147, %p148
      %p150 = scmp.ne.s32.totalorder %s139, %s142
      %p151 = scmp.eq.s32.totalorder %s19, 3
      %p152 = por %p150, %p151
      %p153 = scmp.ne.s32.totalorder %s142, %s143
      %p154 = scmp.eq.s32.totalorder %s19, 0
      %p155 = por %p153, %p154
      %p156 = scmp.ne.s32.totalorder %s142, %s143
      %p157 = scmp.eq.s32.totalorder %s20, 3
      %p158 = por %p156, %p157
      %p160 = scmp.ne.s32.totalorder %s143, %s159
      %p161 = scmp.eq.s32.totalorder %s20, 0
      %p162 = por %p160, %p161
      %p163 = scmp.le.s32.totalorder 1, %s14
      %p164 = scmp.lt.s32.totalorder %s14, 5
      %p165 = pnand %p163, %p164
      %p166 = pneg %p165
      // Predicated region
      $region9: #{pyramid_features_forward.7} parent=5 // pred_check
        _
      $region10: #{pyramid_features_forward.7} parent=5 // pred_check_branch
        %168 = sbr.rel (%p165) target = $region12
      $region11: #{pyramid_features_forward.7} parent=5 // pred_region
        %s169 = ssub.s32 %s14, 1
        // Predicated region
        $region13: #{pyramid_features_forward.7} parent=11 // pred_check
          %p170 = pneg %p61
        $region14: #{pyramid_features_forward.7} parent=11 // pred_check_branch
          %172 = sbr.rel (%p170) target = $region16
        $region15: #{pyramid_features_forward.7} parent=11 // pred_region
          _
        $region16: #{pyramid_features_forward.7} parent=11 // pred_fallthru
          _
        // Predicated region
        $region17: #{pyramid_features_forward.7} parent=11 // pred_check
          %p173 = pneg %p82
        $region18: #{pyramid_features_forward.7} parent=11 // pred_check_branch
          %175 = sbr.rel (%p173) target = $region20
        $region19: #{pyramid_features_forward.7} parent=11 // pred_region
          _
        $region20: #{pyramid_features_forward.7} parent=11 // pred_fallthru
          _
        // Predicated region
        $region21: #{pyramid_features_forward.7} parent=11 // pred_check
          %p176 = pneg %p129
        $region22: #{pyramid_features_forward.7} parent=11 // pred_check_branch
          %178 = sbr.rel (%p176) target = $region24
        $region23: #{pyramid_features_forward.7} parent=11 // pred_region
          _
        $region24: #{pyramid_features_forward.7} parent=11 // pred_fallthru
          _
      $region12: #{pyramid_features_forward.7} parent=5 // pred_fallthru
        _
      %p179 = scmp.lt.s32.totalorder %s14, 4
      // Predicated region
      $region25: #{pyramid_features_forward.7} parent=5 // pred_check
        %p180 = pneg %p179
      $region26: #{pyramid_features_forward.7} parent=5 // pred_check_branch
        %182 = sbr.rel (%p180) target = $region28
      $region27: #{pyramid_features_forward.7} parent=5 // pred_region
        // Predicated region
        $region29: #{pyramid_features_forward.7} parent=27 // pred_check
          %p183 = pneg %p34
        $region30: #{pyramid_features_forward.7} parent=27 // pred_check_branch
          %185 = sbr.rel (%p183) target = $region32
        $region31: #{pyramid_features_forward.7} parent=27 // pred_region
          %s186 = smul.u32 64, %s14
          %p187 = scmp.lt.s32.totalorder %s186, 255
          %s188 = scalar_select %p187, %s186, 255
          %s189 = smul.addr %s188, 4
          %s190 = scalar_lea.vmem %s0, %s189
          %s191 = smul.u32 64, %s14
        $region32: #{pyramid_features_forward.7} parent=27 // pred_fallthru
          _
        // Predicated region
        $region33: #{pyramid_features_forward.7} parent=27 // pred_check
          %p192 = pneg %p102
        $region34: #{pyramid_features_forward.7} parent=27 // pred_check_branch
          %194 = sbr.rel (%p192) target = $region36
        $region35: #{pyramid_features_forward.7} parent=27 // pred_region
          %s195 = smul.u32 16, %s14
          %p196 = scmp.lt.s32.totalorder %s195, 63
          %s197 = scalar_select %p196, %s195, 63
          %s198 = smul.addr %s197, 8
          %s199 = scalar_lea.vmem %s3, %s198
          %s200 = smul.u32 16, %s14
        $region36: #{pyramid_features_forward.7} parent=27 // pred_fallthru
          _
      $region28: #{pyramid_features_forward.7} parent=5 // pred_fallthru
        _
      %p201 = scmp.le.s32.totalorder 1, %s14
      %p202 = scmp.lt.s32.totalorder %s14, 5
      %p203 = pnand %p201, %p202
      %p204 = pneg %p203
      // Predicated region
      $region37: #{pyramid_features_forward.7} parent=5 // pred_check
        _
      $region38: #{pyramid_features_forward.7} parent=5 // pred_check_branch
        %206 = sbr.rel (%p203) target = $region40
      $region39: #{pyramid_features_forward.7} parent=5 // pred_region
        %s207 = ssub.s32 %s14, 1
        %s208 = smul.u32 64, %s19
        %p209 = scmp.lt.s32.totalorder %s208, 255
        %s210 = scalar_select %p209, %s208, 255
        %s211 = smul.addr %s210, 4
        %s212 = scalar_lea.vmem %s0, %s211
        %p213 = pneg %p40
        %p214 = pneg %p37
        %p215 = pneg %p61
        %p216 = pneg %p58
        %p217 = pneg %p82
        %p218 = pneg %p79
        %s219 = smul.u32 16, %s19
        %p220 = scmp.lt.s32.totalorder %s219, 63
        %s221 = scalar_select %p220, %s219, 63
        %s222 = smul.addr %s221, 8
        %s223 = scalar_lea.vmem %s3, %s222
        %p224 = pneg %p108
        %p225 = pneg %p105
        %p226 = pneg %p129
        %p227 = pneg %p126
        %p228 = pneg %p155
        %p229 = pneg %p152
        %s230 = sand.u32 %s142, 1
        %s231 = scalar_lea.sflag [#allocation3], %s230
        %s232 = sand.u32 %s142, 1
        %s233 = smul.addr %s232, 512
        %s234 = scalar_lea.vmem [#allocation2], %s233
        %s235 = smul.u32 64, %s19
        %p236 = scmp.lt.s32.totalorder %s235, 255
        %s237 = scalar_select %p236, %s235, 255
        %s238 = smul.addr %s237, 4
        %s239 = scalar_lea.vmem %s0, %s238
        %s240 = smul.u32 64, %s19
        %s241 = smul.u32 16, %s19
        %p242 = scmp.lt.s32.totalorder %s241, 63
        %s243 = scalar_select %p242, %s241, 63
        %s244 = smul.addr %s243, 8
        %s245 = scalar_lea.vmem %s3, %s244
        %s246 = smul.u32 16, %s19
        %s247 = smul.u32 64, %s19
        %v249 = vld [vmem:[%s239] sm:$0xf]
        %v250 = vld [vmem:[%s239 + $0x4] sm:$0xf]
        %v251 = vld [vmem:[%s239 + $0x8] sm:$0xf]
        %v252 = vld [vmem:[%s239 + $0xc] sm:$0xf]
        %v253 = vld [vmem:[%s239 + $0x10] sm:$0xf]
        %v254 = vld [vmem:[%s239 + $0x14] sm:$0xf]
        %v255 = vld [vmem:[%s239 + $0x18] sm:$0xf]
        %v256 = vld [vmem:[%s239 + $0x1c] sm:$0xf]
        %v257 = vld [vmem:[%s239 + $0x20] sm:$0xf]
        %v258 = vld [vmem:[%s239 + $0x24] sm:$0xf]
        %v259 = vld [vmem:[%s239 + $0x28] sm:$0xf]
        %v260 = vld [vmem:[%s239 + $0x2c] sm:$0xf]
        %v261 = vld [vmem:[%s239 + $0x30] sm:$0xf]
        %v262 = vld [vmem:[%s239 + $0x34] sm:$0xf]
        %v263 = vld [vmem:[%s239 + $0x38] sm:$0xf]
        %v264 = vld [vmem:[%s239 + $0x3c] sm:$0xf]
        %v265 = vld [vmem:[%s239 + $0x40] sm:$0xf]
        %v266 = vld [vmem:[%s239 + $0x44] sm:$0xf]
        %v267 = vld [vmem:[%s239 + $0x48] sm:$0xf]
        %v268 = vld [vmem:[%s239 + $0x4c] sm:$0xf]
        %v269 = vld [vmem:[%s239 + $0x50] sm:$0xf]
        %v270 = vld [vmem:[%s239 + $0x54] sm:$0xf]
        %v271 = vld [vmem:[%s239 + $0x58] sm:$0xf]
        %v272 = vld [vmem:[%s239 + $0x5c] sm:$0xf]
        %v273 = vld [vmem:[%s239 + $0x60] sm:$0xf]
        %v274 = vld [vmem:[%s239 + $0x64] sm:$0xf]
        %v275 = vld [vmem:[%s239 + $0x68] sm:$0xf]
        %v276 = vld [vmem:[%s239 + $0x6c] sm:$0xf]
        %v277 = vld [vmem:[%s239 + $0x70] sm:$0xf]
        %v278 = vld [vmem:[%s239 + $0x74] sm:$0xf]
        %v279 = vld [vmem:[%s239 + $0x78] sm:$0xf]
        %v280 = vld [vmem:[%s239 + $0x7c] sm:$0xf]
        %v281 = vld [vmem:[%s239 + $0x80] sm:$0xf]
        %v282 = vld [vmem:[%s239 + $0x84] sm:$0xf]
        %v283 = vld [vmem:[%s239 + $0x88] sm:$0xf]
        %v284 = vld [vmem:[%s239 + $0x8c] sm:$0xf]
        %v285 = vld [vmem:[%s239 + $0x90] sm:$0xf]
        %v286 = vld [vmem:[%s239 + $0x94] sm:$0xf]
        %v287 = vld [vmem:[%s239 + $0x98] sm:$0xf]
        %v288 = vld [vmem:[%s239 + $0x9c] sm:$0xf]
        %v289 = vld [vmem:[%s239 + $0xa0] sm:$0xf]
        %v290 = vld [vmem:[%s239 + $0xa4] sm:$0xf]
        %v291 = vld [vmem:[%s239 + $0xa8] sm:$0xf]
        %v292 = vld [vmem:[%s239 + $0xac] sm:$0xf]
        %v293 = vld [vmem:[%s239 + $0xb0] sm:$0xf]
        %v294 = vld [vmem:[%s239 + $0xb4] sm:$0xf]
        %v295 = vld [vmem:[%s239 + $0xb8] sm:$0xf]
        %v296 = vld [vmem:[%s239 + $0xbc] sm:$0xf]
        %v297 = vld [vmem:[%s239 + $0xc0] sm:$0xf]
        %v298 = vld [vmem:[%s239 + $0xc4] sm:$0xf]
        %v299 = vld [vmem:[%s239 + $0xc8] sm:$0xf]
        %v300 = vld [vmem:[%s239 + $0xcc] sm:$0xf]
        %v301 = vld [vmem:[%s239 + $0xd0] sm:$0xf]
        %v302 = vld [vmem:[%s239 + $0xd4] sm:$0xf]
        %v303 = vld [vmem:[%s239 + $0xd8] sm:$0xf]
        %v304 = vld [vmem:[%s239 + $0xdc] sm:$0xf]
        %v305 = vld [vmem:[%s239 + $0xe0] sm:$0xf]
        %v306 = vld [vmem:[%s239 + $0xe4] sm:$0xf]
        %v307 = vld [vmem:[%s239 + $0xe8] sm:$0xf]
        %v308 = vld [vmem:[%s239 + $0xec] sm:$0xf]
        %v309 = vld [vmem:[%s239 + $0xf0] sm:$0xf]
        %v310 = vld [vmem:[%s239 + $0xf4] sm:$0xf]
        %v311 = vld [vmem:[%s239 + $0xf8] sm:$0xf]
        %v312 = vld [vmem:[%s239 + $0xfc] sm:$0xf]
        %v313 = vld [vmem:[%s1] sm:$0x3]
        %v314 = vld [vmem:[%s4] sm:$0xff]
        %v315 = vld [vmem:[%s4 + $0x8] sm:$0xff]
        %v316 = vld [vmem:[%s4 + $0x10] sm:$0xff]
        %v317 = vld [vmem:[%s4 + $0x18] sm:$0xff]
        %v318 = vld [vmem:[%s4 + $0x20] sm:$0xff]
        %v319 = vld [vmem:[%s4 + $0x28] sm:$0xff]
        %v320 = vld [vmem:[%s4 + $0x30] sm:$0xff]
        %v321 = vld [vmem:[%s4 + $0x38] sm:$0xff]
        %v322 = vld [vmem:[%s4 + $0x40] sm:$0xff]
        %v323 = vld [vmem:[%s4 + $0x48] sm:$0xff]
        %v324 = vld [vmem:[%s4 + $0x50] sm:$0xff]
        %v325 = vld [vmem:[%s4 + $0x58] sm:$0xff]
        %v326 = vld [vmem:[%s4 + $0x60] sm:$0xff]
        %v327 = vld [vmem:[%s4 + $0x68] sm:$0xff]
        %v328 = vld [vmem:[%s4 + $0x70] sm:$0xff]
        %v329 = vld [vmem:[%s4 + $0x78] sm:$0xff]
        %v330 = vld [vmem:[%s4 + $0x80] sm:$0xff]
        %v331 = vld [vmem:[%s4 + $0x88] sm:$0xff]
        %v332 = vld [vmem:[%s4 + $0x90] sm:$0xff]
        %v333 = vld [vmem:[%s4 + $0x98] sm:$0xff]
        %v334 = vld [vmem:[%s4 + $0xa0] sm:$0xff]
        %v335 = vld [vmem:[%s4 + $0xa8] sm:$0xff]
        %v336 = vld [vmem:[%s4 + $0xb0] sm:$0xff]
        %v337 = vld [vmem:[%s4 + $0xb8] sm:$0xff]
        %v338 = vld [vmem:[%s4 + $0xc0] sm:$0xff]
        %v339 = vld [vmem:[%s4 + $0xc8] sm:$0xff]
        %v340 = vld [vmem:[%s4 + $0xd0] sm:$0xff]
        %v341 = vld [vmem:[%s4 + $0xd8] sm:$0xff]
        %v342 = vld [vmem:[%s4 + $0xe0] sm:$0xff]
        %v343 = vld [vmem:[%s4 + $0xe8] sm:$0xff]
        %v344 = vld [vmem:[%s4 + $0xf0] sm:$0xff]
        %v345 = vld [vmem:[%s4 + $0xf8] sm:$0xff]
        %v346 = vld [vmem:[%s4 + $0x100] sm:$0xff]
        %v347 = vld [vmem:[%s4 + $0x108] sm:$0xff]
        %v348 = vld [vmem:[%s4 + $0x110] sm:$0xff]
        %v349 = vld [vmem:[%s4 + $0x118] sm:$0xff]
        %v350 = vld [vmem:[%s4 + $0x120] sm:$0xff]
        %v351 = vld [vmem:[%s4 + $0x128] sm:$0xff]
        %v352 = vld [vmem:[%s4 + $0x130] sm:$0xff]
        %v353 = vld [vmem:[%s4 + $0x138] sm:$0xff]
        %v354 = vld [vmem:[%s4 + $0x140] sm:$0xff]
        %v355 = vld [vmem:[%s4 + $0x148] sm:$0xff]
        %v356 = vld [vmem:[%s4 + $0x150] sm:$0xff]
        %v357 = vld [vmem:[%s4 + $0x158] sm:$0xff]
        %v358 = vld [vmem:[%s4 + $0x160] sm:$0xff]
        %v359 = vld [vmem:[%s4 + $0x168] sm:$0xff]
        %v360 = vld [vmem:[%s4 + $0x170] sm:$0xff]
        %v361 = vld [vmem:[%s4 + $0x178] sm:$0xff]
        %v362 = vld [vmem:[%s4 + $0x180] sm:$0xff]
        %v363 = vld [vmem:[%s4 + $0x188] sm:$0xff]
        %v364 = vld [vmem:[%s4 + $0x190] sm:$0xff]
        %v365 = vld [vmem:[%s4 + $0x198] sm:$0xff]
        %v366 = vld [vmem:[%s4 + $0x1a0] sm:$0xff]
        %v367 = vld [vmem:[%s4 + $0x1a8] sm:$0xff]
        %v368 = vld [vmem:[%s4 + $0x1b0] sm:$0xff]
        %v369 = vld [vmem:[%s4 + $0x1b8] sm:$0xff]
        %v370 = vld [vmem:[%s4 + $0x1c0] sm:$0xff]
        %v371 = vld [vmem:[%s4 + $0x1c8] sm:$0xff]
        %v372 = vld [vmem:[%s4 + $0x1d0] sm:$0xff]
        %v373 = vld [vmem:[%s4 + $0x1d8] sm:$0xff]
        %v374 = vld [vmem:[%s4 + $0x1e0] sm:$0xff]
        %v375 = vld [vmem:[%s4 + $0x1e8] sm:$0xff]
        %v376 = vld [vmem:[%s4 + $0x1f0] sm:$0xff]
        %v377 = vld [vmem:[%s4 + $0x1f8] sm:$0xff]
        %v378 = vld [vmem:[%s245] sm:$0xff]
        %v379 = vld [vmem:[%s245 + $0x8] sm:$0xff]
        %v380 = vld [vmem:[%s245 + $0x10] sm:$0xff]
        %v381 = vld [vmem:[%s245 + $0x18] sm:$0xff]
        %v382 = vld [vmem:[%s245 + $0x20] sm:$0xff]
        %v383 = vld [vmem:[%s245 + $0x28] sm:$0xff]
        %v384 = vld [vmem:[%s245 + $0x30] sm:$0xff]
        %v385 = vld [vmem:[%s245 + $0x38] sm:$0xff]
        %v386 = vld [vmem:[%s245 + $0x40] sm:$0xff]
        %v387 = vld [vmem:[%s245 + $0x48] sm:$0xff]
        %v388 = vld [vmem:[%s245 + $0x50] sm:$0xff]
        %v389 = vld [vmem:[%s245 + $0x58] sm:$0xff]
        %v390 = vld [vmem:[%s245 + $0x60] sm:$0xff]
        %v391 = vld [vmem:[%s245 + $0x68] sm:$0xff]
        %v392 = vld [vmem:[%s245 + $0x70] sm:$0xff]
        %v393 = vld [vmem:[%s245 + $0x78] sm:$0xff]
        %394 = vmatprep.subr.mxu0 0.0
        %395 = vmatpush1.msra.mxu0 %v378
        %396 = vmatprep.subr.mxu0 0.0
        %397 = vmatpush1.msra.mxu0 %v379
        %398 = vmatprep.subr.mxu0 0.0
        %399 = vmatpush1.msra.mxu0 %v380
        %400 = vmatprep.subr.mxu0 0.0
        %401 = vmatpush1.msra.mxu0 %v381
        %402 = vmatprep.subr.mxu0 0.0
        %403 = vmatpush1.msra.mxu0 %v382
        %404 = vmatprep.subr.mxu0 0.0
        %405 = vmatpush1.msra.mxu0 %v383
        %406 = vmatprep.subr.mxu0 0.0
        %407 = vmatpush1.msra.mxu0 %v384
        %408 = vmatprep.subr.mxu0 0.0
        %409 = vmatpush1.msra.mxu0 %v385
        %410 = vmatprep.subr.mxu0 0.0
        %411 = vmatpush1.msra.mxu0 %v386
        %412 = vmatprep.subr.mxu0 0.0
        %413 = vmatpush1.msra.mxu0 %v387
        %414 = vmatprep.subr.mxu0 0.0
        %415 = vmatpush1.msra.mxu0 %v388
        %416 = vmatprep.subr.mxu0 0.0
        %417 = vmatpush1.msra.mxu0 %v389
        %418 = vmatprep.subr.mxu0 0.0
        %419 = vmatpush1.msra.mxu0 %v390
        %420 = vmatprep.subr.mxu0 0.0
        %421 = vmatpush1.msra.mxu0 %v391
        %422 = vmatprep.subr.mxu0 0.0
        %423 = vmatpush1.msra.mxu0 %v392
        %424 = vmatprep.subr.mxu0 0.0
        %425 = vmatpush1.msra.mxu0 %v393
        %426 = vmatprep.subr.mxu0 0.0
        %427 = vmatpush1.msra.mxu0 0.0
        %428 = vmatprep.subr.mxu0 0.0
        %429 = vmatpush1.msra.mxu0 0.0
        %430 = vmatprep.subr.mxu0 0.0
        %431 = vmatpush1.msra.mxu0 0.0
        %432 = vmatprep.subr.mxu0 0.0
        %433 = vmatpush1.msra.mxu0 0.0
        %434 = vmatprep.subr.mxu0 0.0
        %435 = vmatpush1.msra.mxu0 0.0
        %436 = vmatprep.subr.mxu0 0.0
        %437 = vmatpush1.msra.mxu0 0.0
        %438 = vmatprep.subr.mxu0 0.0
        %439 = vmatpush1.msra.mxu0 0.0
        %440 = vmatprep.subr.mxu0 0.0
        %441 = vmatpush1.msra.mxu0 0.0
        %442 = vmatprep.subr.mxu0 0.0
        %443 = vmatpush1.msra.mxu0 0.0
        %444 = vmatprep.subr.mxu0 0.0
        %445 = vmatpush1.msra.mxu0 0.0
        %446 = vmatprep.subr.mxu0 0.0
        %447 = vmatpush1.msra.mxu0 0.0
        %448 = vmatprep.subr.mxu0 0.0
        %449 = vmatpush1.msra.mxu0 0.0
        %450 = vmatprep.subr.mxu0 0.0
        %451 = vmatpush1.msra.mxu0 0.0
        %452 = vmatprep.subr.mxu0 0.0
        %453 = vmatpush1.msra.mxu0 0.0
        %454 = vmatprep.subr.mxu0 0.0
        %455 = vmatpush1.msra.mxu0 0.0
        %456 = vmatprep.subr.mxu0 0.0
        %457 = vmatpush1.msra.mxu0 0.0
        %458 = vmatprep.mubr.f32.mxu0 0.0
        %459 = vmatmul.mubr.f32.gmra.mrb[0].mxu0 %v314
        %v460 = vpop.f32.mrb[0].mxu0
        %v461 = vadd.f32 0.0, %v460
        %v462 = vpop.f32.mrb[0].mxu0
        %463 = vmatprep.mubr.f32.mxu0 0.0
        %464 = vmatmul.mubr.f32.gmra.mrb[0].mxu0 %v315
        %v465 = vpop.f32.mrb[0].mxu0
        %v466 = vadd.f32 0.0, %v465
        %v467 = vpop.f32.mrb[0].mxu0
        %468 = vmatprep.mubr.f32.mxu0 0.0
        %469 = vmatmul.mubr.f32.gmra.mrb[0].mxu0 %v316
        %v470 = vpop.f32.mrb[0].mxu0
        %v471 = vadd.f32 0.0, %v470
        %v472 = vpop.f32.mrb[0].mxu0
        %473 = vmatprep.mubr.f32.mxu0 0.0
        %474 = vmatmul.mubr.f32.gmra.mrb[0].mxu0 %v317
        %v475 = vpop.f32.mrb[0].mxu0
        %v476 = vadd.f32 0.0, %v475
        %v477 = vpop.f32.mrb[0].mxu0
        %478 = vmatprep.mubr.f32.mxu0 0.0
        %479 = vmatmul.mubr.f32.gmra.mrb[0].mxu0 %v318
        %v480 = vpop.f32.mrb[0].mxu0
        %v481 = vadd.f32 0.0, %v480
        %v482 = vpop.f32.mrb[0].mxu0
        %483 = vmatprep.mubr.f32.mxu0 0.0
        %484 = vmatmul.mubr.f32.gmra.mrb[0].mxu0 %v319
        %v485 = vpop.f32.mrb[0].mxu0
        %v486 = vadd.f32 0.0, %v485
        %v487 = vpop.f32.mrb[0].mxu0
        %488 = vmatprep.mubr.f32.mxu0 0.0
        %489 = vmatmul.mubr.f32.gmra.mrb[0].mxu0 %v320
        %v490 = vpop.f32.mrb[0].mxu0
        %v491 = vadd.f32 0.0, %v490
        %v492 = vpop.f32.mrb[0].mxu0
        %493 = vmatprep.mubr.f32.mxu0 0.0
        %494 = vmatmul.mubr.f32.gmra.mrb[0].mxu0 %v321
        %v495 = vpop.f32.mrb[0].mxu0
        %v496 = vadd.f32 0.0, %v495
        %v497 = vpop.f32.mrb[0].mxu0
        %498 = vmatprep.mubr.f32.mxu0 0.0
        %499 = vmatmul.mubr.f32.gmra.mrb[0].mxu0 %v322
        %v500 = vpop.f32.mrb[0].mxu0
        %v501 = vadd.f32 0.0, %v500
        %v502 = vpop.f32.mrb[0].mxu0
        %503 = vmatprep.mubr.f32.mxu0 0.0
        %504 = vmatmul.mubr.f32.gmra.mrb[0].mxu0 %v323
        %v505 = vpop.f32.mrb[0].mxu0
        %v506 = vadd.f32 0.0, %v505
        %v507 = vpop.f32.mrb[0].mxu0
        %508 = vmatprep.mubr.f32.mxu0 0.0
        %509 = vmatmul.mubr.f32.gmra.mrb[0].mxu0 %v324
        %v510 = vpop.f32.mrb[0].mxu0
        %v511 = vadd.f32 0.0, %v510
        %v512 = vpop.f32.mrb[0].mxu0
        %513 = vmatprep.mubr.f32.mxu0 0.0
        %514 = vmatmul.mubr.f32.gmra.mrb[0].mxu0 %v325
        %v515 = vpop.f32.mrb[0].mxu0
        %v516 = vadd.f32 0.0, %v515
        %v517 = vpop.f32.mrb[0].mxu0
        %518 = vmatprep.mubr.f32.mxu0 0.0
        %519 = vmatmul.mubr.f32.gmra.mrb[0].mxu0 %v326
        %v520 = vpop.f32.mrb[0].mxu0
        %v521 = vadd.f32 0.0, %v520
        %v522 = vpop.f32.mrb[0].mxu0
        %523 = vmatprep.mubr.f32.mxu0 0.0
        %524 = vmatmul.mubr.f32.gmra.mrb[0].mxu0 %v327
        %v525 = vpop.f32.mrb[0].mxu0
        %v526 = vadd.f32 0.0, %v525
        %v527 = vpop.f32.mrb[0].mxu0
        %528 = vmatprep.mubr.f32.mxu0 0.0
        %529 = vmatmul.mubr.f32.gmra.mrb[0].mxu0 %v328
        %v530 = vpop.f32.mrb[0].mxu0
        %v531 = vadd.f32 0.0, %v530
        %v532 = vpop.f32.mrb[0].mxu0
        %533 = vmatprep.mubr.f32.mxu0 0.0
        %534 = vmatmul.mubr.f32.gmra.mrb[0].mxu0 %v329
        %v535 = vpop.f32.mrb[0].mxu0
        %v536 = vadd.f32 0.0, %v535
        %v537 = vpop.f32.mrb[0].mxu0
        %538 = vmatprep.mubr.f32.mxu0 0.0
        %539 = vmatmul.mubr.f32.gmra.mrb[0].mxu0 %v330
        %v540 = vpop.f32.mrb[0].mxu0
        %v541 = vadd.f32 0.0, %v540
        %v542 = vpop.f32.mrb[0].mxu0
        %543 = vmatprep.mubr.f32.mxu0 0.0
        %544 = vmatmul.mubr.f32.gmra.mrb[0].mxu0 %v331
        %v545 = vpop.f32.mrb[0].mxu0
        %v546 = vadd.f32 0.0, %v545
        %v547 = vpop.f32.mrb[0].mxu0
        %548 = vmatprep.mubr.f32.mxu0 0.0
        %549 = vmatmul.mubr.f32.gmra.mrb[0].mxu0 %v332
        %v550 = vpop.f32.mrb[0].mxu0
        %v551 = vadd.f32 0.0, %v550
        %v552 = vpop.f32.mrb[0].mxu0
        %553 = vmatprep.mubr.f32.mxu0 0.0
        %554 = vmatmul.mubr.f32.gmra.mrb[0].mxu0 %v333
        %v555 = vpop.f32.mrb[0].mxu0
        %v556 = vadd.f32 0.0, %v555
        %v557 = vpop.f32.mrb[0].mxu0
        %558 = vmatprep.mubr.f32.mxu0 0.0
        %559 = vmatmul.mubr.f32.gmra.mrb[0].mxu0 %v334
        %v560 = vpop.f32.mrb[0].mxu0
        %v561 = vadd.f32 0.0, %v560
        %v562 = vpop.f32.mrb[0].mxu0
        %563 = vmatprep.mubr.f32.mxu0 0.0
        %564 = vmatmul.mubr.f32.gmra.mrb[0].mxu0 %v335
        %v565 = vpop.f32.mrb[0].mxu0
        %v566 = vadd.f32 0.0, %v565
        %v567 = vpop.f32.mrb[0].mxu0
        %568 = vmatprep.mubr.f32.mxu0 0.0
        %569 = vmatmul.mubr.f32.gmra.mrb[0].mxu0 %v336
        %v570 = vpop.f32.mrb[0].mxu0
        %v571 = vadd.f32 0.0, %v570
        %v572 = vpop.f32.mrb[0].mxu0
        %573 = vmatprep.mubr.f32.mxu0 0.0
        %574 = vmatmul.mubr.f32.gmra.mrb[0].mxu0 %v337
        %v575 = vpop.f32.mrb[0].mxu0
        %v576 = vadd.f32 0.0, %v575
        %v577 = vpop.f32.mrb[0].mxu0
        %578 = vmatprep.mubr.f32.mxu0 0.0
        %579 = vmatmul.mubr.f32.gmra.mrb[0].mxu0 %v338
        %v580 = vpop.f32.mrb[0].mxu0
        %v581 = vadd.f32 0.0, %v580
        %v582 = vpop.f32.mrb[0].mxu0
        %583 = vmatprep.mubr.f32.mxu0 0.0
        %584 = vmatmul.mubr.f32.gmra.mrb[0].mxu0 %v339
        %v585 = vpop.f32.mrb[0].mxu0
        %v586 = vadd.f32 0.0, %v585
        %v587 = vpop.f32.mrb[0].mxu0
        %588 = vmatprep.mubr.f32.mxu0 0.0
        %589 = vmatmul.mubr.f32.gmra.mrb[0].mxu0 %v340
        %v590 = vpop.f32.mrb[0].mxu0
        %v591 = vadd.f32 0.0, %v590
        %v592 = vpop.f32.mrb[0].mxu0
        %593 = vmatprep.mubr.f32.mxu0 0.0
        %594 = vmatmul.mubr.f32.gmra.mrb[0].mxu0 %v341
        %v595 = vpop.f32.mrb[0].mxu0
        %v596 = vadd.f32 0.0, %v595
        %v597 = vpop.f32.mrb[0].mxu0
        %598 = vmatprep.mubr.f32.mxu0 0.0
        %599 = vmatmul.mubr.f32.gmra.mrb[0].mxu0 %v342
        %v600 = vpop.f32.mrb[0].mxu0
        %v601 = vadd.f32 0.0, %v600
        %v602 = vpop.f32.mrb[0].mxu0
        %603 = vmatprep.mubr.f32.mxu0 0.0
        %604 = vmatmul.mubr.f32.gmra.mrb[0].mxu0 %v343
        %v605 = vpop.f32.mrb[0].mxu0
        %v606 = vadd.f32 0.0, %v605
        %v607 = vpop.f32.mrb[0].mxu0
        %608 = vmatprep.mubr.f32.mxu0 0.0
        %609 = vmatmul.mubr.f32.gmra.mrb[0].mxu0 %v344
        %v610 = vpop.f32.mrb[0].mxu0
        %v611 = vadd.f32 0.0, %v610
        %v612 = vpop.f32.mrb[0].mxu0
        %613 = vmatprep.mubr.f32.mxu0 0.0
        %614 = vmatmul.mubr.f32.gmra.mrb[0].mxu0 %v345
        %v615 = vpop.f32.mrb[0].mxu0
        %v616 = vadd.f32 0.0, %v615
        %v617 = vpop.f32.mrb[0].mxu0
        %618 = vmatprep.mubr.f32.mxu0 0.0
        %619 = vmatmul.mubr.f32.gmra.mrb[0].mxu0 %v346
        %v620 = vpop.f32.mrb[0].mxu0
        %v621 = vadd.f32 0.0, %v620
        %v622 = vpop.f32.mrb[0].mxu0
        %623 = vmatprep.mubr.f32.mxu0 0.0
        %624 = vmatmul.mubr.f32.gmra.mrb[0].mxu0 %v347
        %v625 = vpop.f32.mrb[0].mxu0
        %v626 = vadd.f32 0.0, %v625
        %v627 = vpop.f32.mrb[0].mxu0
        %628 = vmatprep.mubr.f32.mxu0 0.0
        %629 = vmatmul.mubr.f32.gmra.mrb[0].mxu0 %v348
        %v630 = vpop.f32.mrb[0].mxu0
        %v631 = vadd.f32 0.0, %v630
        %v632 = vpop.f32.mrb[0].mxu0
        %633 = vmatprep.mubr.f32.mxu0 0.0
        %634 = vmatmul.mubr.f32.gmra.mrb[0].mxu0 %v349
        %v635 = vpop.f32.mrb[0].mxu0
        %v636 = vadd.f32 0.0, %v635
        %v637 = vpop.f32.mrb[0].mxu0
        %638 = vmatprep.mubr.f32.mxu0 0.0
        %639 = vmatmul.mubr.f32.gmra.mrb[0].mxu0 %v350
        %v640 = vpop.f32.mrb[0].mxu0
        %v641 = vadd.f32 0.0, %v640
        %v642 = vpop.f32.mrb[0].mxu0
        %643 = vmatprep.mubr.f32.mxu0 0.0
        %644 = vmatmul.mubr.f32.gmra.mrb[0].mxu0 %v351
        %v645 = vpop.f32.mrb[0].mxu0
        %v646 = vadd.f32 0.0, %v645
        %v647 = vpop.f32.mrb[0].mxu0
        %648 = vmatprep.mubr.f32.mxu0 0.0
        %649 = vmatmul.mubr.f32.gmra.mrb[0].mxu0 %v352
        %v650 = vpop.f32.mrb[0].mxu0
        %v651 = vadd.f32 0.0, %v650
        %v652 = vpop.f32.mrb[0].mxu0
        %653 = vmatprep.mubr.f32.mxu0 0.0
        %654 = vmatmul.mubr.f32.gmra.mrb[0].mxu0 %v353
        %v655 = vpop.f32.mrb[0].mxu0
        %v656 = vadd.f32 0.0, %v655
        %v657 = vpop.f32.mrb[0].mxu0
        %658 = vmatprep.mubr.f32.mxu0 0.0
        %659 = vmatmul.mubr.f32.gmra.mrb[0].mxu0 %v354
        %v660 = vpop.f32.mrb[0].mxu0
        %v661 = vadd.f32 0.0, %v660
        %v662 = vpop.f32.mrb[0].mxu0
        %663 = vmatprep.mubr.f32.mxu0 0.0
        %664 = vmatmul.mubr.f32.gmra.mrb[0].mxu0 %v355
        %v665 = vpop.f32.mrb[0].mxu0
        %v666 = vadd.f32 0.0, %v665
        %v667 = vpop.f32.mrb[0].mxu0
        %668 = vmatprep.mubr.f32.mxu0 0.0
        %669 = vmatmul.mubr.f32.gmra.mrb[0].mxu0 %v356
        %v670 = vpop.f32.mrb[0].mxu0
        %v671 = vadd.f32 0.0, %v670
        %v672 = vpop.f32.mrb[0].mxu0
        %673 = vmatprep.mubr.f32.mxu0 0.0
        %674 = vmatmul.mubr.f32.gmra.mrb[0].mxu0 %v357
        %v675 = vpop.f32.mrb[0].mxu0
        %v676 = vadd.f32 0.0, %v675
        %v677 = vpop.f32.mrb[0].mxu0
        %678 = vmatprep.mubr.f32.mxu0 0.0
        %679 = vmatmul.mubr.f32.gmra.mrb[0].mxu0 %v358
        %v680 = vpop.f32.mrb[0].mxu0
        %v681 = vadd.f32 0.0, %v680
        %v682 = vpop.f32.mrb[0].mxu0
        %683 = vmatprep.mubr.f32.mxu0 0.0
        %684 = vmatmul.mubr.f32.gmra.mrb[0].mxu0 %v359
        %v685 = vpop.f32.mrb[0].mxu0
        %v686 = vadd.f32 0.0, %v685
        %v687 = vpop.f32.mrb[0].mxu0
        %688 = vmatprep.mubr.f32.mxu0 0.0
        %689 = vmatmul.mubr.f32.gmra.mrb[0].mxu0 %v360
        %v690 = vpop.f32.mrb[0].mxu0
        %v691 = vadd.f32 0.0, %v690
        %v692 = vpop.f32.mrb[0].mxu0
        %693 = vmatprep.mubr.f32.mxu0 0.0
        %694 = vmatmul.mubr.f32.gmra.mrb[0].mxu0 %v361
        %v695 = vpop.f32.mrb[0].mxu0
        %v696 = vadd.f32 0.0, %v695
        %v697 = vpop.f32.mrb[0].mxu0
        %698 = vmatprep.mubr.f32.mxu0 0.0
        %699 = vmatmul.mubr.f32.gmra.mrb[0].mxu0 %v362
        %v700 = vpop.f32.mrb[0].mxu0
        %v701 = vadd.f32 0.0, %v700
        %v702 = vpop.f32.mrb[0].mxu0
        %703 = vmatprep.mubr.f32.mxu0 0.0
        %704 = vmatmul.mubr.f32.gmra.mrb[0].mxu0 %v363
        %v705 = vpop.f32.mrb[0].mxu0
        %v706 = vadd.f32 0.0, %v705
        %v707 = vpop.f32.mrb[0].mxu0
        %708 = vmatprep.mubr.f32.mxu0 0.0
        %709 = vmatmul.mubr.f32.gmra.mrb[0].mxu0 %v364
        %v710 = vpop.f32.mrb[0].mxu0
        %v711 = vadd.f32 0.0, %v710
        %v712 = vpop.f32.mrb[0].mxu0
        %713 = vmatprep.mubr.f32.mxu0 0.0
        %714 = vmatmul.mubr.f32.gmra.mrb[0].mxu0 %v365
        %v715 = vpop.f32.mrb[0].mxu0
        %v716 = vadd.f32 0.0, %v715
        %v717 = vpop.f32.mrb[0].mxu0
        %718 = vmatprep.mubr.f32.mxu0 0.0
        %719 = vmatmul.mubr.f32.gmra.mrb[0].mxu0 %v366
        %v720 = vpop.f32.mrb[0].mxu0
        %v721 = vadd.f32 0.0, %v720
        %v722 = vpop.f32.mrb[0].mxu0
        %723 = vmatprep.mubr.f32.mxu0 0.0
        %724 = vmatmul.mubr.f32.gmra.mrb[0].mxu0 %v367
        %v725 = vpop.f32.mrb[0].mxu0
        %v726 = vadd.f32 0.0, %v725
        %v727 = vpop.f32.mrb[0].mxu0
        %728 = vmatprep.mubr.f32.mxu0 0.0
        %729 = vmatmul.mubr.f32.gmra.mrb[0].mxu0 %v368
        %v730 = vpop.f32.mrb[0].mxu0
        %v731 = vadd.f32 0.0, %v730
        %v732 = vpop.f32.mrb[0].mxu0
        %733 = vmatprep.mubr.f32.mxu0 0.0
        %734 = vmatmul.mubr.f32.gmra.mrb[0].mxu0 %v369
        %v735 = vpop.f32.mrb[0].mxu0
        %v736 = vadd.f32 0.0, %v735
        %v737 = vpop.f32.mrb[0].mxu0
        %738 = vmatprep.mubr.f32.mxu0 0.0
        %739 = vmatmul.mubr.f32.gmra.mrb[0].mxu0 %v370
        %v740 = vpop.f32.mrb[0].mxu0
        %v741 = vadd.f32 0.0, %v740
        %v742 = vpop.f32.mrb[0].mxu0
        %743 = vmatprep.mubr.f32.mxu0 0.0
        %744 = vmatmul.mubr.f32.gmra.mrb[0].mxu0 %v371
        %v745 = vpop.f32.mrb[0].mxu0
        %v746 = vadd.f32 0.0, %v745
        %v747 = vpop.f32.mrb[0].mxu0
        %748 = vmatprep.mubr.f32.mxu0 0.0
        %749 = vmatmul.mubr.f32.gmra.mrb[0].mxu0 %v372
        %v750 = vpop.f32.mrb[0].mxu0
        %v751 = vadd.f32 0.0, %v750
        %v752 = vpop.f32.mrb[0].mxu0
        %753 = vmatprep.mubr.f32.mxu0 0.0
        %754 = vmatmul.mubr.f32.gmra.mrb[0].mxu0 %v373
        %v755 = vpop.f32.mrb[0].mxu0
        %v756 = vadd.f32 0.0, %v755
        %v757 = vpop.f32.mrb[0].mxu0
        %758 = vmatprep.mubr.f32.mxu0 0.0
        %759 = vmatmul.mubr.f32.gmra.mrb[0].mxu0 %v374
        %v760 = vpop.f32.mrb[0].mxu0
        %v761 = vadd.f32 0.0, %v760
        %v762 = vpop.f32.mrb[0].mxu0
        %763 = vmatprep.mubr.f32.mxu0 0.0
        %764 = vmatmul.mubr.f32.gmra.mrb[0].mxu0 %v375
        %v765 = vpop.f32.mrb[0].mxu0
        %v766 = vadd.f32 0.0, %v765
        %v767 = vpop.f32.mrb[0].mxu0
        %768 = vmatprep.mubr.f32.mxu0 0.0
        %769 = vmatmul.mubr.f32.gmra.mrb[0].mxu0 %v376
        %v770 = vpop.f32.mrb[0].mxu0
        %v771 = vadd.f32 0.0, %v770
        %v772 = vpop.f32.mrb[0].mxu0
        %773 = vmatprep.mubr.f32.mxu0 0.0
        %774 = vmatmul.mubr.f32.gmra.mrb[0].mxu0 %v377
        %v775 = vpop.f32.mrb[0].mxu0
        %v776 = vadd.f32 0.0, %v775
        %v777 = vpop.f32.mrb[0].mxu0
        %778 = vdwg.mxu0
        %v779 = vld [vmem:[%s2] sm:$0x1]
        %v781 = vlaneseq
        %v782 = vshrl.u32 %v781, 7
        %v783 = vsub.s32 0, %v782
        %v784 = vrot.slane %v779, %v783
        %v850 = vunpack.c.l.b16 %v249
        %v851 = vunpack.c.l.b16 %v250
        %v852 = vunpack.c.l.b16 %v251
        %v853 = vunpack.c.l.b16 %v252
        %v854 = vunpack.c.l.b16 %v253
        %v855 = vunpack.c.l.b16 %v254
        %v856 = vunpack.c.l.b16 %v255
        %v857 = vunpack.c.l.b16 %v256
        %v858 = vunpack.c.l.b16 %v257
        %v859 = vunpack.c.l.b16 %v258
        %v860 = vunpack.c.l.b16 %v259
        %v861 = vunpack.c.l.b16 %v260
        %v862 = vunpack.c.l.b16 %v261
        %v863 = vunpack.c.l.b16 %v262
        %v864 = vunpack.c.l.b16 %v263
        %v865 = vunpack.c.l.b16 %v264
        %v866 = vunpack.c.l.b16 %v265
        %v867 = vunpack.c.l.b16 %v266
        %v868 = vunpack.c.l.b16 %v267
        %v869 = vunpack.c.l.b16 %v268
        %v870 = vunpack.c.l.b16 %v269
        %v871 = vunpack.c.l.b16 %v270
        %v872 = vunpack.c.l.b16 %v271
        %v873 = vunpack.c.l.b16 %v272
        %v874 = vunpack.c.l.b16 %v273
        %v875 = vunpack.c.l.b16 %v274
        %v876 = vunpack.c.l.b16 %v275
        %v877 = vunpack.c.l.b16 %v276
        %v878 = vunpack.c.l.b16 %v277
        %v879 = vunpack.c.l.b16 %v278
        %v880 = vunpack.c.l.b16 %v279
        %v881 = vunpack.c.l.b16 %v280
        %v882 = vunpack.c.l.b16 %v281
        %v883 = vunpack.c.l.b16 %v282
        %v884 = vunpack.c.l.b16 %v283
        %v885 = vunpack.c.l.b16 %v284
        %v886 = vunpack.c.l.b16 %v285
        %v887 = vunpack.c.l.b16 %v286
        %v888 = vunpack.c.l.b16 %v287
        %v889 = vunpack.c.l.b16 %v288
        %v890 = vunpack.c.l.b16 %v289
        %v891 = vunpack.c.l.b16 %v290
        %v892 = vunpack.c.l.b16 %v291
        %v893 = vunpack.c.l.b16 %v292
        %v894 = vunpack.c.l.b16 %v293
        %v895 = vunpack.c.l.b16 %v294
        %v896 = vunpack.c.l.b16 %v295
        %v897 = vunpack.c.l.b16 %v296
        %v898 = vunpack.c.l.b16 %v297
        %v899 = vunpack.c.l.b16 %v298
        %v900 = vunpack.c.l.b16 %v299
        %v901 = vunpack.c.l.b16 %v300
        %v902 = vunpack.c.l.b16 %v301
        %v903 = vunpack.c.l.b16 %v302
        %v904 = vunpack.c.l.b16 %v303
        %v905 = vunpack.c.l.b16 %v304
        %v906 = vunpack.c.l.b16 %v305
        %v907 = vunpack.c.l.b16 %v306
        %v908 = vunpack.c.l.b16 %v307
        %v909 = vunpack.c.l.b16 %v308
        %v910 = vunpack.c.l.b16 %v309
        %v911 = vunpack.c.l.b16 %v310
        %v912 = vunpack.c.l.b16 %v311
        %v913 = vunpack.c.l.b16 %v312
        %v914 = vpack.c.b16 %v851, %v850
        %v915 = vpack.c.b16 %v853, %v852
        %v916 = vpack.c.b16 %v855, %v854
        %v917 = vpack.c.b16 %v857, %v856
        %v918 = vpack.c.b16 %v859, %v858
        %v919 = vpack.c.b16 %v861, %v860
        %v920 = vpack.c.b16 %v863, %v862
        %v921 = vpack.c.b16 %v865, %v864
        %v922 = vpack.c.b16 %v867, %v866
        %v923 = vpack.c.b16 %v869, %v868
        %v924 = vpack.c.b16 %v871, %v870
        %v925 = vpack.c.b16 %v873, %v872
        %v926 = vpack.c.b16 %v875, %v874
        %v927 = vpack.c.b16 %v877, %v876
        %v928 = vpack.c.b16 %v879, %v878
        %v929 = vpack.c.b16 %v881, %v880
        %v930 = vpack.c.b16 %v883, %v882
        %v931 = vpack.c.b16 %v885, %v884
        %v932 = vpack.c.b16 %v887, %v886
        %v933 = vpack.c.b16 %v889, %v888
        %v934 = vpack.c.b16 %v891, %v890
        %v935 = vpack.c.b16 %v893, %v892
        %v936 = vpack.c.b16 %v895, %v894
        %v937 = vpack.c.b16 %v897, %v896
        %v938 = vpack.c.b16 %v899, %v898
        %v939 = vpack.c.b16 %v901, %v900
        %v940 = vpack.c.b16 %v903, %v902
        %v941 = vpack.c.b16 %v905, %v904
        %v942 = vpack.c.b16 %v907, %v906
        %v943 = vpack.c.b16 %v909, %v908
        %v944 = vpack.c.b16 %v911, %v910
        %v945 = vpack.c.b16 %v913, %v912
        %vm946 = vcmask 31744
        %v948 = vsel %vm946, %v914, 0
        %v951 = vsel %vm946, %v915, 0
        %v954 = vsel %vm946, %v916, 0
        %v957 = vsel %vm946, %v917, 0
        %v960 = vsel %vm946, %v918, 0
        %v963 = vsel %vm946, %v919, 0
        %v966 = vsel %vm946, %v920, 0
        %v969 = vsel %vm946, %v921, 0
        %v972 = vsel %vm946, %v922, 0
        %v975 = vsel %vm946, %v923, 0
        %v978 = vsel %vm946, %v924, 0
        %v981 = vsel %vm946, %v925, 0
        %v984 = vsel %vm946, %v926, 0
        %v987 = vsel %vm946, %v927, 0
        %v990 = vsel %vm946, %v928, 0
        %v993 = vsel %vm946, %v929, 0
        %v996 = vsel %vm946, %v930, 0
        %v999 = vsel %vm946, %v931, 0
        %v1002 = vsel %vm946, %v932, 0
        %v1005 = vsel %vm946, %v933, 0
        %v1008 = vsel %vm946, %v934, 0
        %v1011 = vsel %vm946, %v935, 0
        %v1014 = vsel %vm946, %v936, 0
        %v1017 = vsel %vm946, %v937, 0
        %v1020 = vsel %vm946, %v938, 0
        %v1023 = vsel %vm946, %v939, 0
        %v1026 = vsel %vm946, %v940, 0
        %v1029 = vsel %vm946, %v941, 0
        %v1032 = vsel %vm946, %v942, 0
        %v1035 = vsel %vm946, %v943, 0
        %v1038 = vsel %vm946, %v944, 0
        %v1041 = vsel %vm946, %v945, 0
        %vm1043 = vcmask 1041408
        %v1045 = vsel %vm1043, %v313, 0
        %1047 = vmatprep.subr.bf16.mxu0 0
        %1048 = vmatpush1.bf16.msra.mxu0 %v1045
        %1049 = vmatprep.subr.bf16.mxu0 0
        %1050 = vmatpush1.bf16.msra.mxu0 0
        %1051 = vmatprep.subr.bf16.mxu0 0
        %1052 = vmatpush1.bf16.msra.mxu0 0
        %1053 = vmatprep.subr.bf16.mxu0 0
        %1054 = vmatpush1.bf16.msra.mxu0 0
        %1055 = vmatprep.subr.bf16.mxu0 0
        %1056 = vmatpush1.bf16.msra.mxu0 0
        %1057 = vmatprep.subr.bf16.mxu0 0
        %1058 = vmatpush1.bf16.msra.mxu0 0
        %1059 = vmatprep.subr.bf16.mxu0 0
        %1060 = vmatpush1.bf16.msra.mxu0 0
        %1061 = vmatprep.subr.bf16.mxu0 0
        %1062 = vmatpush1.bf16.msra.mxu0 0
        %1063 = vmatprep.subr.bf16.mxu0 0
        %1064 = vmatpush1.bf16.msra.mxu0 0
        %1065 = vmatprep.subr.bf16.mxu0 0
        %1066 = vmatpush1.bf16.msra.mxu0 0
        %1067 = vmatprep.subr.bf16.mxu0 0
        %1068 = vmatpush1.bf16.msra.mxu0 0
        %1069 = vmatprep.subr.bf16.mxu0 0
        %1070 = vmatpush1.bf16.msra.mxu0 0
        %1071 = vmatprep.subr.bf16.mxu0 0
        %1072 = vmatpush1.bf16.msra.mxu0 0
        %1073 = vmatprep.subr.bf16.mxu0 0
        %1074 = vmatpush1.bf16.msra.mxu0 0
        %1075 = vmatprep.subr.bf16.mxu0 0
        %1076 = vmatpush1.bf16.msra.mxu0 0
        %1077 = vmatprep.subr.bf16.mxu0 0
        %1078 = vmatpush1.bf16.msra.mxu0 0
        %1079 = vmatprep.mubr.bf16.mxu0 0
        %1080 = vmatmul.mubr.bf16.gmra.mrb[0].mxu0 %v948
        %v1081 = vpop.f32.mrb[0].mxu0
        %v1082 = vadd.f32 %v784, %v1081
        %v1083 = vpop.f32.mrb[0].mxu0
        %v1084 = vpop.f32.mrb[0].mxu0
        %v1085 = vadd.f32 %v784, %v1084
        %v1086 = vpop.f32.mrb[0].mxu0
        %1087 = vmatprep.mubr.bf16.mxu0 0
        %1088 = vmatmul.mubr.bf16.gmra.mrb[0].mxu0 %v951
        %v1089 = vpop.f32.mrb[0].mxu0
        %v1090 = vadd.f32 %v784, %v1089
        %v1091 = vpop.f32.mrb[0].mxu0
        %v1092 = vpop.f32.mrb[0].mxu0
        %v1093 = vadd.f32 %v784, %v1092
        %v1094 = vpop.f32.mrb[0].mxu0
        %1095 = vmatprep.mubr.bf16.mxu0 0
        %1096 = vmatmul.mubr.bf16.gmra.mrb[0].mxu0 %v954
        %v1097 = vpop.f32.mrb[0].mxu0
        %v1098 = vadd.f32 %v784, %v1097
        %v1099 = vpop.f32.mrb[0].mxu0
        %v1100 = vpop.f32.mrb[0].mxu0
        %v1101 = vadd.f32 %v784, %v1100
        %v1102 = vpop.f32.mrb[0].mxu0
        %1103 = vmatprep.mubr.bf16.mxu0 0
        %1104 = vmatmul.mubr.bf16.gmra.mrb[0].mxu0 %v957
        %v1105 = vpop.f32.mrb[0].mxu0
        %v1106 = vadd.f32 %v784, %v1105
        %v1107 = vpop.f32.mrb[0].mxu0
        %v1108 = vpop.f32.mrb[0].mxu0
        %v1109 = vadd.f32 %v784, %v1108
        %v1110 = vpop.f32.mrb[0].mxu0
        %1111 = vmatprep.mubr.bf16.mxu0 0
        %1112 = vmatmul.mubr.bf16.gmra.mrb[0].mxu0 %v960
        %v1113 = vpop.f32.mrb[0].mxu0
        %v1114 = vadd.f32 %v784, %v1113
        %v1115 = vpop.f32.mrb[0].mxu0
        %v1116 = vpop.f32.mrb[0].mxu0
        %v1117 = vadd.f32 %v784, %v1116
        %v1118 = vpop.f32.mrb[0].mxu0
        %1119 = vmatprep.mubr.bf16.mxu0 0
        %1120 = vmatmul.mubr.bf16.gmra.mrb[0].mxu0 %v963
        %v1121 = vpop.f32.mrb[0].mxu0
        %v1122 = vadd.f32 %v784, %v1121
        %v1123 = vpop.f32.mrb[0].mxu0
        %v1124 = vpop.f32.mrb[0].mxu0
        %v1125 = vadd.f32 %v784, %v1124
        %v1126 = vpop.f32.mrb[0].mxu0
        %1127 = vmatprep.mubr.bf16.mxu0 0
        %1128 = vmatmul.mubr.bf16.gmra.mrb[0].mxu0 %v966
        %v1129 = vpop.f32.mrb[0].mxu0
        %v1130 = vadd.f32 %v784, %v1129
        %v1131 = vpop.f32.mrb[0].mxu0
        %v1132 = vpop.f32.mrb[0].mxu0
        %v1133 = vadd.f32 %v784, %v1132
        %v1134 = vpop.f32.mrb[0].mxu0
        %1135 = vmatprep.mubr.bf16.mxu0 0
        %1136 = vmatmul.mubr.bf16.gmra.mrb[0].mxu0 %v969
        %v1137 = vpop.f32.mrb[0].mxu0
        %v1138 = vadd.f32 %v784, %v1137
        %v1139 = vpop.f32.mrb[0].mxu0
        %v1140 = vpop.f32.mrb[0].mxu0
        %v1141 = vadd.f32 %v784, %v1140
        %v1142 = vpop.f32.mrb[0].mxu0
        %1143 = vmatprep.mubr.bf16.mxu0 0
        %1144 = vmatmul.mubr.bf16.gmra.mrb[0].mxu0 %v972
        %v1145 = vpop.f32.mrb[0].mxu0
        %v1146 = vadd.f32 %v784, %v1145
        %v1147 = vpop.f32.mrb[0].mxu0
        %v1148 = vpop.f32.mrb[0].mxu0
        %v1149 = vadd.f32 %v784, %v1148
        %v1150 = vpop.f32.mrb[0].mxu0
        %1151 = vmatprep.mubr.bf16.mxu0 0
        %1152 = vmatmul.mubr.bf16.gmra.mrb[0].mxu0 %v975
        %v1153 = vpop.f32.mrb[0].mxu0
        %v1154 = vadd.f32 %v784, %v1153
        %v1155 = vpop.f32.mrb[0].mxu0
        %v1156 = vpop.f32.mrb[0].mxu0
        %v1157 = vadd.f32 %v784, %v1156
        %v1158 = vpop.f32.mrb[0].mxu0
        %1159 = vmatprep.mubr.bf16.mxu0 0
        %1160 = vmatmul.mubr.bf16.gmra.mrb[0].mxu0 %v978
        %v1161 = vpop.f32.mrb[0].mxu0
        %v1162 = vadd.f32 %v784, %v1161
        %v1163 = vpop.f32.mrb[0].mxu0
        %v1164 = vpop.f32.mrb[0].mxu0
        %v1165 = vadd.f32 %v784, %v1164
        %v1166 = vpop.f32.mrb[0].mxu0
        %1167 = vmatprep.mubr.bf16.mxu0 0
        %1168 = vmatmul.mubr.bf16.gmra.mrb[0].mxu0 %v981
        %v1169 = vpop.f32.mrb[0].mxu0
        %v1170 = vadd.f32 %v784, %v1169
        %v1171 = vpop.f32.mrb[0].mxu0
        %v1172 = vpop.f32.mrb[0].mxu0
        %v1173 = vadd.f32 %v784, %v1172
        %v1174 = vpop.f32.mrb[0].mxu0
        %1175 = vmatprep.mubr.bf16.mxu0 0
        %1176 = vmatmul.mubr.bf16.gmra.mrb[0].mxu0 %v984
        %v1177 = vpop.f32.mrb[0].mxu0
        %v1178 = vadd.f32 %v784, %v1177
        %v1179 = vpop.f32.mrb[0].mxu0
        %v1180 = vpop.f32.mrb[0].mxu0
        %v1181 = vadd.f32 %v784, %v1180
        %v1182 = vpop.f32.mrb[0].mxu0
        %1183 = vmatprep.mubr.bf16.mxu0 0
        %1184 = vmatmul.mubr.bf16.gmra.mrb[0].mxu0 %v987
        %v1185 = vpop.f32.mrb[0].mxu0
        %v1186 = vadd.f32 %v784, %v1185
        %v1187 = vpop.f32.mrb[0].mxu0
        %v1188 = vpop.f32.mrb[0].mxu0
        %v1189 = vadd.f32 %v784, %v1188
        %v1190 = vpop.f32.mrb[0].mxu0
        %1191 = vmatprep.mubr.bf16.mxu0 0
        %1192 = vmatmul.mubr.bf16.gmra.mrb[0].mxu0 %v990
        %v1193 = vpop.f32.mrb[0].mxu0
        %v1194 = vadd.f32 %v784, %v1193
        %v1195 = vpop.f32.mrb[0].mxu0
        %v1196 = vpop.f32.mrb[0].mxu0
        %v1197 = vadd.f32 %v784, %v1196
        %v1198 = vpop.f32.mrb[0].mxu0
        %1199 = vmatprep.mubr.bf16.mxu0 0
        %1200 = vmatmul.mubr.bf16.gmra.mrb[0].mxu0 %v993
        %v1201 = vpop.f32.mrb[0].mxu0
        %v1202 = vadd.f32 %v784, %v1201
        %v1203 = vpop.f32.mrb[0].mxu0
        %v1204 = vpop.f32.mrb[0].mxu0
        %v1205 = vadd.f32 %v784, %v1204
        %v1206 = vpop.f32.mrb[0].mxu0
        %1207 = vmatprep.mubr.bf16.mxu0 0
        %1208 = vmatmul.mubr.bf16.gmra.mrb[0].mxu0 %v996
        %v1209 = vpop.f32.mrb[0].mxu0
        %v1210 = vadd.f32 %v784, %v1209
        %v1211 = vpop.f32.mrb[0].mxu0
        %v1212 = vpop.f32.mrb[0].mxu0
        %v1213 = vadd.f32 %v784, %v1212
        %v1214 = vpop.f32.mrb[0].mxu0
        %1215 = vmatprep.mubr.bf16.mxu0 0
        %1216 = vmatmul.mubr.bf16.gmra.mrb[0].mxu0 %v999
        %v1217 = vpop.f32.mrb[0].mxu0
        %v1218 = vadd.f32 %v784, %v1217
        %v1219 = vpop.f32.mrb[0].mxu0
        %v1220 = vpop.f32.mrb[0].mxu0
        %v1221 = vadd.f32 %v784, %v1220
        %v1222 = vpop.f32.mrb[0].mxu0
        %1223 = vmatprep.mubr.bf16.mxu0 0
        %1224 = vmatmul.mubr.bf16.gmra.mrb[0].mxu0 %v1002
        %v1225 = vpop.f32.mrb[0].mxu0
        %v1226 = vadd.f32 %v784, %v1225
        %v1227 = vpop.f32.mrb[0].mxu0
        %v1228 = vpop.f32.mrb[0].mxu0
        %v1229 = vadd.f32 %v784, %v1228
        %v1230 = vpop.f32.mrb[0].mxu0
        %1231 = vmatprep.mubr.bf16.mxu0 0
        %1232 = vmatmul.mubr.bf16.gmra.mrb[0].mxu0 %v1005
        %v1233 = vpop.f32.mrb[0].mxu0
        %v1234 = vadd.f32 %v784, %v1233
        %v1235 = vpop.f32.mrb[0].mxu0
        %v1236 = vpop.f32.mrb[0].mxu0
        %v1237 = vadd.f32 %v784, %v1236
        %v1238 = vpop.f32.mrb[0].mxu0
        %1239 = vmatprep.mubr.bf16.mxu0 0
        %1240 = vmatmul.mubr.bf16.gmra.mrb[0].mxu0 %v1008
        %v1241 = vpop.f32.mrb[0].mxu0
        %v1242 = vadd.f32 %v784, %v1241
        %v1243 = vpop.f32.mrb[0].mxu0
        %v1244 = vpop.f32.mrb[0].mxu0
        %v1245 = vadd.f32 %v784, %v1244
        %v1246 = vpop.f32.mrb[0].mxu0
        %1247 = vmatprep.mubr.bf16.mxu0 0
        %1248 = vmatmul.mubr.bf16.gmra.mrb[0].mxu0 %v1011
        %v1249 = vpop.f32.mrb[0].mxu0
        %v1250 = vadd.f32 %v784, %v1249
        %v1251 = vpop.f32.mrb[0].mxu0
        %v1252 = vpop.f32.mrb[0].mxu0
        %v1253 = vadd.f32 %v784, %v1252
        %v1254 = vpop.f32.mrb[0].mxu0
        %1255 = vmatprep.mubr.bf16.mxu0 0
        %1256 = vmatmul.mubr.bf16.gmra.mrb[0].mxu0 %v1014
        %v1257 = vpop.f32.mrb[0].mxu0
        %v1258 = vadd.f32 %v784, %v1257
        %v1259 = vpop.f32.mrb[0].mxu0
        %v1260 = vpop.f32.mrb[0].mxu0
        %v1261 = vadd.f32 %v784, %v1260
        %v1262 = vpop.f32.mrb[0].mxu0
        %1263 = vmatprep.mubr.bf16.mxu0 0
        %1264 = vmatmul.mubr.bf16.gmra.mrb[0].mxu0 %v1017
        %v1265 = vpop.f32.mrb[0].mxu0
        %v1266 = vadd.f32 %v784, %v1265
        %v1267 = vpop.f32.mrb[0].mxu0
        %v1268 = vpop.f32.mrb[0].mxu0
        %v1269 = vadd.f32 %v784, %v1268
        %v1270 = vpop.f32.mrb[0].mxu0
        %1271 = vmatprep.mubr.bf16.mxu0 0
        %1272 = vmatmul.mubr.bf16.gmra.mrb[0].mxu0 %v1020
        %v1273 = vpop.f32.mrb[0].mxu0
        %v1274 = vadd.f32 %v784, %v1273
        %v1275 = vpop.f32.mrb[0].mxu0
        %v1276 = vpop.f32.mrb[0].mxu0
        %v1277 = vadd.f32 %v784, %v1276
        %v1278 = vpop.f32.mrb[0].mxu0
        %1279 = vmatprep.mubr.bf16.mxu0 0
        %1280 = vmatmul.mubr.bf16.gmra.mrb[0].mxu0 %v1023
        %v1281 = vpop.f32.mrb[0].mxu0
        %v1282 = vadd.f32 %v784, %v1281
        %v1283 = vpop.f32.mrb[0].mxu0
        %v1284 = vpop.f32.mrb[0].mxu0
        %v1285 = vadd.f32 %v784, %v1284
        %v1286 = vpop.f32.mrb[0].mxu0
        %1287 = vmatprep.mubr.bf16.mxu0 0
        %1288 = vmatmul.mubr.bf16.gmra.mrb[0].mxu0 %v1026
        %v1289 = vpop.f32.mrb[0].mxu0
        %v1290 = vadd.f32 %v784, %v1289
        %v1291 = vpop.f32.mrb[0].mxu0
        %v1292 = vpop.f32.mrb[0].mxu0
        %v1293 = vadd.f32 %v784, %v1292
        %v1294 = vpop.f32.mrb[0].mxu0
        %1295 = vmatprep.mubr.bf16.mxu0 0
        %1296 = vmatmul.mubr.bf16.gmra.mrb[0].mxu0 %v1029
        %v1297 = vpop.f32.mrb[0].mxu0
        %v1298 = vadd.f32 %v784, %v1297
        %v1299 = vpop.f32.mrb[0].mxu0
        %v1300 = vpop.f32.mrb[0].mxu0
        %v1301 = vadd.f32 %v784, %v1300
        %v1302 = vpop.f32.mrb[0].mxu0
        %1303 = vmatprep.mubr.bf16.mxu0 0
        %1304 = vmatmul.mubr.bf16.gmra.mrb[0].mxu0 %v1032
        %v1305 = vpop.f32.mrb[0].mxu0
        %v1306 = vadd.f32 %v784, %v1305
        %v1307 = vpop.f32.mrb[0].mxu0
        %v1308 = vpop.f32.mrb[0].mxu0
        %v1309 = vadd.f32 %v784, %v1308
        %v1310 = vpop.f32.mrb[0].mxu0
        %1311 = vmatprep.mubr.bf16.mxu0 0
        %1312 = vmatmul.mubr.bf16.gmra.mrb[0].mxu0 %v1035
        %v1313 = vpop.f32.mrb[0].mxu0
        %v1314 = vadd.f32 %v784, %v1313
        %v1315 = vpop.f32.mrb[0].mxu0
        %v1316 = vpop.f32.mrb[0].mxu0
        %v1317 = vadd.f32 %v784, %v1316
        %v1318 = vpop.f32.mrb[0].mxu0
        %1319 = vmatprep.mubr.bf16.mxu0 0
        %1320 = vmatmul.mubr.bf16.gmra.mrb[0].mxu0 %v1038
        %v1321 = vpop.f32.mrb[0].mxu0
        %v1322 = vadd.f32 %v784, %v1321
        %v1323 = vpop.f32.mrb[0].mxu0
        %v1324 = vpop.f32.mrb[0].mxu0
        %v1325 = vadd.f32 %v784, %v1324
        %v1326 = vpop.f32.mrb[0].mxu0
        %1327 = vmatprep.mubr.bf16.mxu0 0
        %1328 = vmatmul.mubr.bf16.gmra.mrb[0].mxu0 %v1041
        %v1329 = vpop.f32.mrb[0].mxu0
        %v1330 = vadd.f32 %v784, %v1329
        %v1331 = vpop.f32.mrb[0].mxu0
        %v1332 = vpop.f32.mrb[0].mxu0
        %v1333 = vadd.f32 %v784, %v1332
        %v1334 = vpop.f32.mrb[0].mxu0
        %1335 = vdwg.mxu0
        %v1336 = vadd.f32 %v1082, %v461
        %v1337 = vadd.f32 %v1085, %v466
        %v1338 = vadd.f32 %v1090, %v471
        %v1339 = vadd.f32 %v1093, %v476
        %v1340 = vadd.f32 %v1098, %v481
        %v1341 = vadd.f32 %v1101, %v486
        %v1342 = vadd.f32 %v1106, %v491
        %v1343 = vadd.f32 %v1109, %v496
        %v1344 = vadd.f32 %v1114, %v501
        %v1345 = vadd.f32 %v1117, %v506
        %v1346 = vadd.f32 %v1122, %v511
        %v1347 = vadd.f32 %v1125, %v516
        %v1348 = vadd.f32 %v1130, %v521
        %v1349 = vadd.f32 %v1133, %v526
        %v1350 = vadd.f32 %v1138, %v531
        %v1351 = vadd.f32 %v1141, %v536
        %v1352 = vadd.f32 %v1146, %v541
        %v1353 = vadd.f32 %v1149, %v546
        %v1354 = vadd.f32 %v1154, %v551
        %v1355 = vadd.f32 %v1157, %v556
        %v1356 = vadd.f32 %v1162, %v561
        %v1357 = vadd.f32 %v1165, %v566
        %v1358 = vadd.f32 %v1170, %v571
        %v1359 = vadd.f32 %v1173, %v576
        %v1360 = vadd.f32 %v1178, %v581
        %v1361 = vadd.f32 %v1181, %v586
        %v1362 = vadd.f32 %v1186, %v591
        %v1363 = vadd.f32 %v1189, %v596
        %v1364 = vadd.f32 %v1194, %v601
        %v1365 = vadd.f32 %v1197, %v606
        %v1366 = vadd.f32 %v1202, %v611
        %v1367 = vadd.f32 %v1205, %v616
        %v1368 = vadd.f32 %v1210, %v621
        %v1369 = vadd.f32 %v1213, %v626
        %v1370 = vadd.f32 %v1218, %v631
        %v1371 = vadd.f32 %v1221, %v636
        %v1372 = vadd.f32 %v1226, %v641
        %v1373 = vadd.f32 %v1229, %v646
        %v1374 = vadd.f32 %v1234, %v651
        %v1375 = vadd.f32 %v1237, %v656
        %v1376 = vadd.f32 %v1242, %v661
        %v1377 = vadd.f32 %v1245, %v666
        %v1378 = vadd.f32 %v1250, %v671
        %v1379 = vadd.f32 %v1253, %v676
        %v1380 = vadd.f32 %v1258, %v681
        %v1381 = vadd.f32 %v1261, %v686
        %v1382 = vadd.f32 %v1266, %v691
        %v1383 = vadd.f32 %v1269, %v696
        %v1384 = vadd.f32 %v1274, %v701
        %v1385 = vadd.f32 %v1277, %v706
        %v1386 = vadd.f32 %v1282, %v711
        %v1387 = vadd.f32 %v1285, %v716
        %v1388 = vadd.f32 %v1290, %v721
        %v1389 = vadd.f32 %v1293, %v726
        %v1390 = vadd.f32 %v1298, %v731
        %v1391 = vadd.f32 %v1301, %v736
        %v1392 = vadd.f32 %v1306, %v741
        %v1393 = vadd.f32 %v1309, %v746
        %v1394 = vadd.f32 %v1314, %v751
        %v1395 = vadd.f32 %v1317, %v756
        %v1396 = vadd.f32 %v1322, %v761
        %v1397 = vadd.f32 %v1325, %v766
        %v1398 = vadd.f32 %v1330, %v771
        %v1399 = vadd.f32 %v1333, %v776
        %1400 = vst [vmem:[%s234] sm:$0xff] %v1336
        %1401 = vst [vmem:[%s234 + $0x8] sm:$0xff] %v1337
        %1402 = vst [vmem:[%s234 + $0x10] sm:$0xff] %v1338
        %1403 = vst [vmem:[%s234 + $0x18] sm:$0xff] %v1339
        %1404 = vst [vmem:[%s234 + $0x20] sm:$0xff] %v1340
        %1405 = vst [vmem:[%s234 + $0x28] sm:$0xff] %v1341
        %1406 = vst [vmem:[%s234 + $0x30] sm:$0xff] %v1342
        %1407 = vst [vmem:[%s234 + $0x38] sm:$0xff] %v1343
        %1408 = vst [vmem:[%s234 + $0x40] sm:$0xff] %v1344
        %1409 = vst [vmem:[%s234 + $0x48] sm:$0xff] %v1345
        %1410 = vst [vmem:[%s234 + $0x50] sm:$0xff] %v1346
        %1411 = vst [vmem:[%s234 + $0x58] sm:$0xff] %v1347
        %1412 = vst [vmem:[%s234 + $0x60] sm:$0xff] %v1348
        %1413 = vst [vmem:[%s234 + $0x68] sm:$0xff] %v1349
        %1414 = vst [vmem:[%s234 + $0x70] sm:$0xff] %v1350
        %1415 = vst [vmem:[%s234 + $0x78] sm:$0xff] %v1351
        %1416 = vst [vmem:[%s234 + $0x80] sm:$0xff] %v1352
        %1417 = vst [vmem:[%s234 + $0x88] sm:$0xff] %v1353
        %1418 = vst [vmem:[%s234 + $0x90] sm:$0xff] %v1354
        %1419 = vst [vmem:[%s234 + $0x98] sm:$0xff] %v1355
        %1420 = vst [vmem:[%s234 + $0xa0] sm:$0xff] %v1356
        %1421 = vst [vmem:[%s234 + $0xa8] sm:$0xff] %v1357
        %1422 = vst [vmem:[%s234 + $0xb0] sm:$0xff] %v1358
        %1423 = vst [vmem:[%s234 + $0xb8] sm:$0xff] %v1359
        %1424 = vst [vmem:[%s234 + $0xc0] sm:$0xff] %v1360
        %1425 = vst [vmem:[%s234 + $0xc8] sm:$0xff] %v1361
        %1426 = vst [vmem:[%s234 + $0xd0] sm:$0xff] %v1362
        %1427 = vst [vmem:[%s234 + $0xd8] sm:$0xff] %v1363
        %1428 = vst [vmem:[%s234 + $0xe0] sm:$0xff] %v1364
        %1429 = vst [vmem:[%s234 + $0xe8] sm:$0xff] %v1365
        %1430 = vst [vmem:[%s234 + $0xf0] sm:$0xff] %v1366
        %1431 = vst [vmem:[%s234 + $0xf8] sm:$0xff] %v1367
        %1432 = vst [vmem:[%s234 + $0x100] sm:$0xff] %v1368
        %1433 = vst [vmem:[%s234 + $0x108] sm:$0xff] %v1369
        %1434 = vst [vmem:[%s234 + $0x110] sm:$0xff] %v1370
        %1435 = vst [vmem:[%s234 + $0x118] sm:$0xff] %v1371
        %1436 = vst [vmem:[%s234 + $0x120] sm:$0xff] %v1372
        %1437 = vst [vmem:[%s234 + $0x128] sm:$0xff] %v1373
        %1438 = vst [vmem:[%s234 + $0x130] sm:$0xff] %v1374
        %1439 = vst [vmem:[%s234 + $0x138] sm:$0xff] %v1375
        %1440 = vst [vmem:[%s234 + $0x140] sm:$0xff] %v1376
        %1441 = vst [vmem:[%s234 + $0x148] sm:$0xff] %v1377
        %1442 = vst [vmem:[%s234 + $0x150] sm:$0xff] %v1378
        %1443 = vst [vmem:[%s234 + $0x158] sm:$0xff] %v1379
        %1444 = vst [vmem:[%s234 + $0x160] sm:$0xff] %v1380
        %1445 = vst [vmem:[%s234 + $0x168] sm:$0xff] %v1381
        %1446 = vst [vmem:[%s234 + $0x170] sm:$0xff] %v1382
        %1447 = vst [vmem:[%s234 + $0x178] sm:$0xff] %v1383
        %1448 = vst [vmem:[%s234 + $0x180] sm:$0xff] %v1384
        %1449 = vst [vmem:[%s234 + $0x188] sm:$0xff] %v1385
        %1450 = vst [vmem:[%s234 + $0x190] sm:$0xff] %v1386
        %1451 = vst [vmem:[%s234 + $0x198] sm:$0xff] %v1387
        %1452 = vst [vmem:[%s234 + $0x1a0] sm:$0xff] %v1388
        %1453 = vst [vmem:[%s234 + $0x1a8] sm:$0xff] %v1389
        %1454 = vst [vmem:[%s234 + $0x1b0] sm:$0xff] %v1390
        %1455 = vst [vmem:[%s234 + $0x1b8] sm:$0xff] %v1391
        %1456 = vst [vmem:[%s234 + $0x1c0] sm:$0xff] %v1392
        %1457 = vst [vmem:[%s234 + $0x1c8] sm:$0xff] %v1393
        %1458 = vst [vmem:[%s234 + $0x1d0] sm:$0xff] %v1394
        %1459 = vst [vmem:[%s234 + $0x1d8] sm:$0xff] %v1395
        %1460 = vst [vmem:[%s234 + $0x1e0] sm:$0xff] %v1396
        %1461 = vst [vmem:[%s234 + $0x1e8] sm:$0xff] %v1397
        %1462 = vst [vmem:[%s234 + $0x1f0] sm:$0xff] %v1398
        %1463 = vst [vmem:[%s234 + $0x1f8] sm:$0xff] %v1399
        %s1464 = sand.u32 %s142, 1
        %s1465 = scalar_lea.sflag [#allocation3], %s1464
        %s1466 = sand.u32 %s142, 1
        %s1467 = smul.addr %s1466, 512
        %s1468 = scalar_lea.vmem [#allocation2], %s1467
        // Predicated region
        $region41: #{pyramid_features_forward.7} parent=39 // pred_check
          %p1469 = pneg %p152
        $region42: #{pyramid_features_forward.7} parent=39 // pred_check_branch
          %1471 = sbr.rel (%p1469) target = $region44
        $region43: #{pyramid_features_forward.7} parent=39 // pred_region
          %s1472 = smul.u32 64, %s19
          %s1474 = ssub.s32 8192, 8192
          %1475 = vsyncadd %s1465, %s1474
          %s1476 = smul.addr %s1472, 128
          %s1477 = scalar_lea.hbm %s5, %s1476
          %s1478 = sshll.u32 %s1468, 4
          %s1479 = int_to_ptr.vmem [resolvable:$true] %s1478
          %1484 = dma.vmem_to_hbm [thread:$0]  %s1479, 8192, %s1477, %s1465, 128, 128, 8
        $region44: #{pyramid_features_forward.7} parent=39 // pred_fallthru
          _
      $region40: #{pyramid_features_forward.7} parent=5 // pred_fallthru
        _
      %p1485 = scmp.le.s32.totalorder 2, %s14
      // Predicated region
      $region45: #{pyramid_features_forward.7} parent=5 // pred_check
        %p1486 = pneg %p1485
      $region46: #{pyramid_features_forward.7} parent=5 // pred_check_branch
        %1488 = sbr.rel (%p1486) target = $region48
      $region47: #{pyramid_features_forward.7} parent=5 // pred_region
        %s1489 = ssub.s32 %s14, 2
        // Predicated region
        $region49: #{pyramid_features_forward.7} parent=47 // pred_check
          %p1490 = pneg %p158
        $region50: #{pyramid_features_forward.7} parent=47 // pred_check_branch
          %1492 = sbr.rel (%p1490) target = $region52
        $region51: #{pyramid_features_forward.7} parent=47 // pred_region
          %s1493 = sand.u32 %s143, 1
          %s1494 = scalar_lea.sflag [#allocation3], %s1493
          %s1495 = sand.u32 %s143, 1
          %s1496 = smul.addr %s1495, 512
          %s1497 = scalar_lea.vmem [#allocation2], %s1496
          %1498 = dma.done %s1494, 8192
        $region52: #{pyramid_features_forward.7} parent=47 // pred_fallthru
          _
      $region48: #{pyramid_features_forward.7} parent=5 // pred_fallthru
        _
    $region6: #{pyramid_features_forward.7} parent=1 // loop_footer
      %s18 = sadd.s32 1, %s14
    $region7: #{pyramid_features_forward.7} parent=1 // loop_footer_branch
      %13 = sbr.rel target = $region3
    $region8: #{pyramid_features_forward.7} parent=1 // loop_exit
      _
    %1499 = vsyncpa [#allocation3], 1
    %s1500 = scalar_lea.sflag [#allocation3], 1
    %1501 = vsyncpa %s1500, 1

</llo_original>
